<compile_context>
chip_gen: v5e
topology: v5e:2x2
jax: 0.10.0
libtpu: 0.0.40
codegen_flags: <defaults>
</compile_context>

<pallas_src>
import jax
import jax.numpy as jnp
from jax.experimental import pallas as pl
from jax.experimental.pallas import tpu as pltpu

NEG_INF = float(jnp.finfo(jnp.float32).min)
LN_EPS = 1e-5
VMEM_LIMIT = 48 * 1024 * 1024  # > 16/32 MiB scoped defaults, < v7x 64 MiB physical


# ------------------------------ tiling helpers ------------------------------

def _tile(dim, target, align):
    """Largest tile <= target that divides dim and is `align`-aligned; else full dim."""
    if dim <= target:
        return dim
    t = (min(target, dim) // align) * align
    while t >= align:
        if dim % t == 0:
            return t
        t -= align
    # TODO(synk): pad ragged dims instead of falling back to one full-dim block.
    return dim


def _pick_head_block(num_heads, head_dim):
    """Smallest head group whose lane width is 128-aligned (lane-dense stores)."""
    for hb in range(1, num_heads + 1):
        if num_heads % hb == 0 and (hb * head_dim) % 128 == 0:
            return hb
    return num_heads


# -------------------------- tiled linear (+ epilogue) ------------------------

def _erf_approx(x):
    # Abramowitz & Stegun 7.1.26 polynomial, |err| <= 1.5e-7 (float32-level).
    # TODO(synk): switch to jax.lax.erf if/when Mosaic erf lowering is relied on.
    a1, a2, a3, a4, a5 = (0.254829592, -0.284496736, 1.421413741,
                          -1.453152027, 1.061405429)
    ax = jnp.abs(x)
    t = 1.0 / (1.0 + 0.3275911 * ax)
    poly = ((((a5 * t + a4) * t + a3) * t + a2) * t + a1) * t
    y = 1.0 - poly * jnp.exp(-ax * ax)
    return jnp.where(x < 0.0, -y, y)


def _gelu_exact(x):
    return 0.5 * x * (1.0 + _erf_approx(x * 0.7071067811865476))


def _make_linear_kernel(activation):
    def kernel(x_ref, w_ref, b_ref, o_ref, acc_ref):
        @pl.when(pl.program_id(2) == 0)
        def _():
            acc_ref[...] = jnp.zeros_like(acc_ref)

        acc_ref[...] += jnp.dot(x_ref[...], w_ref[...],
                                preferred_element_type=jnp.float32)

        @pl.when(pl.program_id(2) == pl.num_programs(2) - 1)
        def _():
            y = acc_ref[...] + b_ref[...].astype(jnp.float32)
            if activation == "gelu":
                y = _gelu_exact(y)
            o_ref[...] = y.astype(o_ref.dtype)
    return kernel


def pallas_linear(x, w, b, activation=None, tm=256, tn=256, tk=512):
    """x @ w + b (+ optional fused exact GELU). w is (in, out)."""
    orig_shape = x.shape
    K = orig_shape[-1]
    M = x.size // K
    N = w.shape[1]
    x2 = x.reshape(M, K)
    b2 = b.reshape(1, N)
    tm_, tn_, tk_ = _tile(M, tm, 8), _tile(N, tn, 128), _tile(K, tk, 128)
    grid = (M // tm_, N // tn_, K // tk_)
    out = pl.pallas_call(
        _make_linear_kernel(activation),
        out_shape=jax.ShapeDtypeStruct((M, N), x.dtype),
        grid=grid,
        in_specs=[pl.BlockSpec((tm_, tk_), lambda i, j, k: (i, k)),
                  pl.BlockSpec((tk_, tn_), lambda i, j, k: (k, j)),
                  pl.BlockSpec((1, tn_), lambda i, j, k: (0, j))],
        out_specs=pl.BlockSpec((tm_, tn_), lambda i, j, k: (i, j)),
        scratch_shapes=[pltpu.VMEM((tm_, tn_), jnp.float32)],
        compiler_params=pltpu.CompilerParams(
            dimension_semantics=("parallel", "parallel", "arbitrary"),
            vmem_limit_bytes=VMEM_LIMIT),
    )(x2, w, b2)
    return out.reshape(orig_shape[:-1] + (N,))


# ----------------------- row-tiled layernorm (+ residual) --------------------

def _ln_math(x, g, b):
    mu = jnp.mean(x, axis=-1, keepdims=True)
    var = jnp.mean(jnp.square(x - mu), axis=-1, keepdims=True)
    return (x - mu) * jax.lax.rsqrt(var + LN_EPS) * g + b


def _ln_kernel(x_ref, g_ref, b_ref, o_ref):
    x = x_ref[...].astype(jnp.float32)
    o_ref[...] = _ln_math(x, g_ref[...], b_ref[...]).astype(o_ref.dtype)


def _ln_res_kernel(x_ref, r_ref, g_ref, b_ref, o_ref):
    x = x_ref[...].astype(jnp.float32) + r_ref[...].astype(jnp.float32)
    o_ref[...] = _ln_math(x, g_ref[...], b_ref[...]).astype(o_ref.dtype)


def pallas_layernorm(x, g, b, residual=None, tm=512):
    orig_shape = x.shape
    D = orig_shape[-1]
    M = x.size // D
    tm_ = _tile(M, tm, 8)
    grid = (M // tm_,)
    row_spec = pl.BlockSpec((tm_, D), lambda i: (i, 0))
    vec_spec = pl.BlockSpec((1, D), lambda i: (0, 0))
    args = [x.reshape(M, D)]
    in_specs = [row_spec]
    kernel = _ln_kernel
    if residual is not None:
        args.append(residual.reshape(M, D))
        in_specs.append(row_spec)
        kernel = _ln_res_kernel
    args += [g.reshape(1, D), b.reshape(1, D)]
    in_specs += [vec_spec, vec_spec]
    out = pl.pallas_call(
        kernel,
        out_shape=jax.ShapeDtypeStruct((M, D), x.dtype),
        grid=grid,
        in_specs=in_specs,
        out_specs=row_spec,
        compiler_params=pltpu.CompilerParams(
            dimension_semantics=("parallel",),
            vmem_limit_bytes=VMEM_LIMIT),
    )(*args)
    return out.reshape(orig_shape)


# -------------------------------- attention ----------------------------------

def _make_attn_kernel(hb, hd, tq, causal, q_stride, kv_stride, k_off, v_off):
    def kernel(bias_ref, q_ref, kv_ref, o_ref):
        # bias_ref: (1, Sk) additive f32; q_ref: (tq, hb*q_stride);
        # kv_ref: (Sk, hb*kv_stride); o_ref: (tq, hb*hd)
        bias = bias_ref[...]
        outs = []
        for i in range(hb):  # static unroll over heads in this block
            q = q_ref[:, i * q_stride:i * q_stride + hd].astype(jnp.float32)
            k = kv_ref[:, i * kv_stride + k_off:
                          i * kv_stride + k_off + hd].astype(jnp.float32)
            v = kv_ref[:, i * kv_stride + v_off:
                          i * kv_stride + v_off + hd].astype(jnp.float32)
            s = jax.lax.dot_general(q, k, (((1,), (1,)), ((), ())),
                                    preferred_element_type=jnp.float32)  # (tq, Sk)
            s = s + bias
            if causal:
                rows = pl.program_id(2) * tq + jax.lax.broadcasted_iota(
                    jnp.int32, s.shape, 0)
                cols = jax.lax.broadcasted_iota(jnp.int32, s.shape, 1)
                s = jnp.where(cols > rows, NEG_INF, s)
            s = s - jnp.max(s, axis=-1, keepdims=True)
            p = jnp.exp(s)
            p = p * pl.reciprocal(jnp.sum(p, axis=-1, keepdims=True), approx=True)
            outs.append(jnp.dot(p, v, preferred_element_type=jnp.float32))
        out = outs[0] if hb == 1 else jnp.concatenate(outs, axis=-1)
        o_ref[...] = out.astype(o_ref.dtype)  # one lane-dense store
    return kernel


def pallas_attention(q_src, kv_src, bias, *, num_heads, head_dim, causal,
                     q_stride, kv_stride, k_off, v_off, tq=256):
    """q_src: (B, Sq, *) and kv_src: (B, Sk, *) hold per-head interleaved
    projections; bias: (B, 1, Sk) additive f32.  Returns (B, Sq, H*hd) with
    heads contiguous along the last dim (== torch concat-of-heads layout)."""
    # TODO(synk): for very long Sk switch to an online-softmax (flash) form
    # with a KV grid axis and m/l/acc scratch to keep VMEM flat.
    B, Sq, _ = q_src.shape
    Sk = kv_src.shape[1]
    D = num_heads * head_dim
    hb = _pick_head_block(num_heads, head_dim)
    n_hblk = num_heads // hb
    tq_ = _tile(Sq, tq, 8)
    grid = (B, n_hblk, Sq // tq_)
    q_blk = hb * q_stride
    kv_blk = hb * kv_stride
    kernel = _make_attn_kernel(hb, head_dim, tq_, causal,
                               q_stride, kv_stride, k_off, v_off)
    return pl.pallas_call(
        kernel,
        out_shape=jax.ShapeDtypeStruct((B, Sq, D), q_src.dtype),
        grid=grid,
        in_specs=[pl.BlockSpec((None, 1, Sk), lambda b, h, s: (b, 0, 0)),
                  pl.BlockSpec((None, tq_, q_blk), lambda b, h, s: (b, s, h)),
                  pl.BlockSpec((None, Sk, kv_blk), lambda b, h, s: (b, 0, h))],
        out_specs=pl.BlockSpec((None, tq_, hb * head_dim),
                               lambda b, h, s: (b, s, h)),
        compiler_params=pltpu.CompilerParams(
            dimension_semantics=("parallel", "parallel", "parallel"),
            vmem_limit_bytes=VMEM_LIMIT),
    )(bias, q_src, kv_src)


def attention_block(p, h_q, h_kv, bias, num_heads, *, causal, cross):
    B, Sq, D = h_q.shape
    hd = D // num_heads
    if cross:
        # q projection (scale folded into q_w/q_b); fused per-head [k|v] projection.
        q_src = pallas_linear(h_q, p["q_w"], p["q_b"])          # (B, Sq, D)
        kv_src = pallas_linear(h_kv, p["kv_w"], p["kv_b"])      # (B, Sk, 2D)
        q_stride, kv_stride, k_off, v_off = hd, 2 * hd, 0, hd
    else:
        # fused per-head [q|k|v] projection, q columns pre-scaled by 1/sqrt(hd).
        qkv = pallas_linear(h_q, p["qkv_w"], p["qkv_b"])        # (B, S, 3D)
        q_src = kv_src = qkv
        q_stride, kv_stride, k_off, v_off = 3 * hd, 3 * hd, hd, 2 * hd
    attn = pallas_attention(q_src, kv_src, bias, num_heads=num_heads,
                            head_dim=hd, causal=causal, q_stride=q_stride,
                            kv_stride=kv_stride, k_off=k_off, v_off=v_off)
    return pallas_linear(attn, p["o_w"], p["o_b"])


# ----------------------------- BART (JAX glue) -------------------------------

def shift_tokens_right(input_ids, pad_token_id, decoder_start_token_id):
    shifted = jnp.roll(input_ids, 1, axis=-1)
    shifted = shifted.at[:, 0].set(decoder_start_token_id)
    shifted = jnp.where(shifted == -100, pad_token_id, shifted)
    return shifted


def embed(prefix, params, ids, cfg):
    S = ids.shape[1]
    # TODO(synk): token/positional embedding gathers stay in XLA (data-dependent
    # indexing; a BlockSpec cannot express them and a DMA-gather is not worth it here).
    tok = params["shared"][ids]
    if cfg["embed_scale"] != 1.0:
        tok = tok * cfg["embed_scale"]
    pos = params[prefix + "pos"][jnp.arange(S) + 2]              # offset = 2
    h = tok + pos[None]
    return pallas_layernorm(h, params[prefix + "ln_emb_g"],
                            params[prefix + "ln_emb_b"])


def bart_forward(params, input_ids, attention_mask, cfg):
    B, S = input_ids.shape
    H = cfg["num_heads"]

    # Tiny additive key-padding bias, reused across all heads & query rows.
    enc_bias = jnp.where(attention_mask[:, None, :] == 0,
                         NEG_INF, 0.0).astype(jnp.float32)        # (B, 1, S)
    zero_bias = jnp.zeros((B, 1, S), jnp.float32)

    # ------------------------------ encoder -------------------------------
    h = embed("enc_", params, input_ids, cfg)
    for lp in params["enc_layers"]:
        res = h
        a = attention_block(lp["self_attn"], h, h, enc_bias, H,
                            causal=False, cross=False)
        h = pallas_layernorm(a, lp["sa_ln_g"], lp["sa_ln_b"], residual=res)
        res = h
        f = pallas_linear(h, lp["fc1_w"], lp["fc1_b"], activation="gelu")
        f = pallas_linear(f, lp["fc2_w"], lp["fc2_b"])
        h = pallas_layernorm(f, lp["final_ln_g"], lp["final_ln_b"], residual=res)
    enc_out = h

    # ------------------------------ decoder -------------------------------
    dec_ids = shift_tokens_right(input_ids, cfg["pad_token_id"],
                                 cfg["decoder_start_token_id"])
    h = embed("dec_", params, dec_ids, cfg)
    for lp in params["dec_layers"]:
        res = h
        a = attention_block(lp["self_attn"], h, h, zero_bias, H,
                            causal=True, cross=False)
        h = pallas_layernorm(a, lp["sa_ln_g"], lp["sa_ln_b"], residual=res)
        res = h
        a = attention_block(lp["cross_attn"], h, enc_out, enc_bias, H,
                            causal=False, cross=True)
        h = pallas_layernorm(a, lp["ca_ln_g"], lp["ca_ln_b"], residual=res)
        res = h
        f = pallas_linear(h, lp["fc1_w"], lp["fc1_b"], activation="gelu")
        f = pallas_linear(f, lp["fc2_w"], lp["fc2_b"])
        h = pallas_layernorm(f, lp["final_ln_g"], lp["final_ln_b"], residual=res)

    return h  # == BartModel(...)[0]  (decoder last_hidden_state)


# ----------------------------- init parameters ------------------------------

def init_params(key, cfg):
    D, F, V = cfg["d_model"], cfg["ffn_dim"], cfg["vocab_size"]
    P = cfg["max_position_embeddings"]
    H = cfg["num_heads"]
    hd = D // H
    scale = hd ** -0.5
    keys = iter(jax.random.split(key, 4096))

    def nrm(shape):
        return jax.random.normal(next(keys), shape, jnp.float32) * 0.02

    def dense(din, dout):
        return nrm((din, dout)), jnp.zeros((dout,), jnp.float32)

    def ln():
        return jnp.ones((D,), jnp.float32), jnp.zeros((D,), jnp.float32)

    def self_attn_params():
        # Fused QKV, per-head interleaved layout [q_h | k_h | v_h]; query scaling
        # folded into the q columns (bias is zero so its scaling is a no-op).
        w = nrm((D, H, 3, hd))
        w = w.at[:, :, 0, :].multiply(scale)
        b = jnp.zeros((H, 3, hd), jnp.float32)
        p = {"qkv_w": w.reshape(D, 3 * D), "qkv_b": b.reshape(3 * D)}
        p["o_w"], p["o_b"] = dense(D, D)
        return p

    def cross_attn_params():
        qw = nrm((D, H, hd)) * scale                     # scale folded into q
        kvw = nrm((D, H, 2, hd))                         # per-head [k_h | v_h]
        p = {"q_w": qw.reshape(D, D),
             "q_b": jnp.zeros((D,), jnp.float32),
             "kv_w": kvw.reshape(D, 2 * D),
             "kv_b": jnp.zeros((2 * D,), jnp.float32)}
        p["o_w"], p["o_b"] = dense(D, D)
        return p

    params = {"shared": nrm((V, D)).at[cfg["pad_token_id"]].set(0.0),
              "enc_pos": nrm((P + 2, D)),                # learned pos, offset 2
              "dec_pos": nrm((P + 2, D))}
    params["enc_ln_emb_g"], params["enc_ln_emb_b"] = ln()
    params["dec_ln_emb_g"], params["dec_ln_emb_b"] = ln()

    enc_layers, dec_layers = [], []
    for _ in range(cfg["num_layers"]):
        lp = {"self_attn": self_attn_params()}
        lp["sa_ln_g"], lp["sa_ln_b"] = ln()
        lp["fc1_w"], lp["fc1_b"] = dense(D, F)
        lp["fc2_w"], lp["fc2_b"] = dense(F, D)
        lp["final_ln_g"], lp["final_ln_b"] = ln()
        enc_layers.append(lp)
    for _ in range(cfg["num_layers"]):
        lp = {"self_attn": self_attn_params(), "cross_attn": cross_attn_params()}
        lp["sa_ln_g"], lp["sa_ln_b"] = ln()
        lp["ca_ln_g"], lp["ca_ln_b"] = ln()
        lp["fc1_w"], lp["fc1_b"] = dense(D, F)
        lp["fc2_w"], lp["fc2_b"] = dense(F, D)
        lp["final_ln_g"], lp["final_ln_b"] = ln()
        dec_layers.append(lp)
    params["enc_layers"] = enc_layers
    params["dec_layers"] = dec_layers
    return params


# ---------------------------------- main -------------------------------------

if __name__ == "__main__":
    # Small-shape synthetic config consistent with MyBart(hidden, layers, heads, vocab).
    cfg = dict(
        d_model=32,
        ffn_dim=64,
        num_layers=2,
        num_heads=4,
        vocab_size=128,
        max_position_embeddings=64,
        pad_token_id=1,
        decoder_start_token_id=2,
        embed_scale=1.0,            # scale_embedding=False in BartConfig default
    )
    key = jax.random.PRNGKey(0)
    pkey, ikey = jax.random.split(key)
    params = init_params(pkey, cfg)

    B, S = 2, 8
    input_ids = jax.random.randint(ikey, (B, S), 3, cfg["vocab_size"],
                                   dtype=jnp.int32)
    attention_mask = jnp.ones((B, S), dtype=jnp.int32).at[1, 6:].set(0)

    fwd = jax.jit(lambda p, ids, m: bart_forward(p, ids, m, cfg))
    out = fwd(params, input_ids, attention_mask)
    jax.block_until_ready(out)
    assert out.shape == (B, S, cfg["d_model"]) and out.dtype == jnp.float32
    print("KERNEL_OK")
</pallas_src>

<mosaic_0001>
module attributes {stable_mosaic.version = 11 : i64} {
  func.func @kernel(%arg0: i32, %arg1: i32, %arg2: i32, %arg3: memref<16x32xf32, #tpu.memory_space<vmem>>, %arg4: memref<32x96xf32, #tpu.memory_space<vmem>>, %arg5: memref<1x96xf32, #tpu.memory_space<vmem>>, %arg6: memref<16x96xf32, #tpu.memory_space<vmem>>, %arg7: memref<16x96xf32, #tpu.memory_space<vmem>>) attributes {dimension_semantics = [#tpu.dimension_semantics<parallel>, #tpu.dimension_semantics<parallel>, #tpu.dimension_semantics<arbitrary>], iteration_bounds = array<i64: 1, 1, 1>, scalar_prefetch = 0 : i64, scratch_operands = 1 : i64, tpu.core_type = #tpu.core_type<tc>, window_params = [{transform_indices = @transform_0, window_bounds = array<i64: 16, 32>}, {transform_indices = @transform_1, window_bounds = array<i64: 32, 96>}, {transform_indices = @transform_2, window_bounds = array<i64: 1, 96>}, {transform_indices = @transform_3, window_bounds = array<i64: 16, 96>}]} {
    %c0_i32 = arith.constant 0 : i32
    %0 = arith.cmpi eq, %arg2, %c0_i32 : i32
    %1 = arith.extui %0 : i1 to i32
    %c0_i32_0 = arith.constant 0 : i32
    %2 = arith.cmpi ne, %1, %c0_i32_0 : i32
    scf.if %2 {
      %cst_10 = arith.constant 0.000000e+00 : f32
      %12 = vector.broadcast %cst_10 : f32 to vector<16x96xf32>
      %c0_11 = arith.constant 0 : index
      %c0_12 = arith.constant 0 : index
      %13 = vector.load %arg7[%c0_11, %c0_12] : memref<16x96xf32, #tpu.memory_space<vmem>>, vector<16x96xf32>
      tpu.vector_store %arg7[%c0_11, %c0_12], %12 {strides = array<i32>} : memref<16x96xf32, #tpu.memory_space<vmem>>, vector<16x96xf32>,
    } else {
    }
    %c0 = arith.constant 0 : index
    %c0_1 = arith.constant 0 : index
    %3 = vector.load %arg7[%c0, %c0_1] : memref<16x96xf32, #tpu.memory_space<vmem>>, vector<16x96xf32>
    %c0_2 = arith.constant 0 : index
    %c0_3 = arith.constant 0 : index
    %4 = vector.load %arg3[%c0_2, %c0_3] : memref<16x32xf32, #tpu.memory_space<vmem>>, vector<16x32xf32>
    %c0_4 = arith.constant 0 : index
    %c0_5 = arith.constant 0 : index
    %5 = vector.load %arg4[%c0_4, %c0_5] : memref<32x96xf32, #tpu.memory_space<vmem>>, vector<32x96xf32>
    %cst = arith.constant dense<0.000000e+00> : vector<16x96xf32>
    %6 = tpu.matmul %4, %5, %cst {dimension_numbers = #tpu.dot_dimension_numbers<[1], [0], [0], [1], [0, 0, 1, 1], [], []>} : vector<16x32xf32>, vector<32x96xf32>, vector<16x96xf32> -> vector<16x96xf32>
    %7 = arith.addf %3, %6 : vector<16x96xf32>
    %c0_6 = arith.constant 0 : index
    %c0_7 = arith.constant 0 : index
    %8 = vector.load %arg7[%c0_6, %c0_7] : memref<16x96xf32, #tpu.memory_space<vmem>>, vector<16x96xf32>
    tpu.vector_store %arg7[%c0_6, %c0_7], %7 {strides = array<i32>} : memref<16x96xf32, #tpu.memory_space<vmem>>, vector<16x96xf32>,
    %c0_i32_8 = arith.constant 0 : i32
    %9 = arith.cmpi eq, %arg2, %c0_i32_8 : i32
    %10 = arith.extui %9 : i1 to i32
    %c0_i32_9 = arith.constant 0 : i32
    %11 = arith.cmpi ne, %10, %c0_i32_9 : i32
    scf.if %11 {
      %c0_10 = arith.constant 0 : index
      %c0_11 = arith.constant 0 : index
      %12 = vector.load %arg7[%c0_10, %c0_11] : memref<16x96xf32, #tpu.memory_space<vmem>>, vector<16x96xf32>
      %c0_12 = arith.constant 0 : index
      %c0_13 = arith.constant 0 : index
      %13 = vector.load %arg5[%c0_12, %c0_13] : memref<1x96xf32, #tpu.memory_space<vmem>>, vector<1x96xf32>
      %14 = vector.broadcast %13 : vector<1x96xf32> to vector<16x96xf32>
      %15 = arith.addf %12, %14 : vector<16x96xf32>
      %c0_14 = arith.constant 0 : index
      %c0_15 = arith.constant 0 : index
      %16 = vector.load %arg6[%c0_14, %c0_15] : memref<16x96xf32, #tpu.memory_space<vmem>>, vector<16x96xf32>
      tpu.vector_store %arg6[%c0_14, %c0_15], %15 {strides = array<i32>} : memref<16x96xf32, #tpu.memory_space<vmem>>, vector<16x96xf32>,
    } else {
    }
    return
  }
  func.func @transform_0(%arg0: i32, %arg1: i32, %arg2: i32) -> (i32, i32) {
    %c0_i32 = arith.constant 0 : i32
    return %arg0, %arg2 : i32, i32
  }
  func.func @transform_1(%arg0: i32, %arg1: i32, %arg2: i32) -> (i32, i32) {
    %c0_i32 = arith.constant 0 : i32
    return %arg2, %arg1 : i32, i32
  }
  func.func @transform_2(%arg0: i32, %arg1: i32, %arg2: i32) -> (i32, i32) {
    %c0_i32 = arith.constant 0 : i32
    %c0_i32_0 = arith.constant 0 : i32
    return %c0_i32, %arg1 : i32, i32
  }
  func.func @transform_3(%arg0: i32, %arg1: i32, %arg2: i32) -> (i32, i32) {
    %c0_i32 = arith.constant 0 : i32
    return %arg0, %arg1 : i32, i32
  }
}

module attributes {stable_mosaic.version = 11 : i64} {
  func.func @_ln_kernel(%arg0: i32, %arg1: memref<16x32xf32, #tpu.memory_space<vmem>>, %arg2: memref<1x32xf32, #tpu.memory_space<vmem>>, %arg3: memref<1x32xf32, #tpu.memory_space<vmem>>, %arg4: memref<16x32xf32, #tpu.memory_space<vmem>>) attributes {dimension_semantics = [#tpu.dimension_semantics<parallel>], iteration_bounds = array<i64: 1>, scalar_prefetch = 0 : i64, scratch_operands = 0 : i64, tpu.core_type = #tpu.core_type<tc>, window_params = [{transform_indices = @transform_0, window_bounds = array<i64: 16, 32>}, {pipeline_mode = #tpu.pipeline_mode<synchronous>, transform_indices = @transform_1, window_bounds = array<i64: 1, 32>}, {pipeline_mode = #tpu.pipeline_mode<synchronous>, transform_indices = @transform_2, window_bounds = array<i64: 1, 32>}, {transform_indices = @transform_3, window_bounds = array<i64: 16, 32>}]} {
    %c0 = arith.constant 0 : index
    %c0_0 = arith.constant 0 : index
    %0 = vector.load %arg1[%c0, %c0_0] : memref<16x32xf32, #tpu.memory_space<vmem>>, vector<16x32xf32>
    %c0_1 = arith.constant 0 : index
    %c0_2 = arith.constant 0 : index
    %1 = vector.load %arg2[%c0_1, %c0_2] : memref<1x32xf32, #tpu.memory_space<vmem>>, vector<1x32xf32>
    %c0_3 = arith.constant 0 : index
    %c0_4 = arith.constant 0 : index
    %2 = vector.load %arg3[%c0_3, %c0_4] : memref<1x32xf32, #tpu.memory_space<vmem>>, vector<1x32xf32>
    %cst = arith.constant dense<0.000000e+00> : vector<16xf32>
    %3 = vector.multi_reduction <add>, %0, %cst [1] : vector<16x32xf32> to vector<16xf32>
    %4 = vector.shape_cast %3 : vector<16xf32> to vector<16x1xf32>
    %cst_5 = arith.constant 3.200000e+01 : f32
    %5 = vector.broadcast %cst_5 : f32 to vector<16x1xf32>
    %6 = arith.divf %4, %5 : vector<16x1xf32>
    %7 = vector.broadcast %6 : vector<16x1xf32> to vector<16x32xf32>
    %8 = arith.subf %0, %7 : vector<16x32xf32>
    %9 = arith.mulf %8, %8 : vector<16x32xf32>
    %cst_6 = arith.constant dense<0.000000e+00> : vector<16xf32>
    %10 = vector.multi_reduction <add>, %9, %cst_6 [1] : vector<16x32xf32> to vector<16xf32>
    %11 = vector.shape_cast %10 : vector<16xf32> to vector<16x1xf32>
    %cst_7 = arith.constant 3.200000e+01 : f32
    %12 = vector.broadcast %cst_7 : f32 to vector<16x1xf32>
    %13 = arith.divf %11, %12 : vector<16x1xf32>
    %14 = vector.broadcast %6 : vector<16x1xf32> to vector<16x32xf32>
    %15 = arith.subf %0, %14 : vector<16x32xf32>
    %cst_8 = arith.constant 9.99999974E-6 : f32
    %16 = vector.broadcast %cst_8 : f32 to vector<16x1xf32>
    %17 = arith.addf %13, %16 : vector<16x1xf32>
    %18 = math.rsqrt %17 : vector<16x1xf32>
    %19 = vector.broadcast %18 : vector<16x1xf32> to vector<16x32xf32>
    %20 = arith.mulf %15, %19 : vector<16x32xf32>
    %21 = vector.broadcast %1 : vector<1x32xf32> to vector<16x32xf32>
    %22 = arith.mulf %20, %21 : vector<16x32xf32>
    %23 = vector.broadcast %2 : vector<1x32xf32> to vector<16x32xf32>
    %24 = arith.addf %22, %23 : vector<16x32xf32>
    %c0_9 = arith.constant 0 : index
    %c0_10 = arith.constant 0 : index
    %25 = vector.load %arg4[%c0_9, %c0_10] : memref<16x32xf32, #tpu.memory_space<vmem>>, vector<16x32xf32>
    tpu.vector_store %arg4[%c0_9, %c0_10], %24 {strides = array<i32>} : memref<16x32xf32, #tpu.memory_space<vmem>>, vector<16x32xf32>,
    return
  }
  func.func @transform_0(%arg0: i32) -> (i32, i32) {
    %c0_i32 = arith.constant 0 : i32
    %c0_i32_0 = arith.constant 0 : i32
    return %arg0, %c0_i32 : i32, i32
  }
  func.func @transform_1(%arg0: i32) -> (i32, i32) {
    %c0_i32 = arith.constant 0 : i32
    %c0_i32_0 = arith.constant 0 : i32
    %c0_i32_1 = arith.constant 0 : i32
    return %c0_i32, %c0_i32_0 : i32, i32
  }
  func.func @transform_2(%arg0: i32) -> (i32, i32) {
    %c0_i32 = arith.constant 0 : i32
    %c0_i32_0 = arith.constant 0 : i32
    %c0_i32_1 = arith.constant 0 : i32
    return %c0_i32, %c0_i32_0 : i32, i32
  }
  func.func @transform_3(%arg0: i32) -> (i32, i32) {
    %c0_i32 = arith.constant 0 : i32
    %c0_i32_0 = arith.constant 0 : i32
    return %arg0, %c0_i32 : i32, i32
  }
}

module attributes {stable_mosaic.version = 11 : i64} {
  func.func @kernel(%arg0: i32, %arg1: i32, %arg2: i32, %arg3: memref<1x1x8xf32, #tpu.memory_space<vmem>>, %arg4: memref<1x8x96xf32, #tpu.memory_space<vmem>>, %arg5: memref<1x8x96xf32, #tpu.memory_space<vmem>>, %arg6: memref<1x8x32xf32, #tpu.memory_space<vmem>>) attributes {dimension_semantics = [#tpu.dimension_semantics<parallel>, #tpu.dimension_semantics<parallel>, #tpu.dimension_semantics<parallel>], iteration_bounds = array<i64: 2, 1, 1>, scalar_prefetch = 0 : i64, scratch_operands = 0 : i64, tpu.core_type = #tpu.core_type<tc>, window_params = [{transform_indices = @transform_0, window_bounds = array<i64: 1, 1, 8>}, {transform_indices = @transform_1, window_bounds = array<i64: 1, 8, 96>}, {transform_indices = @transform_2, window_bounds = array<i64: 1, 8, 96>}, {transform_indices = @transform_3, window_bounds = array<i64: 1, 8, 32>}]} {
    %c0 = arith.constant 0 : index
    %c0_0 = arith.constant 0 : index
    %c0_1 = arith.constant 0 : index
    %0 = vector.load %arg3[%c0, %c0_0, %c0_1] : memref<1x1x8xf32, #tpu.memory_space<vmem>>, vector<1x1x8xf32>
    %1 = vector.shape_cast %0 : vector<1x1x8xf32> to vector<1x8xf32>
    %c0_2 = arith.constant 0 : index
    %c0_3 = arith.constant 0 : index
    %c0_4 = arith.constant 0 : index
    %2 = vector.load %arg4[%c0_2, %c0_3, %c0_4] : memref<1x8x96xf32, #tpu.memory_space<vmem>>, vector<1x8x8xf32>
    %3 = vector.shape_cast %2 : vector<1x8x8xf32> to vector<8x8xf32>
    %c0_5 = arith.constant 0 : index
    %c0_6 = arith.constant 0 : index
    %c8 = arith.constant 8 : index
    %4 = vector.load %arg5[%c0_5, %c0_6, %c8] : memref<1x8x96xf32, #tpu.memory_space<vmem>>, vector<1x8x8xf32>
    %5 = vector.shape_cast %4 : vector<1x8x8xf32> to vector<8x8xf32>
    %c0_7 = arith.constant 0 : index
    %c0_8 = arith.constant 0 : index
    %c16 = arith.constant 16 : index
    %6 = vector.load %arg5[%c0_7, %c0_8, %c16] : memref<1x8x96xf32, #tpu.memory_space<vmem>>, vector<1x8x8xf32>
    %7 = vector.shape_cast %6 : vector<1x8x8xf32> to vector<8x8xf32>
    %cst = arith.constant dense<0.000000e+00> : vector<8x8xf32>
    %8 = tpu.matmul %3, %5, %cst {dimension_numbers = #tpu.dot_dimension_numbers<[1], [1], [0], [0], [0, 0, 1, 0], [], []>} : vector<8x8xf32>, vector<8x8xf32>, vector<8x8xf32> -> vector<8x8xf32>
    %9 = vector.broadcast %1 : vector<1x8xf32> to vector<8x8xf32>
    %10 = arith.addf %8, %9 : vector<8x8xf32>
    %c8_i32 = arith.constant 8 : i32
    %11 = arith.muli %arg2, %c8_i32 : i32
    %12 = tpu.iota {dimensions = array<i32: 0>} : vector<8x8xi32>
    %13 = vector.broadcast %11 : i32 to vector<8x8xi32>
    %14 = arith.addi %13, %12 : vector<8x8xi32>
    %15 = tpu.iota {dimensions = array<i32: 1>} : vector<8x8xi32>
    %16 = arith.cmpi sgt, %15, %14 : vector<8x8xi32>
    %cst_9 = arith.constant -3.40282347E+38 : f32
    %17 = vector.broadcast %cst_9 : f32 to vector<8x8xf32>
    %18 = arith.select %16, %17, %10 : vector<8x8xi1>, vector<8x8xf32>
    %cst_10 = arith.constant dense<0xFF800000> : vector<8xf32>
    %19 = vector.multi_reduction <maximumf>, %18, %cst_10 [1] : vector<8x8xf32> to vector<8xf32>
    %20 = vector.shape_cast %19 : vector<8xf32> to vector<8x1xf32>
    %21 = vector.broadcast %20 : vector<8x1xf32> to vector<8x8xf32>
    %22 = arith.subf %18, %21 : vector<8x8xf32>
    %23 = math.exp %22 : vector<8x8xf32>
    %cst_11 = arith.constant dense<0.000000e+00> : vector<8xf32>
    %24 = vector.multi_reduction <add>, %23, %cst_11 [1] : vector<8x8xf32> to vector<8xf32>
    %25 = vector.shape_cast %24 : vector<8xf32> to vector<8x1xf32>
    %26 = tpu.reciprocal %25 {approx = true} : vector<8x1xf32> -> vector<8x1xf32>
    %27 = vector.broadcast %26 : vector<8x1xf32> to vector<8x8xf32>
    %28 = arith.mulf %23, %27 : vector<8x8xf32>
    %cst_12 = arith.constant dense<0.000000e+00> : vector<8x8xf32>
    %29 = tpu.matmul %28, %7, %cst_12 {dimension_numbers = #tpu.dot_dimension_numbers<[1], [0], [0], [1], [0, 0, 1, 1], [], []>} : vector<8x8xf32>, vector<8x8xf32>, vector<8x8xf32> -> vector<8x8xf32>
    %c0_13 = arith.constant 0 : index
    %c0_14 = arith.constant 0 : index
    %c24 = arith.constant 24 : index
    %30 = vector.load %arg4[%c0_13, %c0_14, %c24] : memref<1x8x96xf32, #tpu.memory_space<vmem>>, vector<1x8x8xf32>
    %31 = vector.shape_cast %30 : vector<1x8x8xf32> to vector<8x8xf32>
    %c0_15 = arith.constant 0 : index
    %c0_16 = arith.constant 0 : index
    %c32 = arith.constant 32 : index
    %32 = vector.load %arg5[%c0_15, %c0_16, %c32] : memref<1x8x96xf32, #tpu.memory_space<vmem>>, vector<1x8x8xf32>
    %33 = vector.shape_cast %32 : vector<1x8x8xf32> to vector<8x8xf32>
    %c0_17 = arith.constant 0 : index
    %c0_18 = arith.constant 0 : index
    %c40 = arith.constant 40 : index
    %34 = vector.load %arg5[%c0_17, %c0_18, %c40] : memref<1x8x96xf32, #tpu.memory_space<vmem>>, vector<1x8x8xf32>
    %35 = vector.shape_cast %34 : vector<1x8x8xf32> to vector<8x8xf32>
    %cst_19 = arith.constant dense<0.000000e+00> : vector<8x8xf32>
    %36 = tpu.matmul %31, %33, %cst_19 {dimension_numbers = #tpu.dot_dimension_numbers<[1], [1], [0], [0], [0, 0, 1, 0], [], []>} : vector<8x8xf32>, vector<8x8xf32>, vector<8x8xf32> -> vector<8x8xf32>
    %37 = vector.broadcast %1 : vector<1x8xf32> to vector<8x8xf32>
    %38 = arith.addf %36, %37 : vector<8x8xf32>
    %c8_i32_20 = arith.constant 8 : i32
    %39 = arith.muli %arg2, %c8_i32_20 : i32
    %40 = tpu.iota {dimensions = array<i32: 0>} : vector<8x8xi32>
    %41 = vector.broadcast %39 : i32 to vector<8x8xi32>
    %42 = arith.addi %41, %40 : vector<8x8xi32>
    %43 = tpu.iota {dimensions = array<i32: 1>} : vector<8x8xi32>
    %44 = arith.cmpi sgt, %43, %42 : vector<8x8xi32>
    %cst_21 = arith.constant -3.40282347E+38 : f32
    %45 = vector.broadcast %cst_21 : f32 to vector<8x8xf32>
    %46 = arith.select %44, %45, %38 : vector<8x8xi1>, vector<8x8xf32>
    %cst_22 = arith.constant dense<0xFF800000> : vector<8xf32>
    %47 = vector.multi_reduction <maximumf>, %46, %cst_22 [1] : vector<8x8xf32> to vector<8xf32>
    %48 = vector.shape_cast %47 : vector<8xf32> to vector<8x1xf32>
    %49 = vector.broadcast %48 : vector<8x1xf32> to vector<8x8xf32>
    %50 = arith.subf %46, %49 : vector<8x8xf32>
    %51 = math.exp %50 : vector<8x8xf32>
    %cst_23 = arith.constant dense<0.000000e+00> : vector<8xf32>
    %52 = vector.multi_reduction <add>, %51, %cst_23 [1] : vector<8x8xf32> to vector<8xf32>
    %53 = vector.shape_cast %52 : vector<8xf32> to vector<8x1xf32>
    %54 = tpu.reciprocal %53 {approx = true} : vector<8x1xf32> -> vector<8x1xf32>
    %55 = vector.broadcast %54 : vector<8x1xf32> to vector<8x8xf32>
    %56 = arith.mulf %51, %55 : vector<8x8xf32>
    %cst_24 = arith.constant dense<0.000000e+00> : vector<8x8xf32>
    %57 = tpu.matmul %56, %35, %cst_24 {dimension_numbers = #tpu.dot_dimension_numbers<[1], [0], [0], [1], [0, 0, 1, 1], [], []>} : vector<8x8xf32>, vector<8x8xf32>, vector<8x8xf32> -> vector<8x8xf32>
    %c0_25 = arith.constant 0 : index
    %c0_26 = arith.constant 0 : index
    %c48 = arith.constant 48 : index
    %58 = vector.load %arg4[%c0_25, %c0_26, %c48] : memref<1x8x96xf32, #tpu.memory_space<vmem>>, vector<1x8x8xf32>
    %59 = vector.shape_cast %58 : vector<1x8x8xf32> to vector<8x8xf32>
    %c0_27 = arith.constant 0 : index
    %c0_28 = arith.constant 0 : index
    %c56 = arith.constant 56 : index
    %60 = vector.load %arg5[%c0_27, %c0_28, %c56] : memref<1x8x96xf32, #tpu.memory_space<vmem>>, vector<1x8x8xf32>
    %61 = vector.shape_cast %60 : vector<1x8x8xf32> to vector<8x8xf32>
    %c0_29 = arith.constant 0 : index
    %c0_30 = arith.constant 0 : index
    %c64 = arith.constant 64 : index
    %62 = vector.load %arg5[%c0_29, %c0_30, %c64] : memref<1x8x96xf32, #tpu.memory_space<vmem>>, vector<1x8x8xf32>
    %63 = vector.shape_cast %62 : vector<1x8x8xf32> to vector<8x8xf32>
    %cst_31 = arith.constant dense<0.000000e+00> : vector<8x8xf32>
    %64 = tpu.matmul %59, %61, %cst_31 {dimension_numbers = #tpu.dot_dimension_numbers<[1], [1], [0], [0], [0, 0, 1, 0], [], []>} : vector<8x8xf32>, vector<8x8xf32>, vector<8x8xf32> -> vector<8x8xf32>
    %65 = vector.broadcast %1 : vector<1x8xf32> to vector<8x8xf32>
    %66 = arith.addf %64, %65 : vector<8x8xf32>
    %c8_i32_32 = arith.constant 8 : i32
    %67 = arith.muli %arg2, %c8_i32_32 : i32
    %68 = tpu.iota {dimensions = array<i32: 0>} : vector<8x8xi32>
    %69 = vector.broadcast %67 : i32 to vector<8x8xi32>
    %70 = arith.addi %69, %68 : vector<8x8xi32>
    %71 = tpu.iota {dimensions = array<i32: 1>} : vector<8x8xi32>
    %72 = arith.cmpi sgt, %71, %70 : vector<8x8xi32>
    %cst_33 = arith.constant -3.40282347E+38 : f32
    %73 = vector.broadcast %cst_33 : f32 to vector<8x8xf32>
    %74 = arith.select %72, %73, %66 : vector<8x8xi1>, vector<8x8xf32>
    %cst_34 = arith.constant dense<0xFF800000> : vector<8xf32>
    %75 = vector.multi_reduction <maximumf>, %74, %cst_34 [1] : vector<8x8xf32> to vector<8xf32>
    %76 = vector.shape_cast %75 : vector<8xf32> to vector<8x1xf32>
    %77 = vector.broadcast %76 : vector<8x1xf32> to vector<8x8xf32>
    %78 = arith.subf %74, %77 : vector<8x8xf32>
    %79 = math.exp %78 : vector<8x8xf32>
    %cst_35 = arith.constant dense<0.000000e+00> : vector<8xf32>
    %80 = vector.multi_reduction <add>, %79, %cst_35 [1] : vector<8x8xf32> to vector<8xf32>
    %81 = vector.shape_cast %80 : vector<8xf32> to vector<8x1xf32>
    %82 = tpu.reciprocal %81 {approx = true} : vector<8x1xf32> -> vector<8x1xf32>
    %83 = vector.broadcast %82 : vector<8x1xf32> to vector<8x8xf32>
    %84 = arith.mulf %79, %83 : vector<8x8xf32>
    %cst_36 = arith.constant dense<0.000000e+00> : vector<8x8xf32>
    %85 = tpu.matmul %84, %63, %cst_36 {dimension_numbers = #tpu.dot_dimension_numbers<[1], [0], [0], [1], [0, 0, 1, 1], [], []>} : vector<8x8xf32>, vector<8x8xf32>, vector<8x8xf32> -> vector<8x8xf32>
    %c0_37 = arith.constant 0 : index
    %c0_38 = arith.constant 0 : index
    %c72 = arith.constant 72 : index
    %86 = vector.load %arg4[%c0_37, %c0_38, %c72] : memref<1x8x96xf32, #tpu.memory_space<vmem>>, vector<1x8x8xf32>
    %87 = vector.shape_cast %86 : vector<1x8x8xf32> to vector<8x8xf32>
    %c0_39 = arith.constant 0 : index
    %c0_40 = arith.constant 0 : index
    %c80 = arith.constant 80 : index
    %88 = vector.load %arg5[%c0_39, %c0_40, %c80] : memref<1x8x96xf32, #tpu.memory_space<vmem>>, vector<1x8x8xf32>
    %89 = vector.shape_cast %88 : vector<1x8x8xf32> to vector<8x8xf32>
    %c0_41 = arith.constant 0 : index
    %c0_42 = arith.constant 0 : index
    %c88 = arith.constant 88 : index
    %90 = vector.load %arg5[%c0_41, %c0_42, %c88] : memref<1x8x96xf32, #tpu.memory_space<vmem>>, vector<1x8x8xf32>
    %91 = vector.shape_cast %90 : vector<1x8x8xf32> to vector<8x8xf32>
    %cst_43 = arith.constant dense<0.000000e+00> : vector<8x8xf32>
    %92 = tpu.matmul %87, %89, %cst_43 {dimension_numbers = #tpu.dot_dimension_numbers<[1], [1], [0], [0], [0, 0, 1, 0], [], []>} : vector<8x8xf32>, vector<8x8xf32>, vector<8x8xf32> -> vector<8x8xf32>
    %93 = vector.broadcast %1 : vector<1x8xf32> to vector<8x8xf32>
    %94 = arith.addf %92, %93 : vector<8x8xf32>
    %c8_i32_44 = arith.constant 8 : i32
    %95 = arith.muli %arg2, %c8_i32_44 : i32
    %96 = tpu.iota {dimensions = array<i32: 0>} : vector<8x8xi32>
    %97 = vector.broadcast %95 : i32 to vector<8x8xi32>
    %98 = arith.addi %97, %96 : vector<8x8xi32>
    %99 = tpu.iota {dimensions = array<i32: 1>} : vector<8x8xi32>
    %100 = arith.cmpi sgt, %99, %98 : vector<8x8xi32>
    %cst_45 = arith.constant -3.40282347E+38 : f32
    %101 = vector.broadcast %cst_45 : f32 to vector<8x8xf32>
    %102 = arith.select %100, %101, %94 : vector<8x8xi1>, vector<8x8xf32>
    %cst_46 = arith.constant dense<0xFF800000> : vector<8xf32>
    %103 = vector.multi_reduction <maximumf>, %102, %cst_46 [1] : vector<8x8xf32> to vector<8xf32>
    %104 = vector.shape_cast %103 : vector<8xf32> to vector<8x1xf32>
    %105 = vector.broadcast %104 : vector<8x1xf32> to vector<8x8xf32>
    %106 = arith.subf %102, %105 : vector<8x8xf32>
    %107 = math.exp %106 : vector<8x8xf32>
    %cst_47 = arith.constant dense<0.000000e+00> : vector<8xf32>
    %108 = vector.multi_reduction <add>, %107, %cst_47 [1] : vector<8x8xf32> to vector<8xf32>
    %109 = vector.shape_cast %108 : vector<8xf32> to vector<8x1xf32>
    %110 = tpu.reciprocal %109 {approx = true} : vector<8x1xf32> -> vector<8x1xf32>
    %111 = vector.broadcast %110 : vector<8x1xf32> to vector<8x8xf32>
    %112 = arith.mulf %107, %111 : vector<8x8xf32>
    %cst_48 = arith.constant dense<0.000000e+00> : vector<8x8xf32>
    %113 = tpu.matmul %112, %91, %cst_48 {dimension_numbers = #tpu.dot_dimension_numbers<[1], [0], [0], [1], [0, 0, 1, 1], [], []>} : vector<8x8xf32>, vector<8x8xf32>, vector<8x8xf32> -> vector<8x8xf32>
    %114 = tpu.concatenate %29, %57, %85, %113 in 1 : vector<8x8xf32>, vector<8x8xf32>, vector<8x8xf32>, vector<8x8xf32> -> vector<8x32xf32>
    %c0_49 = arith.constant 0 : index
    %c0_50 = arith.constant 0 : index
    %c0_51 = arith.constant 0 : index
    %115 = vector.load %arg6[%c0_49, %c0_50, %c0_51] : memref<1x8x32xf32, #tpu.memory_space<vmem>>, vector<1x8x32xf32>
    %116 = vector.shape_cast %115 : vector<1x8x32xf32> to vector<8x32xf32>
    %117 = vector.shape_cast %114 : vector<8x32xf32> to vector<1x8x32xf32>
    tpu.vector_store %arg6[%c0_49, %c0_50, %c0_51], %117 {strides = array<i32>} : memref<1x8x32xf32, #tpu.memory_space<vmem>>, vector<1x8x32xf32>,
    return
  }
  func.func @transform_0(%arg0: i32, %arg1: i32, %arg2: i32) -> (i32, i32, i32) {
    %c0_i32 = arith.constant 0 : i32
    %c0_i32_0 = arith.constant 0 : i32
    %c0_i32_1 = arith.constant 0 : i32
    return %arg0, %c0_i32, %c0_i32_0 : i32, i32, i32
  }
  func.func @transform_1(%arg0: i32, %arg1: i32, %arg2: i32) -> (i32, i32, i32) {
    %c0_i32 = arith.constant 0 : i32
    return %arg0, %arg2, %arg1 : i32, i32, i32
  }
  func.func @transform_2(%arg0: i32, %arg1: i32, %arg2: i32) -> (i32, i32, i32) {
    %c0_i32 = arith.constant 0 : i32
    %c0_i32_0 = arith.constant 0 : i32
    return %arg0, %c0_i32, %arg1 : i32, i32, i32
  }
  func.func @transform_3(%arg0: i32, %arg1: i32, %arg2: i32) -> (i32, i32, i32) {
    %c0_i32 = arith.constant 0 : i32
    return %arg0, %arg2, %arg1 : i32, i32, i32
  }
}

module attributes {stable_mosaic.version = 11 : i64} {
  func.func @kernel(%arg0: i32, %arg1: i32, %arg2: i32, %arg3: memref<16x32xf32, #tpu.memory_space<vmem>>, %arg4: memref<32x32xf32, #tpu.memory_space<vmem>>, %arg5: memref<1x32xf32, #tpu.memory_space<vmem>>, %arg6: memref<16x32xf32, #tpu.memory_space<vmem>>, %arg7: memref<16x32xf32, #tpu.memory_space<vmem>>) attributes {dimension_semantics = [#tpu.dimension_semantics<parallel>, #tpu.dimension_semantics<parallel>, #tpu.dimension_semantics<arbitrary>], iteration_bounds = array<i64: 1, 1, 1>, scalar_prefetch = 0 : i64, scratch_operands = 1 : i64, tpu.core_type = #tpu.core_type<tc>, window_params = [{transform_indices = @transform_0, window_bounds = array<i64: 16, 32>}, {transform_indices = @transform_1, window_bounds = array<i64: 32, 32>}, {transform_indices = @transform_2, window_bounds = array<i64: 1, 32>}, {transform_indices = @transform_3, window_bounds = array<i64: 16, 32>}]} {
    %c0_i32 = arith.constant 0 : i32
    %0 = arith.cmpi eq, %arg2, %c0_i32 : i32
    %1 = arith.extui %0 : i1 to i32
    %c0_i32_0 = arith.constant 0 : i32
    %2 = arith.cmpi ne, %1, %c0_i32_0 : i32
    scf.if %2 {
      %cst_10 = arith.constant 0.000000e+00 : f32
      %12 = vector.broadcast %cst_10 : f32 to vector<16x32xf32>
      %c0_11 = arith.constant 0 : index
      %c0_12 = arith.constant 0 : index
      %13 = vector.load %arg7[%c0_11, %c0_12] : memref<16x32xf32, #tpu.memory_space<vmem>>, vector<16x32xf32>
      tpu.vector_store %arg7[%c0_11, %c0_12], %12 {strides = array<i32>} : memref<16x32xf32, #tpu.memory_space<vmem>>, vector<16x32xf32>,
    } else {
    }
    %c0 = arith.constant 0 : index
    %c0_1 = arith.constant 0 : index
    %3 = vector.load %arg7[%c0, %c0_1] : memref<16x32xf32, #tpu.memory_space<vmem>>, vector<16x32xf32>
    %c0_2 = arith.constant 0 : index
    %c0_3 = arith.constant 0 : index
    %4 = vector.load %arg3[%c0_2, %c0_3] : memref<16x32xf32, #tpu.memory_space<vmem>>, vector<16x32xf32>
    %c0_4 = arith.constant 0 : index
    %c0_5 = arith.constant 0 : index
    %5 = vector.load %arg4[%c0_4, %c0_5] : memref<32x32xf32, #tpu.memory_space<vmem>>, vector<32x32xf32>
    %cst = arith.constant dense<0.000000e+00> : vector<16x32xf32>
    %6 = tpu.matmul %4, %5, %cst {dimension_numbers = #tpu.dot_dimension_numbers<[1], [0], [0], [1], [0, 0, 1, 1], [], []>} : vector<16x32xf32>, vector<32x32xf32>, vector<16x32xf32> -> vector<16x32xf32>
    %7 = arith.addf %3, %6 : vector<16x32xf32>
    %c0_6 = arith.constant 0 : index
    %c0_7 = arith.constant 0 : index
    %8 = vector.load %arg7[%c0_6, %c0_7] : memref<16x32xf32, #tpu.memory_space<vmem>>, vector<16x32xf32>
    tpu.vector_store %arg7[%c0_6, %c0_7], %7 {strides = array<i32>} : memref<16x32xf32, #tpu.memory_space<vmem>>, vector<16x32xf32>,
    %c0_i32_8 = arith.constant 0 : i32
    %9 = arith.cmpi eq, %arg2, %c0_i32_8 : i32
    %10 = arith.extui %9 : i1 to i32
    %c0_i32_9 = arith.constant 0 : i32
    %11 = arith.cmpi ne, %10, %c0_i32_9 : i32
    scf.if %11 {
      %c0_10 = arith.constant 0 : index
      %c0_11 = arith.constant 0 : index
      %12 = vector.load %arg7[%c0_10, %c0_11] : memref<16x32xf32, #tpu.memory_space<vmem>>, vector<16x32xf32>
      %c0_12 = arith.constant 0 : index
      %c0_13 = arith.constant 0 : index
      %13 = vector.load %arg5[%c0_12, %c0_13] : memref<1x32xf32, #tpu.memory_space<vmem>>, vector<1x32xf32>
      %14 = vector.broadcast %13 : vector<1x32xf32> to vector<16x32xf32>
      %15 = arith.addf %12, %14 : vector<16x32xf32>
      %c0_14 = arith.constant 0 : index
      %c0_15 = arith.constant 0 : index
      %16 = vector.load %arg6[%c0_14, %c0_15] : memref<16x32xf32, #tpu.memory_space<vmem>>, vector<16x32xf32>
      tpu.vector_store %arg6[%c0_14, %c0_15], %15 {strides = array<i32>} : memref<16x32xf32, #tpu.memory_space<vmem>>, vector<16x32xf32>,
    } else {
    }
    return
  }
  func.func @transform_0(%arg0: i32, %arg1: i32, %arg2: i32) -> (i32, i32) {
    %c0_i32 = arith.constant 0 : i32
    return %arg0, %arg2 : i32, i32
  }
  func.func @transform_1(%arg0: i32, %arg1: i32, %arg2: i32) -> (i32, i32) {
    %c0_i32 = arith.constant 0 : i32
    return %arg2, %arg1 : i32, i32
  }
  func.func @transform_2(%arg0: i32, %arg1: i32, %arg2: i32) -> (i32, i32) {
    %c0_i32 = arith.constant 0 : i32
    %c0_i32_0 = arith.constant 0 : i32
    return %c0_i32, %arg1 : i32, i32
  }
  func.func @transform_3(%arg0: i32, %arg1: i32, %arg2: i32) -> (i32, i32) {
    %c0_i32 = arith.constant 0 : i32
    return %arg0, %arg1 : i32, i32
  }
}

module attributes {stable_mosaic.version = 11 : i64} {
  func.func @_ln_res_kernel(%arg0: i32, %arg1: memref<16x32xf32, #tpu.memory_space<vmem>>, %arg2: memref<16x32xf32, #tpu.memory_space<vmem>>, %arg3: memref<1x32xf32, #tpu.memory_space<vmem>>, %arg4: memref<1x32xf32, #tpu.memory_space<vmem>>, %arg5: memref<16x32xf32, #tpu.memory_space<vmem>>) attributes {dimension_semantics = [#tpu.dimension_semantics<parallel>], iteration_bounds = array<i64: 1>, scalar_prefetch = 0 : i64, scratch_operands = 0 : i64, tpu.core_type = #tpu.core_type<tc>, window_params = [{transform_indices = @transform_0, window_bounds = array<i64: 16, 32>}, {transform_indices = @transform_1, window_bounds = array<i64: 16, 32>}, {pipeline_mode = #tpu.pipeline_mode<synchronous>, transform_indices = @transform_2, window_bounds = array<i64: 1, 32>}, {pipeline_mode = #tpu.pipeline_mode<synchronous>, transform_indices = @transform_3, window_bounds = array<i64: 1, 32>}, {transform_indices = @transform_4, window_bounds = array<i64: 16, 32>}]} {
    %c0 = arith.constant 0 : index
    %c0_0 = arith.constant 0 : index
    %0 = vector.load %arg1[%c0, %c0_0] : memref<16x32xf32, #tpu.memory_space<vmem>>, vector<16x32xf32>
    %c0_1 = arith.constant 0 : index
    %c0_2 = arith.constant 0 : index
    %1 = vector.load %arg2[%c0_1, %c0_2] : memref<16x32xf32, #tpu.memory_space<vmem>>, vector<16x32xf32>
    %2 = arith.addf %0, %1 : vector<16x32xf32>
    %c0_3 = arith.constant 0 : index
    %c0_4 = arith.constant 0 : index
    %3 = vector.load %arg3[%c0_3, %c0_4] : memref<1x32xf32, #tpu.memory_space<vmem>>, vector<1x32xf32>
    %c0_5 = arith.constant 0 : index
    %c0_6 = arith.constant 0 : index
    %4 = vector.load %arg4[%c0_5, %c0_6] : memref<1x32xf32, #tpu.memory_space<vmem>>, vector<1x32xf32>
    %cst = arith.constant dense<0.000000e+00> : vector<16xf32>
    %5 = vector.multi_reduction <add>, %2, %cst [1] : vector<16x32xf32> to vector<16xf32>
    %6 = vector.shape_cast %5 : vector<16xf32> to vector<16x1xf32>
    %cst_7 = arith.constant 3.200000e+01 : f32
    %7 = vector.broadcast %cst_7 : f32 to vector<16x1xf32>
    %8 = arith.divf %6, %7 : vector<16x1xf32>
    %9 = vector.broadcast %8 : vector<16x1xf32> to vector<16x32xf32>
    %10 = arith.subf %2, %9 : vector<16x32xf32>
    %11 = arith.mulf %10, %10 : vector<16x32xf32>
    %cst_8 = arith.constant dense<0.000000e+00> : vector<16xf32>
    %12 = vector.multi_reduction <add>, %11, %cst_8 [1] : vector<16x32xf32> to vector<16xf32>
    %13 = vector.shape_cast %12 : vector<16xf32> to vector<16x1xf32>
    %cst_9 = arith.constant 3.200000e+01 : f32
    %14 = vector.broadcast %cst_9 : f32 to vector<16x1xf32>
    %15 = arith.divf %13, %14 : vector<16x1xf32>
    %16 = vector.broadcast %8 : vector<16x1xf32> to vector<16x32xf32>
    %17 = arith.subf %2, %16 : vector<16x32xf32>
    %cst_10 = arith.constant 9.99999974E-6 : f32
    %18 = vector.broadcast %cst_10 : f32 to vector<16x1xf32>
    %19 = arith.addf %15, %18 : vector<16x1xf32>
    %20 = math.rsqrt %19 : vector<16x1xf32>
    %21 = vector.broadcast %20 : vector<16x1xf32> to vector<16x32xf32>
    %22 = arith.mulf %17, %21 : vector<16x32xf32>
    %23 = vector.broadcast %3 : vector<1x32xf32> to vector<16x32xf32>
    %24 = arith.mulf %22, %23 : vector<16x32xf32>
    %25 = vector.broadcast %4 : vector<1x32xf32> to vector<16x32xf32>
    %26 = arith.addf %24, %25 : vector<16x32xf32>
    %c0_11 = arith.constant 0 : index
    %c0_12 = arith.constant 0 : index
    %27 = vector.load %arg5[%c0_11, %c0_12] : memref<16x32xf32, #tpu.memory_space<vmem>>, vector<16x32xf32>
    tpu.vector_store %arg5[%c0_11, %c0_12], %26 {strides = array<i32>} : memref<16x32xf32, #tpu.memory_space<vmem>>, vector<16x32xf32>,
    return
  }
  func.func @transform_0(%arg0: i32) -> (i32, i32) {
    %c0_i32 = arith.constant 0 : i32
    %c0_i32_0 = arith.constant 0 : i32
    return %arg0, %c0_i32 : i32, i32
  }
  func.func @transform_1(%arg0: i32) -> (i32, i32) {
    %c0_i32 = arith.constant 0 : i32
    %c0_i32_0 = arith.constant 0 : i32
    return %arg0, %c0_i32 : i32, i32
  }
  func.func @transform_2(%arg0: i32) -> (i32, i32) {
    %c0_i32 = arith.constant 0 : i32
    %c0_i32_0 = arith.constant 0 : i32
    %c0_i32_1 = arith.constant 0 : i32
    return %c0_i32, %c0_i32_0 : i32, i32
  }
  func.func @transform_3(%arg0: i32) -> (i32, i32) {
    %c0_i32 = arith.constant 0 : i32
    %c0_i32_0 = arith.constant 0 : i32
    %c0_i32_1 = arith.constant 0 : i32
    return %c0_i32, %c0_i32_0 : i32, i32
  }
  func.func @transform_4(%arg0: i32) -> (i32, i32) {
    %c0_i32 = arith.constant 0 : i32
    %c0_i32_0 = arith.constant 0 : i32
    return %arg0, %c0_i32 : i32, i32
  }
}

module attributes {stable_mosaic.version = 11 : i64} {
  func.func @kernel(%arg0: i32, %arg1: i32, %arg2: i32, %arg3: memref<1x1x8xf32, #tpu.memory_space<vmem>>, %arg4: memref<1x8x96xf32, #tpu.memory_space<vmem>>, %arg5: memref<1x8x96xf32, #tpu.memory_space<vmem>>, %arg6: memref<1x8x32xf32, #tpu.memory_space<vmem>>) attributes {dimension_semantics = [#tpu.dimension_semantics<parallel>, #tpu.dimension_semantics<parallel>, #tpu.dimension_semantics<parallel>], iteration_bounds = array<i64: 2, 1, 1>, scalar_prefetch = 0 : i64, scratch_operands = 0 : i64, tpu.core_type = #tpu.core_type<tc>, window_params = [{transform_indices = @transform_0, window_bounds = array<i64: 1, 1, 8>}, {transform_indices = @transform_1, window_bounds = array<i64: 1, 8, 96>}, {transform_indices = @transform_2, window_bounds = array<i64: 1, 8, 96>}, {transform_indices = @transform_3, window_bounds = array<i64: 1, 8, 32>}]} {
    %c0 = arith.constant 0 : index
    %c0_0 = arith.constant 0 : index
    %c0_1 = arith.constant 0 : index
    %0 = vector.load %arg3[%c0, %c0_0, %c0_1] : memref<1x1x8xf32, #tpu.memory_space<vmem>>, vector<1x1x8xf32>
    %1 = vector.shape_cast %0 : vector<1x1x8xf32> to vector<1x8xf32>
    %c0_2 = arith.constant 0 : index
    %c0_3 = arith.constant 0 : index
    %c0_4 = arith.constant 0 : index
    %2 = vector.load %arg4[%c0_2, %c0_3, %c0_4] : memref<1x8x96xf32, #tpu.memory_space<vmem>>, vector<1x8x8xf32>
    %3 = vector.shape_cast %2 : vector<1x8x8xf32> to vector<8x8xf32>
    %c0_5 = arith.constant 0 : index
    %c0_6 = arith.constant 0 : index
    %c8 = arith.constant 8 : index
    %4 = vector.load %arg5[%c0_5, %c0_6, %c8] : memref<1x8x96xf32, #tpu.memory_space<vmem>>, vector<1x8x8xf32>
    %5 = vector.shape_cast %4 : vector<1x8x8xf32> to vector<8x8xf32>
    %c0_7 = arith.constant 0 : index
    %c0_8 = arith.constant 0 : index
    %c16 = arith.constant 16 : index
    %6 = vector.load %arg5[%c0_7, %c0_8, %c16] : memref<1x8x96xf32, #tpu.memory_space<vmem>>, vector<1x8x8xf32>
    %7 = vector.shape_cast %6 : vector<1x8x8xf32> to vector<8x8xf32>
    %cst = arith.constant dense<0.000000e+00> : vector<8x8xf32>
    %8 = tpu.matmul %3, %5, %cst {dimension_numbers = #tpu.dot_dimension_numbers<[1], [1], [0], [0], [0, 0, 1, 0], [], []>} : vector<8x8xf32>, vector<8x8xf32>, vector<8x8xf32> -> vector<8x8xf32>
    %9 = vector.broadcast %1 : vector<1x8xf32> to vector<8x8xf32>
    %10 = arith.addf %8, %9 : vector<8x8xf32>
    %cst_9 = arith.constant dense<0xFF800000> : vector<8xf32>
    %11 = vector.multi_reduction <maximumf>, %10, %cst_9 [1] : vector<8x8xf32> to vector<8xf32>
    %12 = vector.shape_cast %11 : vector<8xf32> to vector<8x1xf32>
    %13 = vector.broadcast %12 : vector<8x1xf32> to vector<8x8xf32>
    %14 = arith.subf %10, %13 : vector<8x8xf32>
    %15 = math.exp %14 : vector<8x8xf32>
    %cst_10 = arith.constant dense<0.000000e+00> : vector<8xf32>
    %16 = vector.multi_reduction <add>, %15, %cst_10 [1] : vector<8x8xf32> to vector<8xf32>
    %17 = vector.shape_cast %16 : vector<8xf32> to vector<8x1xf32>
    %18 = tpu.reciprocal %17 {approx = true} : vector<8x1xf32> -> vector<8x1xf32>
    %19 = vector.broadcast %18 : vector<8x1xf32> to vector<8x8xf32>
    %20 = arith.mulf %15, %19 : vector<8x8xf32>
    %cst_11 = arith.constant dense<0.000000e+00> : vector<8x8xf32>
    %21 = tpu.matmul %20, %7, %cst_11 {dimension_numbers = #tpu.dot_dimension_numbers<[1], [0], [0], [1], [0, 0, 1, 1], [], []>} : vector<8x8xf32>, vector<8x8xf32>, vector<8x8xf32> -> vector<8x8xf32>
    %c0_12 = arith.constant 0 : index
    %c0_13 = arith.constant 0 : index
    %c24 = arith.constant 24 : index
    %22 = vector.load %arg4[%c0_12, %c0_13, %c24] : memref<1x8x96xf32, #tpu.memory_space<vmem>>, vector<1x8x8xf32>
    %23 = vector.shape_cast %22 : vector<1x8x8xf32> to vector<8x8xf32>
    %c0_14 = arith.constant 0 : index
    %c0_15 = arith.constant 0 : index
    %c32 = arith.constant 32 : index
    %24 = vector.load %arg5[%c0_14, %c0_15, %c32] : memref<1x8x96xf32, #tpu.memory_space<vmem>>, vector<1x8x8xf32>
    %25 = vector.shape_cast %24 : vector<1x8x8xf32> to vector<8x8xf32>
    %c0_16 = arith.constant 0 : index
    %c0_17 = arith.constant 0 : index
    %c40 = arith.constant 40 : index
    %26 = vector.load %arg5[%c0_16, %c0_17, %c40] : memref<1x8x96xf32, #tpu.memory_space<vmem>>, vector<1x8x8xf32>
    %27 = vector.shape_cast %26 : vector<1x8x8xf32> to vector<8x8xf32>
    %cst_18 = arith.constant dense<0.000000e+00> : vector<8x8xf32>
    %28 = tpu.matmul %23, %25, %cst_18 {dimension_numbers = #tpu.dot_dimension_numbers<[1], [1], [0], [0], [0, 0, 1, 0], [], []>} : vector<8x8xf32>, vector<8x8xf32>, vector<8x8xf32> -> vector<8x8xf32>
    %29 = vector.broadcast %1 : vector<1x8xf32> to vector<8x8xf32>
    %30 = arith.addf %28, %29 : vector<8x8xf32>
    %cst_19 = arith.constant dense<0xFF800000> : vector<8xf32>
    %31 = vector.multi_reduction <maximumf>, %30, %cst_19 [1] : vector<8x8xf32> to vector<8xf32>
    %32 = vector.shape_cast %31 : vector<8xf32> to vector<8x1xf32>
    %33 = vector.broadcast %32 : vector<8x1xf32> to vector<8x8xf32>
    %34 = arith.subf %30, %33 : vector<8x8xf32>
    %35 = math.exp %34 : vector<8x8xf32>
    %cst_20 = arith.constant dense<0.000000e+00> : vector<8xf32>
    %36 = vector.multi_reduction <add>, %35, %cst_20 [1] : vector<8x8xf32> to vector<8xf32>
    %37 = vector.shape_cast %36 : vector<8xf32> to vector<8x1xf32>
    %38 = tpu.reciprocal %37 {approx = true} : vector<8x1xf32> -> vector<8x1xf32>
    %39 = vector.broadcast %38 : vector<8x1xf32> to vector<8x8xf32>
    %40 = arith.mulf %35, %39 : vector<8x8xf32>
    %cst_21 = arith.constant dense<0.000000e+00> : vector<8x8xf32>
    %41 = tpu.matmul %40, %27, %cst_21 {dimension_numbers = #tpu.dot_dimension_numbers<[1], [0], [0], [1], [0, 0, 1, 1], [], []>} : vector<8x8xf32>, vector<8x8xf32>, vector<8x8xf32> -> vector<8x8xf32>
    %c0_22 = arith.constant 0 : index
    %c0_23 = arith.constant 0 : index
    %c48 = arith.constant 48 : index
    %42 = vector.load %arg4[%c0_22, %c0_23, %c48] : memref<1x8x96xf32, #tpu.memory_space<vmem>>, vector<1x8x8xf32>
    %43 = vector.shape_cast %42 : vector<1x8x8xf32> to vector<8x8xf32>
    %c0_24 = arith.constant 0 : index
    %c0_25 = arith.constant 0 : index
    %c56 = arith.constant 56 : index
    %44 = vector.load %arg5[%c0_24, %c0_25, %c56] : memref<1x8x96xf32, #tpu.memory_space<vmem>>, vector<1x8x8xf32>
    %45 = vector.shape_cast %44 : vector<1x8x8xf32> to vector<8x8xf32>
    %c0_26 = arith.constant 0 : index
    %c0_27 = arith.constant 0 : index
    %c64 = arith.constant 64 : index
    %46 = vector.load %arg5[%c0_26, %c0_27, %c64] : memref<1x8x96xf32, #tpu.memory_space<vmem>>, vector<1x8x8xf32>
    %47 = vector.shape_cast %46 : vector<1x8x8xf32> to vector<8x8xf32>
    %cst_28 = arith.constant dense<0.000000e+00> : vector<8x8xf32>
    %48 = tpu.matmul %43, %45, %cst_28 {dimension_numbers = #tpu.dot_dimension_numbers<[1], [1], [0], [0], [0, 0, 1, 0], [], []>} : vector<8x8xf32>, vector<8x8xf32>, vector<8x8xf32> -> vector<8x8xf32>
    %49 = vector.broadcast %1 : vector<1x8xf32> to vector<8x8xf32>
    %50 = arith.addf %48, %49 : vector<8x8xf32>
    %cst_29 = arith.constant dense<0xFF800000> : vector<8xf32>
    %51 = vector.multi_reduction <maximumf>, %50, %cst_29 [1] : vector<8x8xf32> to vector<8xf32>
    %52 = vector.shape_cast %51 : vector<8xf32> to vector<8x1xf32>
    %53 = vector.broadcast %52 : vector<8x1xf32> to vector<8x8xf32>
    %54 = arith.subf %50, %53 : vector<8x8xf32>
    %55 = math.exp %54 : vector<8x8xf32>
    %cst_30 = arith.constant dense<0.000000e+00> : vector<8xf32>
    %56 = vector.multi_reduction <add>, %55, %cst_30 [1] : vector<8x8xf32> to vector<8xf32>
    %57 = vector.shape_cast %56 : vector<8xf32> to vector<8x1xf32>
    %58 = tpu.reciprocal %57 {approx = true} : vector<8x1xf32> -> vector<8x1xf32>
    %59 = vector.broadcast %58 : vector<8x1xf32> to vector<8x8xf32>
    %60 = arith.mulf %55, %59 : vector<8x8xf32>
    %cst_31 = arith.constant dense<0.000000e+00> : vector<8x8xf32>
    %61 = tpu.matmul %60, %47, %cst_31 {dimension_numbers = #tpu.dot_dimension_numbers<[1], [0], [0], [1], [0, 0, 1, 1], [], []>} : vector<8x8xf32>, vector<8x8xf32>, vector<8x8xf32> -> vector<8x8xf32>
    %c0_32 = arith.constant 0 : index
    %c0_33 = arith.constant 0 : index
    %c72 = arith.constant 72 : index
    %62 = vector.load %arg4[%c0_32, %c0_33, %c72] : memref<1x8x96xf32, #tpu.memory_space<vmem>>, vector<1x8x8xf32>
    %63 = vector.shape_cast %62 : vector<1x8x8xf32> to vector<8x8xf32>
    %c0_34 = arith.constant 0 : index
    %c0_35 = arith.constant 0 : index
    %c80 = arith.constant 80 : index
    %64 = vector.load %arg5[%c0_34, %c0_35, %c80] : memref<1x8x96xf32, #tpu.memory_space<vmem>>, vector<1x8x8xf32>
    %65 = vector.shape_cast %64 : vector<1x8x8xf32> to vector<8x8xf32>
    %c0_36 = arith.constant 0 : index
    %c0_37 = arith.constant 0 : index
    %c88 = arith.constant 88 : index
    %66 = vector.load %arg5[%c0_36, %c0_37, %c88] : memref<1x8x96xf32, #tpu.memory_space<vmem>>, vector<1x8x8xf32>
    %67 = vector.shape_cast %66 : vector<1x8x8xf32> to vector<8x8xf32>
    %cst_38 = arith.constant dense<0.000000e+00> : vector<8x8xf32>
    %68 = tpu.matmul %63, %65, %cst_38 {dimension_numbers = #tpu.dot_dimension_numbers<[1], [1], [0], [0], [0, 0, 1, 0], [], []>} : vector<8x8xf32>, vector<8x8xf32>, vector<8x8xf32> -> vector<8x8xf32>
    %69 = vector.broadcast %1 : vector<1x8xf32> to vector<8x8xf32>
    %70 = arith.addf %68, %69 : vector<8x8xf32>
    %cst_39 = arith.constant dense<0xFF800000> : vector<8xf32>
    %71 = vector.multi_reduction <maximumf>, %70, %cst_39 [1] : vector<8x8xf32> to vector<8xf32>
    %72 = vector.shape_cast %71 : vector<8xf32> to vector<8x1xf32>
    %73 = vector.broadcast %72 : vector<8x1xf32> to vector<8x8xf32>
    %74 = arith.subf %70, %73 : vector<8x8xf32>
    %75 = math.exp %74 : vector<8x8xf32>
    %cst_40 = arith.constant dense<0.000000e+00> : vector<8xf32>
    %76 = vector.multi_reduction <add>, %75, %cst_40 [1] : vector<8x8xf32> to vector<8xf32>
    %77 = vector.shape_cast %76 : vector<8xf32> to vector<8x1xf32>
    %78 = tpu.reciprocal %77 {approx = true} : vector<8x1xf32> -> vector<8x1xf32>
    %79 = vector.broadcast %78 : vector<8x1xf32> to vector<8x8xf32>
    %80 = arith.mulf %75, %79 : vector<8x8xf32>
    %cst_41 = arith.constant dense<0.000000e+00> : vector<8x8xf32>
    %81 = tpu.matmul %80, %67, %cst_41 {dimension_numbers = #tpu.dot_dimension_numbers<[1], [0], [0], [1], [0, 0, 1, 1], [], []>} : vector<8x8xf32>, vector<8x8xf32>, vector<8x8xf32> -> vector<8x8xf32>
    %82 = tpu.concatenate %21, %41, %61, %81 in 1 : vector<8x8xf32>, vector<8x8xf32>, vector<8x8xf32>, vector<8x8xf32> -> vector<8x32xf32>
    %c0_42 = arith.constant 0 : index
    %c0_43 = arith.constant 0 : index
    %c0_44 = arith.constant 0 : index
    %83 = vector.load %arg6[%c0_42, %c0_43, %c0_44] : memref<1x8x32xf32, #tpu.memory_space<vmem>>, vector<1x8x32xf32>
    %84 = vector.shape_cast %83 : vector<1x8x32xf32> to vector<8x32xf32>
    %85 = vector.shape_cast %82 : vector<8x32xf32> to vector<1x8x32xf32>
    tpu.vector_store %arg6[%c0_42, %c0_43, %c0_44], %85 {strides = array<i32>} : memref<1x8x32xf32, #tpu.memory_space<vmem>>, vector<1x8x32xf32>,
    return
  }
  func.func @transform_0(%arg0: i32, %arg1: i32, %arg2: i32) -> (i32, i32, i32) {
    %c0_i32 = arith.constant 0 : i32
    %c0_i32_0 = arith.constant 0 : i32
    %c0_i32_1 = arith.constant 0 : i32
    return %arg0, %c0_i32, %c0_i32_0 : i32, i32, i32
  }
  func.func @transform_1(%arg0: i32, %arg1: i32, %arg2: i32) -> (i32, i32, i32) {
    %c0_i32 = arith.constant 0 : i32
    return %arg0, %arg2, %arg1 : i32, i32, i32
  }
  func.func @transform_2(%arg0: i32, %arg1: i32, %arg2: i32) -> (i32, i32, i32) {
    %c0_i32 = arith.constant 0 : i32
    %c0_i32_0 = arith.constant 0 : i32
    return %arg0, %c0_i32, %arg1 : i32, i32, i32
  }
  func.func @transform_3(%arg0: i32, %arg1: i32, %arg2: i32) -> (i32, i32, i32) {
    %c0_i32 = arith.constant 0 : i32
    return %arg0, %arg2, %arg1 : i32, i32, i32
  }
}

module attributes {stable_mosaic.version = 11 : i64} {
  func.func @kernel(%arg0: i32, %arg1: i32, %arg2: i32, %arg3: memref<16x32xf32, #tpu.memory_space<vmem>>, %arg4: memref<32x64xf32, #tpu.memory_space<vmem>>, %arg5: memref<1x64xf32, #tpu.memory_space<vmem>>, %arg6: memref<16x64xf32, #tpu.memory_space<vmem>>, %arg7: memref<16x64xf32, #tpu.memory_space<vmem>>) attributes {dimension_semantics = [#tpu.dimension_semantics<parallel>, #tpu.dimension_semantics<parallel>, #tpu.dimension_semantics<arbitrary>], iteration_bounds = array<i64: 1, 1, 1>, scalar_prefetch = 0 : i64, scratch_operands = 1 : i64, tpu.core_type = #tpu.core_type<tc>, window_params = [{transform_indices = @transform_0, window_bounds = array<i64: 16, 32>}, {transform_indices = @transform_1, window_bounds = array<i64: 32, 64>}, {transform_indices = @transform_2, window_bounds = array<i64: 1, 64>}, {transform_indices = @transform_3, window_bounds = array<i64: 16, 64>}]} {
    %c0_i32 = arith.constant 0 : i32
    %0 = arith.cmpi eq, %arg2, %c0_i32 : i32
    %1 = arith.extui %0 : i1 to i32
    %c0_i32_0 = arith.constant 0 : i32
    %2 = arith.cmpi ne, %1, %c0_i32_0 : i32
    scf.if %2 {
      %cst_10 = arith.constant 0.000000e+00 : f32
      %12 = vector.broadcast %cst_10 : f32 to vector<16x64xf32>
      %c0_11 = arith.constant 0 : index
      %c0_12 = arith.constant 0 : index
      %13 = vector.load %arg7[%c0_11, %c0_12] : memref<16x64xf32, #tpu.memory_space<vmem>>, vector<16x64xf32>
      tpu.vector_store %arg7[%c0_11, %c0_12], %12 {strides = array<i32>} : memref<16x64xf32, #tpu.memory_space<vmem>>, vector<16x64xf32>,
    } else {
    }
    %c0 = arith.constant 0 : index
    %c0_1 = arith.constant 0 : index
    %3 = vector.load %arg7[%c0, %c0_1] : memref<16x64xf32, #tpu.memory_space<vmem>>, vector<16x64xf32>
    %c0_2 = arith.constant 0 : index
    %c0_3 = arith.constant 0 : index
    %4 = vector.load %arg3[%c0_2, %c0_3] : memref<16x32xf32, #tpu.memory_space<vmem>>, vector<16x32xf32>
    %c0_4 = arith.constant 0 : index
    %c0_5 = arith.constant 0 : index
    %5 = vector.load %arg4[%c0_4, %c0_5] : memref<32x64xf32, #tpu.memory_space<vmem>>, vector<32x64xf32>
    %cst = arith.constant dense<0.000000e+00> : vector<16x64xf32>
    %6 = tpu.matmul %4, %5, %cst {dimension_numbers = #tpu.dot_dimension_numbers<[1], [0], [0], [1], [0, 0, 1, 1], [], []>} : vector<16x32xf32>, vector<32x64xf32>, vector<16x64xf32> -> vector<16x64xf32>
    %7 = arith.addf %3, %6 : vector<16x64xf32>
    %c0_6 = arith.constant 0 : index
    %c0_7 = arith.constant 0 : index
    %8 = vector.load %arg7[%c0_6, %c0_7] : memref<16x64xf32, #tpu.memory_space<vmem>>, vector<16x64xf32>
    tpu.vector_store %arg7[%c0_6, %c0_7], %7 {strides = array<i32>} : memref<16x64xf32, #tpu.memory_space<vmem>>, vector<16x64xf32>,
    %c0_i32_8 = arith.constant 0 : i32
    %9 = arith.cmpi eq, %arg2, %c0_i32_8 : i32
    %10 = arith.extui %9 : i1 to i32
    %c0_i32_9 = arith.constant 0 : i32
    %11 = arith.cmpi ne, %10, %c0_i32_9 : i32
    scf.if %11 {
      %c0_10 = arith.constant 0 : index
      %c0_11 = arith.constant 0 : index
      %12 = vector.load %arg7[%c0_10, %c0_11] : memref<16x64xf32, #tpu.memory_space<vmem>>, vector<16x64xf32>
      %c0_12 = arith.constant 0 : index
      %c0_13 = arith.constant 0 : index
      %13 = vector.load %arg5[%c0_12, %c0_13] : memref<1x64xf32, #tpu.memory_space<vmem>>, vector<1x64xf32>
      %14 = vector.broadcast %13 : vector<1x64xf32> to vector<16x64xf32>
      %15 = arith.addf %12, %14 : vector<16x64xf32>
      %cst_14 = arith.constant 5.000000e-01 : f32
      %16 = vector.broadcast %cst_14 : f32 to vector<16x64xf32>
      %17 = arith.mulf %16, %15 : vector<16x64xf32>
      %cst_15 = arith.constant 0.707106769 : f32
      %18 = vector.broadcast %cst_15 : f32 to vector<16x64xf32>
      %19 = arith.mulf %15, %18 : vector<16x64xf32>
      %20 = math.absf %19 : vector<16x64xf32>
      %cst_16 = arith.constant 0.327591091 : f32
      %21 = vector.broadcast %cst_16 : f32 to vector<16x64xf32>
      %22 = arith.mulf %21, %20 : vector<16x64xf32>
      %cst_17 = arith.constant 1.000000e+00 : f32
      %23 = vector.broadcast %cst_17 : f32 to vector<16x64xf32>
      %24 = arith.addf %23, %22 : vector<16x64xf32>
      %cst_18 = arith.constant 1.000000e+00 : f32
      %25 = vector.broadcast %cst_18 : f32 to vector<16x64xf32>
      %26 = arith.divf %25, %24 : vector<16x64xf32>
      %cst_19 = arith.constant 1.06140542 : f32
      %27 = vector.broadcast %cst_19 : f32 to vector<16x64xf32>
      %28 = arith.mulf %27, %26 : vector<16x64xf32>
      %cst_20 = arith.constant -1.45315206 : f32
      %29 = vector.broadcast %cst_20 : f32 to vector<16x64xf32>
      %30 = arith.addf %28, %29 : vector<16x64xf32>
      %31 = arith.mulf %30, %26 : vector<16x64xf32>
      %cst_21 = arith.constant 1.42141378 : f32
      %32 = vector.broadcast %cst_21 : f32 to vector<16x64xf32>
      %33 = arith.addf %31, %32 : vector<16x64xf32>
      %34 = arith.mulf %33, %26 : vector<16x64xf32>
      %cst_22 = arith.constant -0.284496725 : f32
      %35 = vector.broadcast %cst_22 : f32 to vector<16x64xf32>
      %36 = arith.addf %34, %35 : vector<16x64xf32>
      %37 = arith.mulf %36, %26 : vector<16x64xf32>
      %cst_23 = arith.constant 0.254829586 : f32
      %38 = vector.broadcast %cst_23 : f32 to vector<16x64xf32>
      %39 = arith.addf %37, %38 : vector<16x64xf32>
      %40 = arith.mulf %39, %26 : vector<16x64xf32>
      %cst_24 = arith.constant 0.000000e+00 : f32
      %41 = vector.broadcast %cst_24 : f32 to vector<16x64xf32>
      %42 = arith.subf %41, %20 : vector<16x64xf32>
      %43 = arith.mulf %42, %20 : vector<16x64xf32>
      %44 = math.exp %43 : vector<16x64xf32>
      %45 = arith.mulf %40, %44 : vector<16x64xf32>
      %cst_25 = arith.constant 1.000000e+00 : f32
      %46 = vector.broadcast %cst_25 : f32 to vector<16x64xf32>
      %47 = arith.subf %46, %45 : vector<16x64xf32>
      %cst_26 = arith.constant 0.000000e+00 : f32
      %48 = vector.broadcast %cst_26 : f32 to vector<16x64xf32>
      %49 = arith.cmpf olt, %19, %48 : vector<16x64xf32>
      %cst_27 = arith.constant 0.000000e+00 : f32
      %50 = vector.broadcast %cst_27 : f32 to vector<16x64xf32>
      %51 = arith.subf %50, %47 : vector<16x64xf32>
      %52 = arith.select %49, %51, %47 : vector<16x64xi1>, vector<16x64xf32>
      %cst_28 = arith.constant 1.000000e+00 : f32
      %53 = vector.broadcast %cst_28 : f32 to vector<16x64xf32>
      %54 = arith.addf %53, %52 : vector<16x64xf32>
      %55 = arith.mulf %17, %54 : vector<16x64xf32>
      %c0_29 = arith.constant 0 : index
      %c0_30 = arith.constant 0 : index
      %56 = vector.load %arg6[%c0_29, %c0_30] : memref<16x64xf32, #tpu.memory_space<vmem>>, vector<16x64xf32>
      tpu.vector_store %arg6[%c0_29, %c0_30], %55 {strides = array<i32>} : memref<16x64xf32, #tpu.memory_space<vmem>>, vector<16x64xf32>,
    } else {
    }
    return
  }
  func.func @transform_0(%arg0: i32, %arg1: i32, %arg2: i32) -> (i32, i32) {
    %c0_i32 = arith.constant 0 : i32
    return %arg0, %arg2 : i32, i32
  }
  func.func @transform_1(%arg0: i32, %arg1: i32, %arg2: i32) -> (i32, i32) {
    %c0_i32 = arith.constant 0 : i32
    return %arg2, %arg1 : i32, i32
  }
  func.func @transform_2(%arg0: i32, %arg1: i32, %arg2: i32) -> (i32, i32) {
    %c0_i32 = arith.constant 0 : i32
    %c0_i32_0 = arith.constant 0 : i32
    return %c0_i32, %arg1 : i32, i32
  }
  func.func @transform_3(%arg0: i32, %arg1: i32, %arg2: i32) -> (i32, i32) {
    %c0_i32 = arith.constant 0 : i32
    return %arg0, %arg1 : i32, i32
  }
}

module attributes {stable_mosaic.version = 11 : i64} {
  func.func @kernel(%arg0: i32, %arg1: i32, %arg2: i32, %arg3: memref<16x64xf32, #tpu.memory_space<vmem>>, %arg4: memref<64x32xf32, #tpu.memory_space<vmem>>, %arg5: memref<1x32xf32, #tpu.memory_space<vmem>>, %arg6: memref<16x32xf32, #tpu.memory_space<vmem>>, %arg7: memref<16x32xf32, #tpu.memory_space<vmem>>) attributes {dimension_semantics = [#tpu.dimension_semantics<parallel>, #tpu.dimension_semantics<parallel>, #tpu.dimension_semantics<arbitrary>], iteration_bounds = array<i64: 1, 1, 1>, scalar_prefetch = 0 : i64, scratch_operands = 1 : i64, tpu.core_type = #tpu.core_type<tc>, window_params = [{transform_indices = @transform_0, window_bounds = array<i64: 16, 64>}, {transform_indices = @transform_1, window_bounds = array<i64: 64, 32>}, {transform_indices = @transform_2, window_bounds = array<i64: 1, 32>}, {transform_indices = @transform_3, window_bounds = array<i64: 16, 32>}]} {
    %c0_i32 = arith.constant 0 : i32
    %0 = arith.cmpi eq, %arg2, %c0_i32 : i32
    %1 = arith.extui %0 : i1 to i32
    %c0_i32_0 = arith.constant 0 : i32
    %2 = arith.cmpi ne, %1, %c0_i32_0 : i32
    scf.if %2 {
      %cst_10 = arith.constant 0.000000e+00 : f32
      %12 = vector.broadcast %cst_10 : f32 to vector<16x32xf32>
      %c0_11 = arith.constant 0 : index
      %c0_12 = arith.constant 0 : index
      %13 = vector.load %arg7[%c0_11, %c0_12] : memref<16x32xf32, #tpu.memory_space<vmem>>, vector<16x32xf32>
      tpu.vector_store %arg7[%c0_11, %c0_12], %12 {strides = array<i32>} : memref<16x32xf32, #tpu.memory_space<vmem>>, vector<16x32xf32>,
    } else {
    }
    %c0 = arith.constant 0 : index
    %c0_1 = arith.constant 0 : index
    %3 = vector.load %arg7[%c0, %c0_1] : memref<16x32xf32, #tpu.memory_space<vmem>>, vector<16x32xf32>
    %c0_2 = arith.constant 0 : index
    %c0_3 = arith.constant 0 : index
    %4 = vector.load %arg3[%c0_2, %c0_3] : memref<16x64xf32, #tpu.memory_space<vmem>>, vector<16x64xf32>
    %c0_4 = arith.constant 0 : index
    %c0_5 = arith.constant 0 : index
    %5 = vector.load %arg4[%c0_4, %c0_5] : memref<64x32xf32, #tpu.memory_space<vmem>>, vector<64x32xf32>
    %cst = arith.constant dense<0.000000e+00> : vector<16x32xf32>
    %6 = tpu.matmul %4, %5, %cst {dimension_numbers = #tpu.dot_dimension_numbers<[1], [0], [0], [1], [0, 0, 1, 1], [], []>} : vector<16x64xf32>, vector<64x32xf32>, vector<16x32xf32> -> vector<16x32xf32>
    %7 = arith.addf %3, %6 : vector<16x32xf32>
    %c0_6 = arith.constant 0 : index
    %c0_7 = arith.constant 0 : index
    %8 = vector.load %arg7[%c0_6, %c0_7] : memref<16x32xf32, #tpu.memory_space<vmem>>, vector<16x32xf32>
    tpu.vector_store %arg7[%c0_6, %c0_7], %7 {strides = array<i32>} : memref<16x32xf32, #tpu.memory_space<vmem>>, vector<16x32xf32>,
    %c0_i32_8 = arith.constant 0 : i32
    %9 = arith.cmpi eq, %arg2, %c0_i32_8 : i32
    %10 = arith.extui %9 : i1 to i32
    %c0_i32_9 = arith.constant 0 : i32
    %11 = arith.cmpi ne, %10, %c0_i32_9 : i32
    scf.if %11 {
      %c0_10 = arith.constant 0 : index
      %c0_11 = arith.constant 0 : index
      %12 = vector.load %arg7[%c0_10, %c0_11] : memref<16x32xf32, #tpu.memory_space<vmem>>, vector<16x32xf32>
      %c0_12 = arith.constant 0 : index
      %c0_13 = arith.constant 0 : index
      %13 = vector.load %arg5[%c0_12, %c0_13] : memref<1x32xf32, #tpu.memory_space<vmem>>, vector<1x32xf32>
      %14 = vector.broadcast %13 : vector<1x32xf32> to vector<16x32xf32>
      %15 = arith.addf %12, %14 : vector<16x32xf32>
      %c0_14 = arith.constant 0 : index
      %c0_15 = arith.constant 0 : index
      %16 = vector.load %arg6[%c0_14, %c0_15] : memref<16x32xf32, #tpu.memory_space<vmem>>, vector<16x32xf32>
      tpu.vector_store %arg6[%c0_14, %c0_15], %15 {strides = array<i32>} : memref<16x32xf32, #tpu.memory_space<vmem>>, vector<16x32xf32>,
    } else {
    }
    return
  }
  func.func @transform_0(%arg0: i32, %arg1: i32, %arg2: i32) -> (i32, i32) {
    %c0_i32 = arith.constant 0 : i32
    return %arg0, %arg2 : i32, i32
  }
  func.func @transform_1(%arg0: i32, %arg1: i32, %arg2: i32) -> (i32, i32) {
    %c0_i32 = arith.constant 0 : i32
    return %arg2, %arg1 : i32, i32
  }
  func.func @transform_2(%arg0: i32, %arg1: i32, %arg2: i32) -> (i32, i32) {
    %c0_i32 = arith.constant 0 : i32
    %c0_i32_0 = arith.constant 0 : i32
    return %c0_i32, %arg1 : i32, i32
  }
  func.func @transform_3(%arg0: i32, %arg1: i32, %arg2: i32) -> (i32, i32) {
    %c0_i32 = arith.constant 0 : i32
    return %arg0, %arg1 : i32, i32
  }
}

module attributes {stable_mosaic.version = 11 : i64} {
  func.func @kernel(%arg0: i32, %arg1: i32, %arg2: i32, %arg3: memref<1x1x8xf32, #tpu.memory_space<vmem>>, %arg4: memref<1x8x32xf32, #tpu.memory_space<vmem>>, %arg5: memref<1x8x64xf32, #tpu.memory_space<vmem>>, %arg6: memref<1x8x32xf32, #tpu.memory_space<vmem>>) attributes {dimension_semantics = [#tpu.dimension_semantics<parallel>, #tpu.dimension_semantics<parallel>, #tpu.dimension_semantics<parallel>], iteration_bounds = array<i64: 2, 1, 1>, scalar_prefetch = 0 : i64, scratch_operands = 0 : i64, tpu.core_type = #tpu.core_type<tc>, window_params = [{transform_indices = @transform_0, window_bounds = array<i64: 1, 1, 8>}, {transform_indices = @transform_1, window_bounds = array<i64: 1, 8, 32>}, {transform_indices = @transform_2, window_bounds = array<i64: 1, 8, 64>}, {transform_indices = @transform_3, window_bounds = array<i64: 1, 8, 32>}]} {
    %c0 = arith.constant 0 : index
    %c0_0 = arith.constant 0 : index
    %c0_1 = arith.constant 0 : index
    %0 = vector.load %arg3[%c0, %c0_0, %c0_1] : memref<1x1x8xf32, #tpu.memory_space<vmem>>, vector<1x1x8xf32>
    %1 = vector.shape_cast %0 : vector<1x1x8xf32> to vector<1x8xf32>
    %c0_2 = arith.constant 0 : index
    %c0_3 = arith.constant 0 : index
    %c0_4 = arith.constant 0 : index
    %2 = vector.load %arg4[%c0_2, %c0_3, %c0_4] : memref<1x8x32xf32, #tpu.memory_space<vmem>>, vector<1x8x8xf32>
    %3 = vector.shape_cast %2 : vector<1x8x8xf32> to vector<8x8xf32>
    %c0_5 = arith.constant 0 : index
    %c0_6 = arith.constant 0 : index
    %c0_7 = arith.constant 0 : index
    %4 = vector.load %arg5[%c0_5, %c0_6, %c0_7] : memref<1x8x64xf32, #tpu.memory_space<vmem>>, vector<1x8x8xf32>
    %5 = vector.shape_cast %4 : vector<1x8x8xf32> to vector<8x8xf32>
    %c0_8 = arith.constant 0 : index
    %c0_9 = arith.constant 0 : index
    %c8 = arith.constant 8 : index
    %6 = vector.load %arg5[%c0_8, %c0_9, %c8] : memref<1x8x64xf32, #tpu.memory_space<vmem>>, vector<1x8x8xf32>
    %7 = vector.shape_cast %6 : vector<1x8x8xf32> to vector<8x8xf32>
    %cst = arith.constant dense<0.000000e+00> : vector<8x8xf32>
    %8 = tpu.matmul %3, %5, %cst {dimension_numbers = #tpu.dot_dimension_numbers<[1], [1], [0], [0], [0, 0, 1, 0], [], []>} : vector<8x8xf32>, vector<8x8xf32>, vector<8x8xf32> -> vector<8x8xf32>
    %9 = vector.broadcast %1 : vector<1x8xf32> to vector<8x8xf32>
    %10 = arith.addf %8, %9 : vector<8x8xf32>
    %cst_10 = arith.constant dense<0xFF800000> : vector<8xf32>
    %11 = vector.multi_reduction <maximumf>, %10, %cst_10 [1] : vector<8x8xf32> to vector<8xf32>
    %12 = vector.shape_cast %11 : vector<8xf32> to vector<8x1xf32>
    %13 = vector.broadcast %12 : vector<8x1xf32> to vector<8x8xf32>
    %14 = arith.subf %10, %13 : vector<8x8xf32>
    %15 = math.exp %14 : vector<8x8xf32>
    %cst_11 = arith.constant dense<0.000000e+00> : vector<8xf32>
    %16 = vector.multi_reduction <add>, %15, %cst_11 [1] : vector<8x8xf32> to vector<8xf32>
    %17 = vector.shape_cast %16 : vector<8xf32> to vector<8x1xf32>
    %18 = tpu.reciprocal %17 {approx = true} : vector<8x1xf32> -> vector<8x1xf32>
    %19 = vector.broadcast %18 : vector<8x1xf32> to vector<8x8xf32>
    %20 = arith.mulf %15, %19 : vector<8x8xf32>
    %cst_12 = arith.constant dense<0.000000e+00> : vector<8x8xf32>
    %21 = tpu.matmul %20, %7, %cst_12 {dimension_numbers = #tpu.dot_dimension_numbers<[1], [0], [0], [1], [0, 0, 1, 1], [], []>} : vector<8x8xf32>, vector<8x8xf32>, vector<8x8xf32> -> vector<8x8xf32>
    %c0_13 = arith.constant 0 : index
    %c0_14 = arith.constant 0 : index
    %c8_15 = arith.constant 8 : index
    %22 = vector.load %arg4[%c0_13, %c0_14, %c8_15] : memref<1x8x32xf32, #tpu.memory_space<vmem>>, vector<1x8x8xf32>
    %23 = vector.shape_cast %22 : vector<1x8x8xf32> to vector<8x8xf32>
    %c0_16 = arith.constant 0 : index
    %c0_17 = arith.constant 0 : index
    %c16 = arith.constant 16 : index
    %24 = vector.load %arg5[%c0_16, %c0_17, %c16] : memref<1x8x64xf32, #tpu.memory_space<vmem>>, vector<1x8x8xf32>
    %25 = vector.shape_cast %24 : vector<1x8x8xf32> to vector<8x8xf32>
    %c0_18 = arith.constant 0 : index
    %c0_19 = arith.constant 0 : index
    %c24 = arith.constant 24 : index
    %26 = vector.load %arg5[%c0_18, %c0_19, %c24] : memref<1x8x64xf32, #tpu.memory_space<vmem>>, vector<1x8x8xf32>
    %27 = vector.shape_cast %26 : vector<1x8x8xf32> to vector<8x8xf32>
    %cst_20 = arith.constant dense<0.000000e+00> : vector<8x8xf32>
    %28 = tpu.matmul %23, %25, %cst_20 {dimension_numbers = #tpu.dot_dimension_numbers<[1], [1], [0], [0], [0, 0, 1, 0], [], []>} : vector<8x8xf32>, vector<8x8xf32>, vector<8x8xf32> -> vector<8x8xf32>
    %29 = vector.broadcast %1 : vector<1x8xf32> to vector<8x8xf32>
    %30 = arith.addf %28, %29 : vector<8x8xf32>
    %cst_21 = arith.constant dense<0xFF800000> : vector<8xf32>
    %31 = vector.multi_reduction <maximumf>, %30, %cst_21 [1] : vector<8x8xf32> to vector<8xf32>
    %32 = vector.shape_cast %31 : vector<8xf32> to vector<8x1xf32>
    %33 = vector.broadcast %32 : vector<8x1xf32> to vector<8x8xf32>
    %34 = arith.subf %30, %33 : vector<8x8xf32>
    %35 = math.exp %34 : vector<8x8xf32>
    %cst_22 = arith.constant dense<0.000000e+00> : vector<8xf32>
    %36 = vector.multi_reduction <add>, %35, %cst_22 [1] : vector<8x8xf32> to vector<8xf32>
    %37 = vector.shape_cast %36 : vector<8xf32> to vector<8x1xf32>
    %38 = tpu.reciprocal %37 {approx = true} : vector<8x1xf32> -> vector<8x1xf32>
    %39 = vector.broadcast %38 : vector<8x1xf32> to vector<8x8xf32>
    %40 = arith.mulf %35, %39 : vector<8x8xf32>
    %cst_23 = arith.constant dense<0.000000e+00> : vector<8x8xf32>
    %41 = tpu.matmul %40, %27, %cst_23 {dimension_numbers = #tpu.dot_dimension_numbers<[1], [0], [0], [1], [0, 0, 1, 1], [], []>} : vector<8x8xf32>, vector<8x8xf32>, vector<8x8xf32> -> vector<8x8xf32>
    %c0_24 = arith.constant 0 : index
    %c0_25 = arith.constant 0 : index
    %c16_26 = arith.constant 16 : index
    %42 = vector.load %arg4[%c0_24, %c0_25, %c16_26] : memref<1x8x32xf32, #tpu.memory_space<vmem>>, vector<1x8x8xf32>
    %43 = vector.shape_cast %42 : vector<1x8x8xf32> to vector<8x8xf32>
    %c0_27 = arith.constant 0 : index
    %c0_28 = arith.constant 0 : index
    %c32 = arith.constant 32 : index
    %44 = vector.load %arg5[%c0_27, %c0_28, %c32] : memref<1x8x64xf32, #tpu.memory_space<vmem>>, vector<1x8x8xf32>
    %45 = vector.shape_cast %44 : vector<1x8x8xf32> to vector<8x8xf32>
    %c0_29 = arith.constant 0 : index
    %c0_30 = arith.constant 0 : index
    %c40 = arith.constant 40 : index
    %46 = vector.load %arg5[%c0_29, %c0_30, %c40] : memref<1x8x64xf32, #tpu.memory_space<vmem>>, vector<1x8x8xf32>
    %47 = vector.shape_cast %46 : vector<1x8x8xf32> to vector<8x8xf32>
    %cst_31 = arith.constant dense<0.000000e+00> : vector<8x8xf32>
    %48 = tpu.matmul %43, %45, %cst_31 {dimension_numbers = #tpu.dot_dimension_numbers<[1], [1], [0], [0], [0, 0, 1, 0], [], []>} : vector<8x8xf32>, vector<8x8xf32>, vector<8x8xf32> -> vector<8x8xf32>
    %49 = vector.broadcast %1 : vector<1x8xf32> to vector<8x8xf32>
    %50 = arith.addf %48, %49 : vector<8x8xf32>
    %cst_32 = arith.constant dense<0xFF800000> : vector<8xf32>
    %51 = vector.multi_reduction <maximumf>, %50, %cst_32 [1] : vector<8x8xf32> to vector<8xf32>
    %52 = vector.shape_cast %51 : vector<8xf32> to vector<8x1xf32>
    %53 = vector.broadcast %52 : vector<8x1xf32> to vector<8x8xf32>
    %54 = arith.subf %50, %53 : vector<8x8xf32>
    %55 = math.exp %54 : vector<8x8xf32>
    %cst_33 = arith.constant dense<0.000000e+00> : vector<8xf32>
    %56 = vector.multi_reduction <add>, %55, %cst_33 [1] : vector<8x8xf32> to vector<8xf32>
    %57 = vector.shape_cast %56 : vector<8xf32> to vector<8x1xf32>
    %58 = tpu.reciprocal %57 {approx = true} : vector<8x1xf32> -> vector<8x1xf32>
    %59 = vector.broadcast %58 : vector<8x1xf32> to vector<8x8xf32>
    %60 = arith.mulf %55, %59 : vector<8x8xf32>
    %cst_34 = arith.constant dense<0.000000e+00> : vector<8x8xf32>
    %61 = tpu.matmul %60, %47, %cst_34 {dimension_numbers = #tpu.dot_dimension_numbers<[1], [0], [0], [1], [0, 0, 1, 1], [], []>} : vector<8x8xf32>, vector<8x8xf32>, vector<8x8xf32> -> vector<8x8xf32>
    %c0_35 = arith.constant 0 : index
    %c0_36 = arith.constant 0 : index
    %c24_37 = arith.constant 24 : index
    %62 = vector.load %arg4[%c0_35, %c0_36, %c24_37] : memref<1x8x32xf32, #tpu.memory_space<vmem>>, vector<1x8x8xf32>
    %63 = vector.shape_cast %62 : vector<1x8x8xf32> to vector<8x8xf32>
    %c0_38 = arith.constant 0 : index
    %c0_39 = arith.constant 0 : index
    %c48 = arith.constant 48 : index
    %64 = vector.load %arg5[%c0_38, %c0_39, %c48] : memref<1x8x64xf32, #tpu.memory_space<vmem>>, vector<1x8x8xf32>
    %65 = vector.shape_cast %64 : vector<1x8x8xf32> to vector<8x8xf32>
    %c0_40 = arith.constant 0 : index
    %c0_41 = arith.constant 0 : index
    %c56 = arith.constant 56 : index
    %66 = vector.load %arg5[%c0_40, %c0_41, %c56] : memref<1x8x64xf32, #tpu.memory_space<vmem>>, vector<1x8x8xf32>
    %67 = vector.shape_cast %66 : vector<1x8x8xf32> to vector<8x8xf32>
    %cst_42 = arith.constant dense<0.000000e+00> : vector<8x8xf32>
    %68 = tpu.matmul %63, %65, %cst_42 {dimension_numbers = #tpu.dot_dimension_numbers<[1], [1], [0], [0], [0, 0, 1, 0], [], []>} : vector<8x8xf32>, vector<8x8xf32>, vector<8x8xf32> -> vector<8x8xf32>
    %69 = vector.broadcast %1 : vector<1x8xf32> to vector<8x8xf32>
    %70 = arith.addf %68, %69 : vector<8x8xf32>
    %cst_43 = arith.constant dense<0xFF800000> : vector<8xf32>
    %71 = vector.multi_reduction <maximumf>, %70, %cst_43 [1] : vector<8x8xf32> to vector<8xf32>
    %72 = vector.shape_cast %71 : vector<8xf32> to vector<8x1xf32>
    %73 = vector.broadcast %72 : vector<8x1xf32> to vector<8x8xf32>
    %74 = arith.subf %70, %73 : vector<8x8xf32>
    %75 = math.exp %74 : vector<8x8xf32>
    %cst_44 = arith.constant dense<0.000000e+00> : vector<8xf32>
    %76 = vector.multi_reduction <add>, %75, %cst_44 [1] : vector<8x8xf32> to vector<8xf32>
    %77 = vector.shape_cast %76 : vector<8xf32> to vector<8x1xf32>
    %78 = tpu.reciprocal %77 {approx = true} : vector<8x1xf32> -> vector<8x1xf32>
    %79 = vector.broadcast %78 : vector<8x1xf32> to vector<8x8xf32>
    %80 = arith.mulf %75, %79 : vector<8x8xf32>
    %cst_45 = arith.constant dense<0.000000e+00> : vector<8x8xf32>
    %81 = tpu.matmul %80, %67, %cst_45 {dimension_numbers = #tpu.dot_dimension_numbers<[1], [0], [0], [1], [0, 0, 1, 1], [], []>} : vector<8x8xf32>, vector<8x8xf32>, vector<8x8xf32> -> vector<8x8xf32>
    %82 = tpu.concatenate %21, %41, %61, %81 in 1 : vector<8x8xf32>, vector<8x8xf32>, vector<8x8xf32>, vector<8x8xf32> -> vector<8x32xf32>
    %c0_46 = arith.constant 0 : index
    %c0_47 = arith.constant 0 : index
    %c0_48 = arith.constant 0 : index
    %83 = vector.load %arg6[%c0_46, %c0_47, %c0_48] : memref<1x8x32xf32, #tpu.memory_space<vmem>>, vector<1x8x32xf32>
    %84 = vector.shape_cast %83 : vector<1x8x32xf32> to vector<8x32xf32>
    %85 = vector.shape_cast %82 : vector<8x32xf32> to vector<1x8x32xf32>
    tpu.vector_store %arg6[%c0_46, %c0_47, %c0_48], %85 {strides = array<i32>} : memref<1x8x32xf32, #tpu.memory_space<vmem>>, vector<1x8x32xf32>,
    return
  }
  func.func @transform_0(%arg0: i32, %arg1: i32, %arg2: i32) -> (i32, i32, i32) {
    %c0_i32 = arith.constant 0 : i32
    %c0_i32_0 = arith.constant 0 : i32
    %c0_i32_1 = arith.constant 0 : i32
    return %arg0, %c0_i32, %c0_i32_0 : i32, i32, i32
  }
  func.func @transform_1(%arg0: i32, %arg1: i32, %arg2: i32) -> (i32, i32, i32) {
    %c0_i32 = arith.constant 0 : i32
    return %arg0, %arg2, %arg1 : i32, i32, i32
  }
  func.func @transform_2(%arg0: i32, %arg1: i32, %arg2: i32) -> (i32, i32, i32) {
    %c0_i32 = arith.constant 0 : i32
    %c0_i32_0 = arith.constant 0 : i32
    return %arg0, %c0_i32, %arg1 : i32, i32, i32
  }
  func.func @transform_3(%arg0: i32, %arg1: i32, %arg2: i32) -> (i32, i32, i32) {
    %c0_i32 = arith.constant 0 : i32
    return %arg0, %arg2, %arg1 : i32, i32, i32
  }
}

module attributes {stable_mosaic.version = 11 : i64} {
  func.func @_ln_res_kernel(%arg0: i32, %arg1: memref<16x32xf32, #tpu.memory_space<vmem>>, %arg2: memref<16x32xf32, #tpu.memory_space<vmem>>, %arg3: memref<1x32xf32, #tpu.memory_space<vmem>>, %arg4: memref<1x32xf32, #tpu.memory_space<vmem>>, %arg5: memref<16x32xf32, #tpu.memory_space<vmem>>) attributes {dimension_semantics = [#tpu.dimension_semantics<parallel>], iteration_bounds = array<i64: 1>, scalar_prefetch = 0 : i64, scratch_operands = 0 : i64, tpu.core_type = #tpu.core_type<tc>, window_params = [{transform_indices = @transform_0, window_bounds = array<i64: 16, 32>}, {transform_indices = @transform_1, window_bounds = array<i64: 16, 32>}, {pipeline_mode = #tpu.pipeline_mode<synchronous>, transform_indices = @transform_2, window_bounds = array<i64: 1, 32>}, {pipeline_mode = #tpu.pipeline_mode<synchronous>, transform_indices = @transform_3, window_bounds = array<i64: 1, 32>}, {transform_indices = @transform_4, window_bounds = array<i64: 16, 32>}]} {
    %c0 = arith.constant 0 : index
    %c0_0 = arith.constant 0 : index
    %0 = vector.load %arg1[%c0, %c0_0] : memref<16x32xf32, #tpu.memory_space<vmem>>, vector<16x32xf32>
    %c0_1 = arith.constant 0 : index
    %c0_2 = arith.constant 0 : index
    %1 = vector.load %arg2[%c0_1, %c0_2] : memref<16x32xf32, #tpu.memory_space<vmem>>, vector<16x32xf32>
    %2 = arith.addf %0, %1 : vector<16x32xf32>
    %c0_3 = arith.constant 0 : index
    %c0_4 = arith.constant 0 : index
    %3 = vector.load %arg3[%c0_3, %c0_4] : memref<1x32xf32, #tpu.memory_space<vmem>>, vector<1x32xf32>
    %c0_5 = arith.constant 0 : index
    %c0_6 = arith.constant 0 : index
    %4 = vector.load %arg4[%c0_5, %c0_6] : memref<1x32xf32, #tpu.memory_space<vmem>>, vector<1x32xf32>
    %cst = arith.constant dense<0.000000e+00> : vector<16xf32>
    %5 = vector.multi_reduction <add>, %2, %cst [1] : vector<16x32xf32> to vector<16xf32>
    %6 = vector.shape_cast %5 : vector<16xf32> to vector<16x1xf32>
    %cst_7 = arith.constant 3.200000e+01 : f32
    %7 = vector.broadcast %cst_7 : f32 to vector<16x1xf32>
    %8 = arith.divf %6, %7 : vector<16x1xf32>
    %9 = vector.broadcast %8 : vector<16x1xf32> to vector<16x32xf32>
    %10 = arith.subf %2, %9 : vector<16x32xf32>
    %11 = arith.mulf %10, %10 : vector<16x32xf32>
    %cst_8 = arith.constant dense<0.000000e+00> : vector<16xf32>
    %12 = vector.multi_reduction <add>, %11, %cst_8 [1] : vector<16x32xf32> to vector<16xf32>
    %13 = vector.shape_cast %12 : vector<16xf32> to vector<16x1xf32>
    %cst_9 = arith.constant 3.200000e+01 : f32
    %14 = vector.broadcast %cst_9 : f32 to vector<16x1xf32>
    %15 = arith.divf %13, %14 : vector<16x1xf32>
    %16 = vector.broadcast %8 : vector<16x1xf32> to vector<16x32xf32>
    %17 = arith.subf %2, %16 : vector<16x32xf32>
    %cst_10 = arith.constant 9.99999974E-6 : f32
    %18 = vector.broadcast %cst_10 : f32 to vector<16x1xf32>
    %19 = arith.addf %15, %18 : vector<16x1xf32>
    %20 = math.rsqrt %19 : vector<16x1xf32>
    %21 = vector.broadcast %20 : vector<16x1xf32> to vector<16x32xf32>
    %22 = arith.mulf %17, %21 : vector<16x32xf32>
    %23 = vector.broadcast %3 : vector<1x32xf32> to vector<16x32xf32>
    %24 = arith.mulf %22, %23 : vector<16x32xf32>
    %25 = vector.broadcast %4 : vector<1x32xf32> to vector<16x32xf32>
    %26 = arith.addf %24, %25 : vector<16x32xf32>
    %c0_11 = arith.constant 0 : index
    %c0_12 = arith.constant 0 : index
    %27 = vector.load %arg5[%c0_11, %c0_12] : memref<16x32xf32, #tpu.memory_space<vmem>>, vector<16x32xf32>
    tpu.vector_store %arg5[%c0_11, %c0_12], %26 {strides = array<i32>} : memref<16x32xf32, #tpu.memory_space<vmem>>, vector<16x32xf32>,
    return
  }
  func.func @transform_0(%arg0: i32) -> (i32, i32) {
    %c0_i32 = arith.constant 0 : i32
    %c0_i32_0 = arith.constant 0 : i32
    return %arg0, %c0_i32 : i32, i32
  }
  func.func @transform_1(%arg0: i32) -> (i32, i32) {
    %c0_i32 = arith.constant 0 : i32
    %c0_i32_0 = arith.constant 0 : i32
    return %arg0, %c0_i32 : i32, i32
  }
  func.func @transform_2(%arg0: i32) -> (i32, i32) {
    %c0_i32 = arith.constant 0 : i32
    %c0_i32_0 = arith.constant 0 : i32
    %c0_i32_1 = arith.constant 0 : i32
    return %c0_i32, %c0_i32_0 : i32, i32
  }
  func.func @transform_3(%arg0: i32) -> (i32, i32) {
    %c0_i32 = arith.constant 0 : i32
    %c0_i32_0 = arith.constant 0 : i32
    %c0_i32_1 = arith.constant 0 : i32
    return %c0_i32, %c0_i32_0 : i32, i32
  }
  func.func @transform_4(%arg0: i32) -> (i32, i32) {
    %c0_i32 = arith.constant 0 : i32
    %c0_i32_0 = arith.constant 0 : i32
    return %arg0, %c0_i32 : i32, i32
  }
}

module attributes {stable_mosaic.version = 11 : i64} {
  func.func @kernel(%arg0: i32, %arg1: i32, %arg2: i32, %arg3: memref<16x32xf32, #tpu.memory_space<vmem>>, %arg4: memref<32x64xf32, #tpu.memory_space<vmem>>, %arg5: memref<1x64xf32, #tpu.memory_space<vmem>>, %arg6: memref<16x64xf32, #tpu.memory_space<vmem>>, %arg7: memref<16x64xf32, #tpu.memory_space<vmem>>) attributes {dimension_semantics = [#tpu.dimension_semantics<parallel>, #tpu.dimension_semantics<parallel>, #tpu.dimension_semantics<arbitrary>], iteration_bounds = array<i64: 1, 1, 1>, scalar_prefetch = 0 : i64, scratch_operands = 1 : i64, tpu.core_type = #tpu.core_type<tc>, window_params = [{transform_indices = @transform_0, window_bounds = array<i64: 16, 32>}, {transform_indices = @transform_1, window_bounds = array<i64: 32, 64>}, {transform_indices = @transform_2, window_bounds = array<i64: 1, 64>}, {transform_indices = @transform_3, window_bounds = array<i64: 16, 64>}]} {
    %c0_i32 = arith.constant 0 : i32
    %0 = arith.cmpi eq, %arg2, %c0_i32 : i32
    %1 = arith.extui %0 : i1 to i32
    %c0_i32_0 = arith.constant 0 : i32
    %2 = arith.cmpi ne, %1, %c0_i32_0 : i32
    scf.if %2 {
      %cst_10 = arith.constant 0.000000e+00 : f32
      %12 = vector.broadcast %cst_10 : f32 to vector<16x64xf32>
      %c0_11 = arith.constant 0 : index
      %c0_12 = arith.constant 0 : index
      %13 = vector.load %arg7[%c0_11, %c0_12] : memref<16x64xf32, #tpu.memory_space<vmem>>, vector<16x64xf32>
      tpu.vector_store %arg7[%c0_11, %c0_12], %12 {strides = array<i32>} : memref<16x64xf32, #tpu.memory_space<vmem>>, vector<16x64xf32>,
    } else {
    }
    %c0 = arith.constant 0 : index
    %c0_1 = arith.constant 0 : index
    %3 = vector.load %arg7[%c0, %c0_1] : memref<16x64xf32, #tpu.memory_space<vmem>>, vector<16x64xf32>
    %c0_2 = arith.constant 0 : index
    %c0_3 = arith.constant 0 : index
    %4 = vector.load %arg3[%c0_2, %c0_3] : memref<16x32xf32, #tpu.memory_space<vmem>>, vector<16x32xf32>
    %c0_4 = arith.constant 0 : index
    %c0_5 = arith.constant 0 : index
    %5 = vector.load %arg4[%c0_4, %c0_5] : memref<32x64xf32, #tpu.memory_space<vmem>>, vector<32x64xf32>
    %cst = arith.constant dense<0.000000e+00> : vector<16x64xf32>
    %6 = tpu.matmul %4, %5, %cst {dimension_numbers = #tpu.dot_dimension_numbers<[1], [0], [0], [1], [0, 0, 1, 1], [], []>} : vector<16x32xf32>, vector<32x64xf32>, vector<16x64xf32> -> vector<16x64xf32>
    %7 = arith.addf %3, %6 : vector<16x64xf32>
    %c0_6 = arith.constant 0 : index
    %c0_7 = arith.constant 0 : index
    %8 = vector.load %arg7[%c0_6, %c0_7] : memref<16x64xf32, #tpu.memory_space<vmem>>, vector<16x64xf32>
    tpu.vector_store %arg7[%c0_6, %c0_7], %7 {strides = array<i32>} : memref<16x64xf32, #tpu.memory_space<vmem>>, vector<16x64xf32>,
    %c0_i32_8 = arith.constant 0 : i32
    %9 = arith.cmpi eq, %arg2, %c0_i32_8 : i32
    %10 = arith.extui %9 : i1 to i32
    %c0_i32_9 = arith.constant 0 : i32
    %11 = arith.cmpi ne, %10, %c0_i32_9 : i32
    scf.if %11 {
      %c0_10 = arith.constant 0 : index
      %c0_11 = arith.constant 0 : index
      %12 = vector.load %arg7[%c0_10, %c0_11] : memref<16x64xf32, #tpu.memory_space<vmem>>, vector<16x64xf32>
      %c0_12 = arith.constant 0 : index
      %c0_13 = arith.constant 0 : index
      %13 = vector.load %arg5[%c0_12, %c0_13] : memref<1x64xf32, #tpu.memory_space<vmem>>, vector<1x64xf32>
      %14 = vector.broadcast %13 : vector<1x64xf32> to vector<16x64xf32>
      %15 = arith.addf %12, %14 : vector<16x64xf32>
      %c0_14 = arith.constant 0 : index
      %c0_15 = arith.constant 0 : index
      %16 = vector.load %arg6[%c0_14, %c0_15] : memref<16x64xf32, #tpu.memory_space<vmem>>, vector<16x64xf32>
      tpu.vector_store %arg6[%c0_14, %c0_15], %15 {strides = array<i32>} : memref<16x64xf32, #tpu.memory_space<vmem>>, vector<16x64xf32>,
    } else {
    }
    return
  }
  func.func @transform_0(%arg0: i32, %arg1: i32, %arg2: i32) -> (i32, i32) {
    %c0_i32 = arith.constant 0 : i32
    return %arg0, %arg2 : i32, i32
  }
  func.func @transform_1(%arg0: i32, %arg1: i32, %arg2: i32) -> (i32, i32) {
    %c0_i32 = arith.constant 0 : i32
    return %arg2, %arg1 : i32, i32
  }
  func.func @transform_2(%arg0: i32, %arg1: i32, %arg2: i32) -> (i32, i32) {
    %c0_i32 = arith.constant 0 : i32
    %c0_i32_0 = arith.constant 0 : i32
    return %c0_i32, %arg1 : i32, i32
  }
  func.func @transform_3(%arg0: i32, %arg1: i32, %arg2: i32) -> (i32, i32) {
    %c0_i32 = arith.constant 0 : i32
    return %arg0, %arg1 : i32, i32
  }
}

</mosaic_0001>

<llo_original>
// kernel: _lambda_.58
$region0: #{_lambda_.58}
  #allocation0 [shape = 'u32[]', space=smem, size = 0x4, offset = 0x4, fixed_abs, tag = 'smem constant byte address 0x4 - core index']
  #allocation1 [shape = 'u32[72,128]{1,0:T(1,128)}', space=vmem, size = 0x9000, scoped, tag = 'internal scratch']
  #allocation2 [shape = 'f32[16,32]{1,0:T(8,128)}', space=vmem, size = 0x2000, scoped, tag = 'scratch operand']
  %s0 = inlined_call_operand.vmem [shape: f32[16,32], index: 0, kind: input, shape index: {}]
  %s1 = inlined_call_operand.vmem [shape: f32[32,32], index: 1, kind: input, shape index: {}]
  %s2 = inlined_call_operand.vmem [shape: f32[1,32], index: 2, kind: input, shape index: {}]
  %s3 = inlined_call_operand.vmem [shape: f32[16,32], index: 3, kind: output, shape index: {}]
  %s4 = sld [smem:[#allocation0]]
  $region30: #{_lambda_.58} parent=0
    _
  %s6 = ssub.s32 1, %s4
  %s7 = scalar_select 0, %s6, %s4
  // Predicated region
  $region2: #{_lambda_.58} parent=0 // pred_check
    _
  $region3: #{_lambda_.58} parent=0 // pred_check_branch
    %9 = sbr.rel (0) target = $region5
  $region4: #{_lambda_.58} parent=0 // pred_region
    _
  $region5: #{_lambda_.58} parent=0 // pred_fallthru
    _
  // Predicated region
  $region6: #{_lambda_.58} parent=0 // pred_check
    _
  $region7: #{_lambda_.58} parent=0 // pred_check_branch
    %11 = sbr.rel (0) target = $region9
  $region8: #{_lambda_.58} parent=0 // pred_region
    _
  $region9: #{_lambda_.58} parent=0 // pred_fallthru
    _
  // Predicated region
  $region10: #{_lambda_.58} parent=0 // pred_check
    _
  $region11: #{_lambda_.58} parent=0 // pred_check_branch
    %13 = sbr.rel (0) target = $region13
  $region12: #{_lambda_.58} parent=0 // pred_region
    _
  $region13: #{_lambda_.58} parent=0 // pred_fallthru
    _
  %p14 = scmp.eq.s32.totalorder 0, 0
  // Predicated region
  $region14: #{_lambda_.58} parent=0 // pred_check
    %p15 = pneg %p14
  $region15: #{_lambda_.58} parent=0 // pred_check_branch
    %17 = sbr.rel (%p15) target = $region17
  $region16: #{_lambda_.58} parent=0 // pred_region
    %vm18 = vcmask 261120
    %19 = vst.msk [vmem:[#allocation2] sm:$0xff] %vm18, 0.0
    %20 = vst.msk [vmem:[#allocation2 + $0x8] sm:$0xff] %vm18, 0.0
  $region17: #{_lambda_.58} parent=0 // pred_fallthru
    _
  %v21 = vld [vmem:[#allocation2] sm:$0xff]
  %v22 = vld [vmem:[#allocation2 + $0x8] sm:$0xff]
  %v23 = vld [vmem:[%s0] sm:$0xff]
  %v24 = vld [vmem:[%s0 + $0x8] sm:$0xff]
  %v25 = vld [vmem:[%s1] sm:$0xff]
  %v26 = vld [vmem:[%s1 + $0x8] sm:$0xff]
  %v27 = vld [vmem:[%s1 + $0x10] sm:$0xff]
  %v28 = vld [vmem:[%s1 + $0x18] sm:$0xff]
  %vm29 = vcmask 261120
  %v31 = vsel %vm29, %v23, 0
  %v34 = vsel %vm29, %v24, 0
  %36 = vmatpush.msra.mxu0 0.0
  %37 = vmatpush.msra.mxu0 0.0
  %38 = vmatpush.msra.mxu0 0.0
  %39 = vmatpush.msra.mxu0 0.0
  %40 = vmatpush.msra.mxu0 0.0
  %41 = vmatpush.msra.mxu0 0.0
  %42 = vmatpush.msra.mxu0 0.0
  %43 = vmatpush.msra.mxu0 0.0
  %44 = vmatpush.msra.mxu0 0.0
  %45 = vmatpush.msra.mxu0 0.0
  %46 = vmatpush.msra.mxu0 0.0
  %47 = vmatpush.msra.mxu0 0.0
  %48 = vmatpush.msra.mxu0 %v28
  %49 = vmatpush.msra.mxu0 %v27
  %50 = vmatpush.msra.mxu0 %v26
  %51 = vmatpush.msra.mxu0 %v25
  %52 = vmatmul.f32.gmra.mxu0 %v31
  %v53 = vpop.f32.mrf.mxu0
  %v54 = vadd.f32 0.0, %v53
  %55 = vmatmul.f32.gmra.mxu0 %v34
  %v56 = vpop.f32.mrf.mxu0
  %v57 = vadd.f32 0.0, %v56
  %58 = vdwg.mxu0
  %v59 = vadd.f32 %v21, %v54
  %v60 = vadd.f32 %v22, %v57
  %61 = vst.msk [vmem:[#allocation2] sm:$0xff] %vm29, %v59
  %62 = vst.msk [vmem:[#allocation2 + $0x8] sm:$0xff] %vm29, %v60
  // Predicated region
  $region18: #{_lambda_.58} parent=0 // pred_check
    %p63 = pneg %p14
  $region19: #{_lambda_.58} parent=0 // pred_check_branch
    %65 = sbr.rel (%p63) target = $region21
  $region20: #{_lambda_.58} parent=0 // pred_region
    %v66 = vld [vmem:[#allocation2] sm:$0xff]
    %v67 = vld [vmem:[#allocation2 + $0x8] sm:$0xff]
    %v68 = vld [vmem:[%s2] sm:$0x1]
    %v70 = vperm.slane %v68, 0
    %v72 = vadd.f32 %v66, %v70
    %v73 = vadd.f32 %v67, %v70
    %74 = vst.msk [vmem:[%s3] sm:$0xff] %vm29, %v72
    %75 = vst.msk [vmem:[%s3 + $0x8] sm:$0xff] %vm29, %v73
  $region21: #{_lambda_.58} parent=0 // pred_fallthru
    _
  // Predicated region
  $region22: #{_lambda_.58} parent=0 // pred_check
    _
  $region23: #{_lambda_.58} parent=0 // pred_check_branch
    %77 = sbr.rel (0) target = $region25
  $region24: #{_lambda_.58} parent=0 // pred_region
    _
  $region25: #{_lambda_.58} parent=0 // pred_fallthru
    _
  // Predicated region
  $region26: #{_lambda_.58} parent=0 // pred_check
    _
  $region27: #{_lambda_.58} parent=0 // pred_check_branch
    %79 = sbr.rel (0) target = $region29
  $region28: #{_lambda_.58} parent=0 // pred_region
    _
  $region29: #{_lambda_.58} parent=0 // pred_fallthru
    _

// kernel: _lambda_.55
$region0: #{_lambda_.55}
  #allocation0 [shape = 'u32[]', space=smem, size = 0x4, offset = 0x4, fixed_abs, tag = 'smem constant byte address 0x4 - core index']
  #allocation1 [shape = 'u32[72,128]{1,0:T(1,128)}', space=vmem, size = 0x9000, scoped, tag = 'internal scratch']
  %s0 = inlined_call_operand.vmem [shape: f32[16,32], index: 0, kind: input, shape index: {}]
  %s1 = inlined_call_operand.vmem [shape: f32[1,32], index: 1, kind: input, shape index: {}]
  %s2 = inlined_call_operand.vmem [shape: f32[1,32], index: 2, kind: input, shape index: {}]
  %s3 = inlined_call_operand.vmem [shape: f32[16,32], index: 3, kind: output, shape index: {}]
  %s4 = sld [smem:[#allocation0]]
  $region22: #{_lambda_.55} parent=0
    _
  %s6 = ssub.s32 1, %s4
  %s7 = scalar_select 0, %s6, %s4
  // Predicated region
  $region2: #{_lambda_.55} parent=0 // pred_check
    _
  $region3: #{_lambda_.55} parent=0 // pred_check_branch
    %9 = sbr.rel (0) target = $region5
  $region4: #{_lambda_.55} parent=0 // pred_region
    _
  $region5: #{_lambda_.55} parent=0 // pred_fallthru
    _
  // Predicated region
  $region6: #{_lambda_.55} parent=0 // pred_check
    _
  $region7: #{_lambda_.55} parent=0 // pred_check_branch
    %11 = sbr.rel (0) target = $region9
  $region8: #{_lambda_.55} parent=0 // pred_region
    _
  $region9: #{_lambda_.55} parent=0 // pred_fallthru
    _
  // Predicated region
  $region10: #{_lambda_.55} parent=0 // pred_check
    _
  $region11: #{_lambda_.55} parent=0 // pred_check_branch
    %13 = sbr.rel (0) target = $region13
  $region12: #{_lambda_.55} parent=0 // pred_region
    _
  $region13: #{_lambda_.55} parent=0 // pred_fallthru
    _
  %v14 = vld [vmem:[%s0] sm:$0xff]
  %v15 = vld [vmem:[%s0 + $0x8] sm:$0xff]
  %v16 = vld [vmem:[%s1] sm:$0x1]
  %v17 = vld [vmem:[%s2] sm:$0x1]
  %vm18 = vcmask 261120
  %v19 = vsel %vm18, %v14, 0.0
  %20 = vadd.xlane.f32.xlu0 %v19
  %v21 = vpop.xlane.xlu0 %20
  %v22 = vsel %vm18, %v15, 0.0
  %23 = vadd.xlane.f32.xlu0 %v22
  %v24 = vpop.xlane.xlu0 %23
  %v25 = vrcp.pop 32.0
  %v26 = vmul.f32 32.0, %v25
  %v27 = vsub.f32 1.0, %v26
  %v28 = vmul.f32 %v25, %v27
  %v29 = vadd.f32 %v25, %v28
  %vm30 = vweird.f32 %v25
  %v31 = vsel %vm30, %v25, %v29
  %v32 = vmul.f32 %v21, %v31
  %v33 = vmul.f32 %v24, %v31
  %v34 = vsub.f32 %v14, %v32
  %v35 = vsub.f32 %v15, %v33
  %v36 = vmul.f32 %v34, %v34
  %v37 = vmul.f32 %v35, %v35
  %v38 = vsel %vm18, %v36, 0.0
  %39 = vadd.xlane.f32.xlu0 %v38
  %v40 = vpop.xlane.xlu0 %39
  %v41 = vsel %vm18, %v37, 0.0
  %42 = vadd.xlane.f32.xlu0 %v41
  %v43 = vpop.xlane.xlu0 %42
  %v44 = vmul.f32 %v40, %v31
  %v45 = vmul.f32 %v43, %v31
  %v46 = vadd.f32 %v44, 1e-05
  %v47 = vadd.f32 %v45, 1e-05
  %v48 = vrsqrt.pop %v46
  %v49 = vmul.f32 %v48, %v46
  %v50 = vmul.f32 %v49, %v48
  %v51 = vmul.f32 0.5, %v50
  %v52 = vsub.f32 1.5, %v51
  %v53 = vmul.f32 %v48, %v52
  %vm54 = vweird.f32 %v46
  %vm55 = vweird.f32 %v48
  %vm56 = vmor %vm54, %vm55
  %v57 = vsel %vm56, %v48, %v53
  %v58 = vrsqrt.pop %v47
  %v59 = vmul.f32 %v58, %v47
  %v60 = vmul.f32 %v59, %v58
  %v61 = vmul.f32 0.5, %v60
  %v62 = vsub.f32 1.5, %v61
  %v63 = vmul.f32 %v58, %v62
  %vm64 = vweird.f32 %v47
  %vm65 = vweird.f32 %v58
  %vm66 = vmor %vm64, %vm65
  %v67 = vsel %vm66, %v58, %v63
  %v68 = vmul.f32 %v34, %v57
  %v69 = vmul.f32 %v35, %v67
  %v71 = vperm.slane %v16, 0
  %v73 = vmul.f32 %v68, %v71
  %v74 = vmul.f32 %v69, %v71
  %v76 = vperm.slane %v17, 0
  %v78 = vadd.f32 %v73, %v76
  %v79 = vadd.f32 %v74, %v76
  %80 = vst.msk [vmem:[%s3] sm:$0xff] %vm18, %v78
  %81 = vst.msk [vmem:[%s3 + $0x8] sm:$0xff] %vm18, %v79
  // Predicated region
  $region14: #{_lambda_.55} parent=0 // pred_check
    _
  $region15: #{_lambda_.55} parent=0 // pred_check_branch
    %83 = sbr.rel (0) target = $region17
  $region16: #{_lambda_.55} parent=0 // pred_region
    _
  $region17: #{_lambda_.55} parent=0 // pred_fallthru
    _
  // Predicated region
  $region18: #{_lambda_.55} parent=0 // pred_check
    _
  $region19: #{_lambda_.55} parent=0 // pred_check_branch
    %85 = sbr.rel (0) target = $region21
  $region20: #{_lambda_.55} parent=0 // pred_region
    _
  $region21: #{_lambda_.55} parent=0 // pred_fallthru
    _

// kernel: _lambda_.56
$region0: #{_lambda_.56}
  #allocation0 [shape = 'u32[]', space=smem, size = 0x4, offset = 0x4, fixed_abs, tag = 'smem constant byte address 0x4 - core index']
  #allocation1 [shape = 'u32[72,128]{1,0:T(1,128)}', space=vmem, size = 0x9000, scoped, tag = 'internal scratch']
  #allocation2 [shape = 'f32[16,96]{1,0:T(8,128)}', space=vmem, size = 0x2000, scoped, tag = 'scratch operand']
  %s0 = inlined_call_operand.vmem [shape: f32[16,32], index: 0, kind: input, shape index: {}]
  %s1 = inlined_call_operand.vmem [shape: f32[32,96], index: 1, kind: input, shape index: {}]
  %s2 = inlined_call_operand.vmem [shape: f32[1,96], index: 2, kind: input, shape index: {}]
  %s3 = inlined_call_operand.vmem [shape: f32[16,96], index: 3, kind: output, shape index: {}]
  %s4 = sld [smem:[#allocation0]]
  $region30: #{_lambda_.56} parent=0
    _
  %s6 = ssub.s32 1, %s4
  %s7 = scalar_select 0, %s6, %s4
  // Predicated region
  $region2: #{_lambda_.56} parent=0 // pred_check
    _
  $region3: #{_lambda_.56} parent=0 // pred_check_branch
    %9 = sbr.rel (0) target = $region5
  $region4: #{_lambda_.56} parent=0 // pred_region
    _
  $region5: #{_lambda_.56} parent=0 // pred_fallthru
    _
  // Predicated region
  $region6: #{_lambda_.56} parent=0 // pred_check
    _
  $region7: #{_lambda_.56} parent=0 // pred_check_branch
    %11 = sbr.rel (0) target = $region9
  $region8: #{_lambda_.56} parent=0 // pred_region
    _
  $region9: #{_lambda_.56} parent=0 // pred_fallthru
    _
  // Predicated region
  $region10: #{_lambda_.56} parent=0 // pred_check
    _
  $region11: #{_lambda_.56} parent=0 // pred_check_branch
    %13 = sbr.rel (0) target = $region13
  $region12: #{_lambda_.56} parent=0 // pred_region
    _
  $region13: #{_lambda_.56} parent=0 // pred_fallthru
    _
  %p14 = scmp.eq.s32.totalorder 0, 0
  // Predicated region
  $region14: #{_lambda_.56} parent=0 // pred_check
    %p15 = pneg %p14
  $region15: #{_lambda_.56} parent=0 // pred_check_branch
    %17 = sbr.rel (%p15) target = $region17
  $region16: #{_lambda_.56} parent=0 // pred_region
    %vm18 = vcmask 785408
    %19 = vst.msk [vmem:[#allocation2] sm:$0xff] %vm18, 0.0
    %20 = vst.msk [vmem:[#allocation2 + $0x8] sm:$0xff] %vm18, 0.0
  $region17: #{_lambda_.56} parent=0 // pred_fallthru
    _
  %v21 = vld [vmem:[#allocation2] sm:$0xff]
  %v22 = vld [vmem:[#allocation2 + $0x8] sm:$0xff]
  %v23 = vld [vmem:[%s0] sm:$0xff]
  %v24 = vld [vmem:[%s0 + $0x8] sm:$0xff]
  %v25 = vld [vmem:[%s1] sm:$0xff]
  %v26 = vld [vmem:[%s1 + $0x8] sm:$0xff]
  %v27 = vld [vmem:[%s1 + $0x10] sm:$0xff]
  %v28 = vld [vmem:[%s1 + $0x18] sm:$0xff]
  %vm29 = vcmask 261120
  %v31 = vsel %vm29, %v23, 0
  %v34 = vsel %vm29, %v24, 0
  %36 = vmatpush.msra.mxu0 0.0
  %37 = vmatpush.msra.mxu0 0.0
  %38 = vmatpush.msra.mxu0 0.0
  %39 = vmatpush.msra.mxu0 0.0
  %40 = vmatpush.msra.mxu0 0.0
  %41 = vmatpush.msra.mxu0 0.0
  %42 = vmatpush.msra.mxu0 0.0
  %43 = vmatpush.msra.mxu0 0.0
  %44 = vmatpush.msra.mxu0 0.0
  %45 = vmatpush.msra.mxu0 0.0
  %46 = vmatpush.msra.mxu0 0.0
  %47 = vmatpush.msra.mxu0 0.0
  %48 = vmatpush.msra.mxu0 %v28
  %49 = vmatpush.msra.mxu0 %v27
  %50 = vmatpush.msra.mxu0 %v26
  %51 = vmatpush.msra.mxu0 %v25
  %52 = vmatmul.f32.gmra.mxu0 %v31
  %v53 = vpop.f32.mrf.mxu0
  %v54 = vadd.f32 0.0, %v53
  %55 = vmatmul.f32.gmra.mxu0 %v34
  %v56 = vpop.f32.mrf.mxu0
  %v57 = vadd.f32 0.0, %v56
  %58 = vdwg.mxu0
  %v59 = vadd.f32 %v21, %v54
  %v60 = vadd.f32 %v22, %v57
  %vm61 = vcmask 785408
  %62 = vst.msk [vmem:[#allocation2] sm:$0xff] %vm61, %v59
  %63 = vst.msk [vmem:[#allocation2 + $0x8] sm:$0xff] %vm61, %v60
  // Predicated region
  $region18: #{_lambda_.56} parent=0 // pred_check
    %p64 = pneg %p14
  $region19: #{_lambda_.56} parent=0 // pred_check_branch
    %66 = sbr.rel (%p64) target = $region21
  $region20: #{_lambda_.56} parent=0 // pred_region
    %v67 = vld [vmem:[#allocation2] sm:$0xff]
    %v68 = vld [vmem:[#allocation2 + $0x8] sm:$0xff]
    %v69 = vld [vmem:[%s2] sm:$0x1]
    %v71 = vperm.slane %v69, 0
    %v73 = vadd.f32 %v67, %v71
    %v74 = vadd.f32 %v68, %v71
    %75 = vst.msk [vmem:[%s3] sm:$0xff] %vm61, %v73
    %76 = vst.msk [vmem:[%s3 + $0x8] sm:$0xff] %vm61, %v74
  $region21: #{_lambda_.56} parent=0 // pred_fallthru
    _
  // Predicated region
  $region22: #{_lambda_.56} parent=0 // pred_check
    _
  $region23: #{_lambda_.56} parent=0 // pred_check_branch
    %78 = sbr.rel (0) target = $region25
  $region24: #{_lambda_.56} parent=0 // pred_region
    _
  $region25: #{_lambda_.56} parent=0 // pred_fallthru
    _
  // Predicated region
  $region26: #{_lambda_.56} parent=0 // pred_check
    _
  $region27: #{_lambda_.56} parent=0 // pred_check_branch
    %80 = sbr.rel (0) target = $region29
  $region28: #{_lambda_.56} parent=0 // pred_region
    _
  $region29: #{_lambda_.56} parent=0 // pred_fallthru
    _

// kernel: _lambda_.57
$region0: #{_lambda_.57}
  #allocation0 [shape = 'u32[]', space=smem, size = 0x4, offset = 0x4, fixed_abs, tag = 'smem constant byte address 0x4 - core index']
  #allocation1 [shape = 'u32[72,128]{1,0:T(1,128)}', space=vmem, size = 0x9000, scoped, tag = 'internal scratch']
  %s0 = inlined_call_operand.vmem [shape: f32[2,1,8], index: 0, kind: input, shape index: {}]
  %s1 = inlined_call_operand.vmem [shape: f32[2,8,96], index: 1, kind: input, shape index: {}, may-alias: {1,2}]
  %s2 = inlined_call_operand.vmem [shape: f32[2,8,96], index: 2, kind: input, shape index: {}, may-alias: {1,2}]
  %s3 = inlined_call_operand.vmem [shape: f32[2,8,32], index: 3, kind: output, shape index: {}]
  %s4 = sld [smem:[#allocation0]]
  $region45: #{_lambda_.57} parent=0
    _
  %s6 = ssub.s32 1, %s4
  %s7 = scalar_select 0, %s6, %s4
  loop: start=0, step=1, limit=4
  $region2: #{_lambda_.57} parent=0 // loop_pre_header
    _
  $region3: #{_lambda_.57} parent=0 // loop_header
    %s9 = sphi 0, %s13
    %p10 = scmp.ge.s32.totalorder %s9, 4
    %s16 = sphi 0, %s35
    %s17 = sphi 0, %s31
    %s18 = sphi 0, %s27
    %s19 = sphi 0, %s16
    %s20 = sphi 0, %s17
    %s21 = sphi 0, %s18
    %s22 = sphi 0, %s19
    %s23 = sphi 0, %s20
    %s24 = sphi 0, %s21
    %s38 = sphi 0, %s40
    %s41 = sphi 0, %s38
    %s42 = sphi 0, %s41
    %s58 = sphi 0, %s42
    %s68 = sphi 0, %s70
    %s71 = sphi 0, %s68
    %s72 = sphi 0, %s71
    %s88 = sphi 0, %s72
    %s96 = sphi 0, %s98
    %s99 = sphi 0, %s96
    %s100 = sphi 0, %s99
    %s116 = sphi 0, %s100
    %s126 = sphi 0, %s128
    %s129 = sphi 0, %s126
    %s130 = sphi 0, %s129
    %s146 = sphi 0, %s130
  $region4: #{_lambda_.57} parent=0 // loop_header_branch
    %12 = sbr.rel (%p10) target = $region8
  $region5: #{_lambda_.57} parent=0 // loop_body
    %s14 = ssub.s32 %s9, 1
    %s15 = ssub.s32 %s9, 2
    %s25 = sadd.s32 1, %s18
    %p26 = scmp.ge.s32.totalorder %s25, 1
    %s27 = scalar_select %p26, 0, %s25
    %s28 = sadd.s32 1, %s17
    %s29 = scalar_select %p26, %s28, %s17
    %p30 = scmp.ge.s32.totalorder %s29, 1
    %s31 = scalar_select %p30, 0, %s29
    %s32 = sadd.s32 1, %s16
    %s33 = scalar_select %p30, %s32, %s16
    %p34 = scmp.ge.s32.totalorder %s33, 2
    %s35 = scalar_select %p34, 0, %s33
    %s36 = ssub.s32 %s16, %s35
    %p37 = scmp.eq.s32.totalorder %s36, 0
    %s39 = sadd.s32 %s38, 1
    %s40 = scalar_select %p37, %s38, %s39
    %p43 = pneg %p37
    %p44 = scmp.eq.s32.totalorder %s9, 1
    %p45 = por %p43, %p44
    %p46 = scmp.ne.s32.totalorder %s38, %s41
    %p47 = scmp.eq.s32.totalorder %s9, 0
    %p48 = por %p46, %p47
    %p49 = scmp.ne.s32.totalorder %s38, %s41
    %p50 = scmp.eq.s32.totalorder %s14, 1
    %p51 = por %p49, %p50
    %p52 = scmp.ne.s32.totalorder %s41, %s42
    %p53 = scmp.eq.s32.totalorder %s14, 0
    %p54 = por %p52, %p53
    %p55 = scmp.ne.s32.totalorder %s41, %s42
    %p56 = scmp.eq.s32.totalorder %s15, 1
    %p57 = por %p55, %p56
    %p59 = scmp.ne.s32.totalorder %s42, %s58
    %p60 = scmp.eq.s32.totalorder %s15, 0
    %p61 = por %p59, %p60
    %s62 = ssub.s32 %s16, %s35
    %s63 = ssub.s32 %s18, %s27
    %s64 = sor.u32 %s62, %s63
    %s65 = ssub.s32 %s17, %s31
    %s66 = sor.u32 %s64, %s65
    %p67 = scmp.eq.s32.totalorder %s66, 0
    %s69 = sadd.s32 %s68, 1
    %s70 = scalar_select %p67, %s68, %s69
    %p73 = pneg %p67
    %p74 = scmp.eq.s32.totalorder %s9, 1
    %p75 = por %p73, %p74
    %p76 = scmp.ne.s32.totalorder %s68, %s71
    %p77 = scmp.eq.s32.totalorder %s9, 0
    %p78 = por %p76, %p77
    %p79 = scmp.ne.s32.totalorder %s68, %s71
    %p80 = scmp.eq.s32.totalorder %s14, 1
    %p81 = por %p79, %p80
    %p82 = scmp.ne.s32.totalorder %s71, %s72
    %p83 = scmp.eq.s32.totalorder %s14, 0
    %p84 = por %p82, %p83
    %p85 = scmp.ne.s32.totalorder %s71, %s72
    %p86 = scmp.eq.s32.totalorder %s15, 1
    %p87 = por %p85, %p86
    %p89 = scmp.ne.s32.totalorder %s72, %s88
    %p90 = scmp.eq.s32.totalorder %s15, 0
    %p91 = por %p89, %p90
    %s92 = ssub.s32 %s16, %s35
    %s93 = ssub.s32 %s17, %s31
    %s94 = sor.u32 %s92, %s93
    %p95 = scmp.eq.s32.totalorder %s94, 0
    %s97 = sadd.s32 %s96, 1
    %s98 = scalar_select %p95, %s96, %s97
    %p101 = pneg %p95
    %p102 = scmp.eq.s32.totalorder %s9, 1
    %p103 = por %p101, %p102
    %p104 = scmp.ne.s32.totalorder %s96, %s99
    %p105 = scmp.eq.s32.totalorder %s9, 0
    %p106 = por %p104, %p105
    %p107 = scmp.ne.s32.totalorder %s96, %s99
    %p108 = scmp.eq.s32.totalorder %s14, 1
    %p109 = por %p107, %p108
    %p110 = scmp.ne.s32.totalorder %s99, %s100
    %p111 = scmp.eq.s32.totalorder %s14, 0
    %p112 = por %p110, %p111
    %p113 = scmp.ne.s32.totalorder %s99, %s100
    %p114 = scmp.eq.s32.totalorder %s15, 1
    %p115 = por %p113, %p114
    %p117 = scmp.ne.s32.totalorder %s100, %s116
    %p118 = scmp.eq.s32.totalorder %s15, 0
    %p119 = por %p117, %p118
    %s120 = ssub.s32 %s16, %s35
    %s121 = ssub.s32 %s18, %s27
    %s122 = sor.u32 %s120, %s121
    %s123 = ssub.s32 %s17, %s31
    %s124 = sor.u32 %s122, %s123
    %p125 = scmp.eq.s32.totalorder %s124, 0
    %s127 = sadd.s32 %s126, 1
    %s128 = scalar_select %p125, %s126, %s127
    %p131 = pneg %p125
    %p132 = scmp.eq.s32.totalorder %s9, 1
    %p133 = por %p131, %p132
    %p134 = scmp.ne.s32.totalorder %s126, %s129
    %p135 = scmp.eq.s32.totalorder %s9, 0
    %p136 = por %p134, %p135
    %p137 = scmp.ne.s32.totalorder %s126, %s129
    %p138 = scmp.eq.s32.totalorder %s14, 1
    %p139 = por %p137, %p138
    %p140 = scmp.ne.s32.totalorder %s129, %s130
    %p141 = scmp.eq.s32.totalorder %s14, 0
    %p142 = por %p140, %p141
    %p143 = scmp.ne.s32.totalorder %s129, %s130
    %p144 = scmp.eq.s32.totalorder %s15, 1
    %p145 = por %p143, %p144
    %p147 = scmp.ne.s32.totalorder %s130, %s146
    %p148 = scmp.eq.s32.totalorder %s15, 0
    %p149 = por %p147, %p148
    %p150 = scmp.le.s32.totalorder 1, %s9
    %p151 = scmp.lt.s32.totalorder %s9, 3
    %p152 = pnand %p150, %p151
    %p153 = pneg %p152
    // Predicated region
    $region9: #{_lambda_.57} parent=5 // pred_check
      _
    $region10: #{_lambda_.57} parent=5 // pred_check_branch
      %155 = sbr.rel (%p152) target = $region12
    $region11: #{_lambda_.57} parent=5 // pred_region
      %s156 = ssub.s32 %s9, 1
    $region12: #{_lambda_.57} parent=5 // pred_fallthru
      _
    %p157 = scmp.lt.s32.totalorder %s9, 2
    // Predicated region
    $region13: #{_lambda_.57} parent=5 // pred_check
      %p158 = pneg %p157
    $region14: #{_lambda_.57} parent=5 // pred_check_branch
      %160 = sbr.rel (%p158) target = $region16
    $region15: #{_lambda_.57} parent=5 // pred_region
      // Predicated region
      $region17: #{_lambda_.57} parent=15 // pred_check
        %p161 = pneg %p48
      $region18: #{_lambda_.57} parent=15 // pred_check_branch
        %163 = sbr.rel (%p161) target = $region20
      $region19: #{_lambda_.57} parent=15 // pred_region
        %p164 = scmp.lt.s32.totalorder %s16, 1
        %s165 = scalar_select %p164, %s16, 1
        %s166 = scalar_lea.vmem %s0, %s165
      $region20: #{_lambda_.57} parent=15 // pred_fallthru
        _
      // Predicated region
      $region21: #{_lambda_.57} parent=15 // pred_check
        %p167 = pneg %p78
      $region22: #{_lambda_.57} parent=15 // pred_check_branch
        %169 = sbr.rel (%p167) target = $region24
      $region23: #{_lambda_.57} parent=15 // pred_region
        %p170 = scmp.lt.s32.totalorder %s16, 1
        %s171 = scalar_select %p170, %s16, 1
        %p172 = scmp.lt.s32.totalorder %s18, 0
        %s173 = scalar_select %p172, %s18, 0
        %p174 = scmp.lt.s32.totalorder %s17, 0
        %s175 = scalar_select %p174, %s17, 0
        %s176 = sadd.s32 %s175, %s173
        %s177 = sadd.s32 %s176, %s171
        %s178 = smul.addr %s177, 8
        %s179 = scalar_lea.vmem %s1, %s178
      $region24: #{_lambda_.57} parent=15 // pred_fallthru
        _
      // Predicated region
      $region25: #{_lambda_.57} parent=15 // pred_check
        %p180 = pneg %p106
      $region26: #{_lambda_.57} parent=15 // pred_check_branch
        %182 = sbr.rel (%p180) target = $region28
      $region27: #{_lambda_.57} parent=15 // pred_region
        %p183 = scmp.lt.s32.totalorder %s16, 1
        %s184 = scalar_select %p183, %s16, 1
        %p185 = scmp.lt.s32.totalorder %s17, 0
        %s186 = scalar_select %p185, %s17, 0
        %s187 = sadd.s32 %s186, %s184
        %s188 = smul.addr %s187, 8
        %s189 = scalar_lea.vmem %s2, %s188
      $region28: #{_lambda_.57} parent=15 // pred_fallthru
        _
    $region16: #{_lambda_.57} parent=5 // pred_fallthru
      _
    %p190 = scmp.le.s32.totalorder 1, %s9
    %p191 = scmp.lt.s32.totalorder %s9, 3
    %p192 = pnand %p190, %p191
    %p193 = pneg %p192
    // Predicated region
    $region29: #{_lambda_.57} parent=5 // pred_check
      _
    $region30: #{_lambda_.57} parent=5 // pred_check_branch
      %195 = sbr.rel (%p192) target = $region32
    $region31: #{_lambda_.57} parent=5 // pred_region
      %s196 = ssub.s32 %s9, 1
      %p197 = scmp.lt.s32.totalorder %s19, 1
      %s198 = scalar_select %p197, %s19, 1
      %s199 = scalar_lea.vmem %s0, %s198
      %p200 = pneg %p54
      %p201 = pneg %p51
      %p202 = scmp.lt.s32.totalorder %s19, 1
      %s203 = scalar_select %p202, %s19, 1
      %p204 = scmp.lt.s32.totalorder %s21, 0
      %s205 = scalar_select %p204, %s21, 0
      %p206 = scmp.lt.s32.totalorder %s20, 0
      %s207 = scalar_select %p206, %s20, 0
      %s208 = sadd.s32 %s207, %s205
      %s209 = sadd.s32 %s208, %s203
      %s210 = smul.addr %s209, 8
      %s211 = scalar_lea.vmem %s1, %s210
      %p212 = pneg %p84
      %p213 = pneg %p81
      %p214 = scmp.lt.s32.totalorder %s19, 1
      %s215 = scalar_select %p214, %s19, 1
      %p216 = scmp.lt.s32.totalorder %s20, 0
      %s217 = scalar_select %p216, %s20, 0
      %s218 = sadd.s32 %s217, %s215
      %s219 = smul.addr %s218, 8
      %s220 = scalar_lea.vmem %s2, %s219
      %p221 = pneg %p112
      %p222 = pneg %p109
      %p223 = pneg %p142
      %p224 = pneg %p139
      %p225 = scmp.lt.s32.totalorder %s19, 1
      %s226 = scalar_select %p225, %s19, 1
      %p227 = scmp.lt.s32.totalorder %s21, 0
      %s228 = scalar_select %p227, %s21, 0
      %p229 = scmp.lt.s32.totalorder %s20, 0
      %s230 = scalar_select %p229, %s20, 0
      %s231 = sadd.s32 %s230, %s228
      %s232 = sadd.s32 %s231, %s226
      %s233 = smul.addr %s232, 8
      %s234 = scalar_lea.vmem %s3, %s233
      %p235 = scmp.lt.s32.totalorder %s19, 1
      %s236 = scalar_select %p235, %s19, 1
      %s237 = scalar_lea.vmem %s0, %s236
      %p238 = scmp.lt.s32.totalorder %s19, 1
      %s239 = scalar_select %p238, %s19, 1
      %p240 = scmp.lt.s32.totalorder %s21, 0
      %s241 = scalar_select %p240, %s21, 0
      %p242 = scmp.lt.s32.totalorder %s20, 0
      %s243 = scalar_select %p242, %s20, 0
      %s244 = sadd.s32 %s243, %s241
      %s245 = sadd.s32 %s244, %s239
      %s246 = smul.addr %s245, 8
      %s247 = scalar_lea.vmem %s1, %s246
      %p248 = scmp.lt.s32.totalorder %s19, 1
      %s249 = scalar_select %p248, %s19, 1
      %p250 = scmp.lt.s32.totalorder %s20, 0
      %s251 = scalar_select %p250, %s20, 0
      %s252 = sadd.s32 %s251, %s249
      %s253 = smul.addr %s252, 8
      %s254 = scalar_lea.vmem %s2, %s253
      %p255 = scmp.lt.s32.totalorder %s19, 1
      %s256 = scalar_select %p255, %s19, 1
      %p257 = scmp.lt.s32.totalorder %s21, 0
      %s258 = scalar_select %p257, %s21, 0
      %p259 = scmp.lt.s32.totalorder %s20, 0
      %s260 = scalar_select %p259, %s20, 0
      %s261 = sadd.s32 %s260, %s258
      %s262 = sadd.s32 %s261, %s256
      %s263 = smul.addr %s262, 8
      %s264 = scalar_lea.vmem %s3, %s263
      %v265 = vld [vmem:[%s237] sm:$0x1]
      %v266 = vld [vmem:[%s247] sm:$0xff]
      %v267 = vld [vmem:[%s254] sm:$0xff]
      %v269 = vperm.slane %v265, 0
      %272 = vrot.lane.b32.xlu0 %v267, 120
      %v273 = vpop.permute.xlu0 %272
      %vm274 = vcmask 64512
      %v276 = vsel %vm274, %v266, 0
      %v278 = vsel %vm274, %v273, 0
      %280 = vmatpush.xpose.msra.mxu0 0.0
      %281 = vmatpush.xpose.msra.mxu0 0.0
      %282 = vmatpush.xpose.msra.mxu0 0.0
      %283 = vmatpush.xpose.msra.mxu0 0.0
      %284 = vmatpush.xpose.msra.mxu0 0.0
      %285 = vmatpush.xpose.msra.mxu0 0.0
      %286 = vmatpush.xpose.msra.mxu0 0.0
      %287 = vmatpush.xpose.msra.mxu0 0.0
      %288 = vmatpush.xpose.msra.mxu0 0.0
      %289 = vmatpush.xpose.msra.mxu0 0.0
      %290 = vmatpush.xpose.msra.mxu0 0.0
      %291 = vmatpush.xpose.msra.mxu0 0.0
      %292 = vmatpush.xpose.msra.mxu0 0.0
      %293 = vmatpush.xpose.msra.mxu0 0.0
      %294 = vmatpush.xpose.msra.mxu0 0.0
      %295 = vmatpush.xpose.msra.mxu0 %v278
      %296 = vmatmul.f32.gmra.mxu0 %v276
      %v297 = vpop.f32.mrf.mxu0
      %v298 = vadd.f32 %v269, %v297
      %299 = vdwg.mxu0
      %s300 = smul.u32 %s21, 8
      %v301 = vlaneseq
      %v302 = vshrl.u32 %v301, 7
      %v303 = vstv %s300
      %v304 = vadd.s32 %v303, %v302
      %v305 = vlaneseq
      %v306 = vand.u32 %v305, 127
      %vm307 = vcmp.gt.s32.totalorder %v306, %v304
      %v308 = vsel %vm307, -3.4028235e+38, %v298
      %v309 = vsel %vm274, %v308, -inf
      %310 = vmax.xlane.f32.xlu0 %v309
      %v311 = vpop.xlane.xlu0 %310
      %v312 = vsub.f32 %v308, %v311
      %v313 = vmul.f32 %v312, 1.442695
      %v314 = vpow.pop %v313
      %v315 = vsel %vm274, %v314, 0.0
      %316 = vadd.xlane.f32.xlu0 %v315
      %v317 = vpop.xlane.xlu0 %316
      %v318 = vrcp.pop %v317
      %v319 = vmul.f32 %v314, %v318
      %320 = vrot.lane.b32.xlu0 %v267, 112
      %v321 = vpop.permute.xlu0 %320
      %v324 = vsel %vm274, %v319, 0
      %326 = vmatpush.msra.mxu0 0.0
      %327 = vmatpush.msra.mxu0 0.0
      %328 = vmatpush.msra.mxu0 0.0
      %329 = vmatpush.msra.mxu0 0.0
      %330 = vmatpush.msra.mxu0 0.0
      %331 = vmatpush.msra.mxu0 0.0
      %332 = vmatpush.msra.mxu0 0.0
      %333 = vmatpush.msra.mxu0 0.0
      %334 = vmatpush.msra.mxu0 0.0
      %335 = vmatpush.msra.mxu0 0.0
      %336 = vmatpush.msra.mxu0 0.0
      %337 = vmatpush.msra.mxu0 0.0
      %338 = vmatpush.msra.mxu0 0.0
      %339 = vmatpush.msra.mxu0 0.0
      %340 = vmatpush.msra.mxu0 0.0
      %341 = vmatpush.msra.mxu0 %v321
      %342 = vmatmul.f32.gmra.mxu0 %v324
      %v343 = vpop.f32.mrf.mxu0
      %v344 = vadd.f32 0.0, %v343
      %345 = vdwg.mxu0
      %346 = vrot.lane.b32.xlu0 %v266, 104
      %v347 = vpop.permute.xlu0 %346
      %348 = vrot.lane.b32.xlu0 %v267, 96
      %v349 = vpop.permute.xlu0 %348
      %v350 = vsel %vm274, %v347, 0
      %v352 = vsel %vm274, %v349, 0
      %354 = vmatpush.xpose.msra.mxu0 0.0
      %355 = vmatpush.xpose.msra.mxu0 0.0
      %356 = vmatpush.xpose.msra.mxu0 0.0
      %357 = vmatpush.xpose.msra.mxu0 0.0
      %358 = vmatpush.xpose.msra.mxu0 0.0
      %359 = vmatpush.xpose.msra.mxu0 0.0
      %360 = vmatpush.xpose.msra.mxu0 0.0
      %361 = vmatpush.xpose.msra.mxu0 0.0
      %362 = vmatpush.xpose.msra.mxu0 0.0
      %363 = vmatpush.xpose.msra.mxu0 0.0
      %364 = vmatpush.xpose.msra.mxu0 0.0
      %365 = vmatpush.xpose.msra.mxu0 0.0
      %366 = vmatpush.xpose.msra.mxu0 0.0
      %367 = vmatpush.xpose.msra.mxu0 0.0
      %368 = vmatpush.xpose.msra.mxu0 0.0
      %369 = vmatpush.xpose.msra.mxu0 %v352
      %370 = vmatmul.f32.gmra.mxu0 %v350
      %v371 = vpop.f32.mrf.mxu0
      %v372 = vadd.f32 %v269, %v371
      %373 = vdwg.mxu0
      %v374 = vsel %vm307, -3.4028235e+38, %v372
      %v375 = vsel %vm274, %v374, -inf
      %376 = vmax.xlane.f32.xlu0 %v375
      %v377 = vpop.xlane.xlu0 %376
      %v378 = vsub.f32 %v374, %v377
      %v379 = vmul.f32 %v378, 1.442695
      %v380 = vpow.pop %v379
      %v381 = vsel %vm274, %v380, 0.0
      %382 = vadd.xlane.f32.xlu0 %v381
      %v383 = vpop.xlane.xlu0 %382
      %v384 = vrcp.pop %v383
      %v385 = vmul.f32 %v380, %v384
      %386 = vrot.lane.b32.xlu0 %v267, 88
      %v387 = vpop.permute.xlu0 %386
      %v390 = vsel %vm274, %v385, 0
      %392 = vmatpush.msra.mxu0 0.0
      %393 = vmatpush.msra.mxu0 0.0
      %394 = vmatpush.msra.mxu0 0.0
      %395 = vmatpush.msra.mxu0 0.0
      %396 = vmatpush.msra.mxu0 0.0
      %397 = vmatpush.msra.mxu0 0.0
      %398 = vmatpush.msra.mxu0 0.0
      %399 = vmatpush.msra.mxu0 0.0
      %400 = vmatpush.msra.mxu0 0.0
      %401 = vmatpush.msra.mxu0 0.0
      %402 = vmatpush.msra.mxu0 0.0
      %403 = vmatpush.msra.mxu0 0.0
      %404 = vmatpush.msra.mxu0 0.0
      %405 = vmatpush.msra.mxu0 0.0
      %406 = vmatpush.msra.mxu0 0.0
      %407 = vmatpush.msra.mxu0 %v387
      %408 = vmatmul.f32.gmra.mxu0 %v390
      %v409 = vpop.f32.mrf.mxu0
      %v410 = vadd.f32 0.0, %v409
      %411 = vdwg.mxu0
      %412 = vrot.lane.b32.xlu0 %v266, 80
      %v413 = vpop.permute.xlu0 %412
      %414 = vrot.lane.b32.xlu0 %v267, 72
      %v415 = vpop.permute.xlu0 %414
      %v416 = vsel %vm274, %v413, 0
      %v418 = vsel %vm274, %v415, 0
      %420 = vmatpush.xpose.msra.mxu0 0.0
      %421 = vmatpush.xpose.msra.mxu0 0.0
      %422 = vmatpush.xpose.msra.mxu0 0.0
      %423 = vmatpush.xpose.msra.mxu0 0.0
      %424 = vmatpush.xpose.msra.mxu0 0.0
      %425 = vmatpush.xpose.msra.mxu0 0.0
      %426 = vmatpush.xpose.msra.mxu0 0.0
      %427 = vmatpush.xpose.msra.mxu0 0.0
      %428 = vmatpush.xpose.msra.mxu0 0.0
      %429 = vmatpush.xpose.msra.mxu0 0.0
      %430 = vmatpush.xpose.msra.mxu0 0.0
      %431 = vmatpush.xpose.msra.mxu0 0.0
      %432 = vmatpush.xpose.msra.mxu0 0.0
      %433 = vmatpush.xpose.msra.mxu0 0.0
      %434 = vmatpush.xpose.msra.mxu0 0.0
      %435 = vmatpush.xpose.msra.mxu0 %v418
      %436 = vmatmul.f32.gmra.mxu0 %v416
      %v437 = vpop.f32.mrf.mxu0
      %v438 = vadd.f32 %v269, %v437
      %439 = vdwg.mxu0
      %v440 = vsel %vm307, -3.4028235e+38, %v438
      %v441 = vsel %vm274, %v440, -inf
      %442 = vmax.xlane.f32.xlu0 %v441
      %v443 = vpop.xlane.xlu0 %442
      %v444 = vsub.f32 %v440, %v443
      %v445 = vmul.f32 %v444, 1.442695
      %v446 = vpow.pop %v445
      %v447 = vsel %vm274, %v446, 0.0
      %448 = vadd.xlane.f32.xlu0 %v447
      %v449 = vpop.xlane.xlu0 %448
      %v450 = vrcp.pop %v449
      %v451 = vmul.f32 %v446, %v450
      %452 = vrot.lane.b32.xlu0 %v267, 64
      %v453 = vpop.permute.xlu0 %452
      %v456 = vsel %vm274, %v451, 0
      %458 = vmatpush.msra.mxu0 0.0
      %459 = vmatpush.msra.mxu0 0.0
      %460 = vmatpush.msra.mxu0 0.0
      %461 = vmatpush.msra.mxu0 0.0
      %462 = vmatpush.msra.mxu0 0.0
      %463 = vmatpush.msra.mxu0 0.0
      %464 = vmatpush.msra.mxu0 0.0
      %465 = vmatpush.msra.mxu0 0.0
      %466 = vmatpush.msra.mxu0 0.0
      %467 = vmatpush.msra.mxu0 0.0
      %468 = vmatpush.msra.mxu0 0.0
      %469 = vmatpush.msra.mxu0 0.0
      %470 = vmatpush.msra.mxu0 0.0
      %471 = vmatpush.msra.mxu0 0.0
      %472 = vmatpush.msra.mxu0 0.0
      %473 = vmatpush.msra.mxu0 %v453
      %474 = vmatmul.f32.gmra.mxu0 %v456
      %v475 = vpop.f32.mrf.mxu0
      %v476 = vadd.f32 0.0, %v475
      %477 = vdwg.mxu0
      %478 = vrot.lane.b32.xlu0 %v266, 56
      %v479 = vpop.permute.xlu0 %478
      %480 = vrot.lane.b32.xlu0 %v267, 48
      %v481 = vpop.permute.xlu0 %480
      %v482 = vsel %vm274, %v479, 0
      %v484 = vsel %vm274, %v481, 0
      %486 = vmatpush.xpose.msra.mxu0 0.0
      %487 = vmatpush.xpose.msra.mxu0 0.0
      %488 = vmatpush.xpose.msra.mxu0 0.0
      %489 = vmatpush.xpose.msra.mxu0 0.0
      %490 = vmatpush.xpose.msra.mxu0 0.0
      %491 = vmatpush.xpose.msra.mxu0 0.0
      %492 = vmatpush.xpose.msra.mxu0 0.0
      %493 = vmatpush.xpose.msra.mxu0 0.0
      %494 = vmatpush.xpose.msra.mxu0 0.0
      %495 = vmatpush.xpose.msra.mxu0 0.0
      %496 = vmatpush.xpose.msra.mxu0 0.0
      %497 = vmatpush.xpose.msra.mxu0 0.0
      %498 = vmatpush.xpose.msra.mxu0 0.0
      %499 = vmatpush.xpose.msra.mxu0 0.0
      %500 = vmatpush.xpose.msra.mxu0 0.0
      %501 = vmatpush.xpose.msra.mxu0 %v484
      %502 = vmatmul.f32.gmra.mxu0 %v482
      %v503 = vpop.f32.mrf.mxu0
      %v504 = vadd.f32 %v269, %v503
      %505 = vdwg.mxu0
      %v506 = vsel %vm307, -3.4028235e+38, %v504
      %v507 = vsel %vm274, %v506, -inf
      %508 = vmax.xlane.f32.xlu0 %v507
      %v509 = vpop.xlane.xlu0 %508
      %v510 = vsub.f32 %v506, %v509
      %v511 = vmul.f32 %v510, 1.442695
      %v512 = vpow.pop %v511
      %v513 = vsel %vm274, %v512, 0.0
      %514 = vadd.xlane.f32.xlu0 %v513
      %v515 = vpop.xlane.xlu0 %514
      %v516 = vrcp.pop %v515
      %v517 = vmul.f32 %v512, %v516
      %518 = vrot.lane.b32.xlu0 %v267, 40
      %v519 = vpop.permute.xlu0 %518
      %v522 = vsel %vm274, %v517, 0
      %524 = vmatpush.msra.mxu0 0.0
      %525 = vmatpush.msra.mxu0 0.0
      %526 = vmatpush.msra.mxu0 0.0
      %527 = vmatpush.msra.mxu0 0.0
      %528 = vmatpush.msra.mxu0 0.0
      %529 = vmatpush.msra.mxu0 0.0
      %530 = vmatpush.msra.mxu0 0.0
      %531 = vmatpush.msra.mxu0 0.0
      %532 = vmatpush.msra.mxu0 0.0
      %533 = vmatpush.msra.mxu0 0.0
      %534 = vmatpush.msra.mxu0 0.0
      %535 = vmatpush.msra.mxu0 0.0
      %536 = vmatpush.msra.mxu0 0.0
      %537 = vmatpush.msra.mxu0 0.0
      %538 = vmatpush.msra.mxu0 0.0
      %539 = vmatpush.msra.mxu0 %v519
      %540 = vmatmul.f32.gmra.mxu0 %v522
      %v541 = vpop.f32.mrf.mxu0
      %v542 = vadd.f32 0.0, %v541
      %543 = vdwg.mxu0
      %545 = vrot.lane.b32.xlu0 %v410, 8
      %v546 = vpop.permute.xlu0 %545
      %549 = vrot.lane.b32.xlu0 %v476, 16
      %v550 = vpop.permute.xlu0 %549
      %553 = vrot.lane.b32.xlu0 %v542, 24
      %v554 = vpop.permute.xlu0 %553
      %v556 = vsel %vm274, %v344, %v546
      %vm557 = vcmask 130048
      %v558 = vsel %vm557, %v556, %v550
      %vm559 = vcmask 195584
      %v560 = vsel %vm559, %v558, %v554
      %vm561 = vcmask 261120
      %562 = vst.msk [vmem:[%s264] sm:$0xff] %vm561, %v560
      %p563 = scmp.lt.s32.totalorder %s19, 1
      %s564 = scalar_select %p563, %s19, 1
      %p565 = scmp.lt.s32.totalorder %s21, 0
      %s566 = scalar_select %p565, %s21, 0
      %p567 = scmp.lt.s32.totalorder %s20, 0
      %s568 = scalar_select %p567, %s20, 0
      %s569 = sadd.s32 %s568, %s566
      %s570 = sadd.s32 %s569, %s564
      %s571 = smul.addr %s570, 8
      %s572 = scalar_lea.vmem %s3, %s571
      // Predicated region
      $region33: #{_lambda_.57} parent=31 // pred_check
        %p573 = pneg %p139
      $region34: #{_lambda_.57} parent=31 // pred_check_branch
        %575 = sbr.rel (%p573) target = $region36
      $region35: #{_lambda_.57} parent=31 // pred_region
        _
      $region36: #{_lambda_.57} parent=31 // pred_fallthru
        _
    $region32: #{_lambda_.57} parent=5 // pred_fallthru
      _
    %p576 = scmp.le.s32.totalorder 2, %s9
    // Predicated region
    $region37: #{_lambda_.57} parent=5 // pred_check
      %p577 = pneg %p576
    $region38: #{_lambda_.57} parent=5 // pred_check_branch
      %579 = sbr.rel (%p577) target = $region40
    $region39: #{_lambda_.57} parent=5 // pred_region
      %s580 = ssub.s32 %s9, 2
      // Predicated region
      $region41: #{_lambda_.57} parent=39 // pred_check
        %p581 = pneg %p145
      $region42: #{_lambda_.57} parent=39 // pred_check_branch
        %583 = sbr.rel (%p581) target = $region44
      $region43: #{_lambda_.57} parent=39 // pred_region
        %p584 = scmp.lt.s32.totalorder %s22, 1
        %s585 = scalar_select %p584, %s22, 1
        %p586 = scmp.lt.s32.totalorder %s24, 0
        %s587 = scalar_select %p586, %s24, 0
        %p588 = scmp.lt.s32.totalorder %s23, 0
        %s589 = scalar_select %p588, %s23, 0
        %s590 = sadd.s32 %s589, %s587
        %s591 = sadd.s32 %s590, %s585
        %s592 = smul.addr %s591, 8
        %s593 = scalar_lea.vmem %s3, %s592
      $region44: #{_lambda_.57} parent=39 // pred_fallthru
        _
    $region40: #{_lambda_.57} parent=5 // pred_fallthru
      _
  $region6: #{_lambda_.57} parent=0 // loop_footer
    %s13 = sadd.s32 1, %s9
  $region7: #{_lambda_.57} parent=0 // loop_footer_branch
    %8 = sbr.rel target = $region3
  $region8: #{_lambda_.57} parent=0 // loop_exit
    _

// kernel: _lambda_.59
$region0: #{_lambda_.59}
  #allocation0 [shape = 'u32[]', space=smem, size = 0x4, offset = 0x4, fixed_abs, tag = 'smem constant byte address 0x4 - core index']
  #allocation1 [shape = 'u32[72,128]{1,0:T(1,128)}', space=vmem, size = 0x9000, scoped, tag = 'internal scratch']
  %s0 = inlined_call_operand.vmem [shape: f32[16,32], index: 0, kind: input, shape index: {}]
  %s1 = inlined_call_operand.vmem [shape: f32[16,32], index: 1, kind: input, shape index: {}]
  %s2 = inlined_call_operand.vmem [shape: f32[1,32], index: 2, kind: input, shape index: {}]
  %s3 = inlined_call_operand.vmem [shape: f32[1,32], index: 3, kind: input, shape index: {}]
  %s4 = inlined_call_operand.vmem [shape: f32[16,32], index: 4, kind: output, shape index: {}]
  %s5 = sld [smem:[#allocation0]]
  $region26: #{_lambda_.59} parent=0
    _
  %s7 = ssub.s32 1, %s5
  %s8 = scalar_select 0, %s7, %s5
  // Predicated region
  $region2: #{_lambda_.59} parent=0 // pred_check
    _
  $region3: #{_lambda_.59} parent=0 // pred_check_branch
    %10 = sbr.rel (0) target = $region5
  $region4: #{_lambda_.59} parent=0 // pred_region
    _
  $region5: #{_lambda_.59} parent=0 // pred_fallthru
    _
  // Predicated region
  $region6: #{_lambda_.59} parent=0 // pred_check
    _
  $region7: #{_lambda_.59} parent=0 // pred_check_branch
    %12 = sbr.rel (0) target = $region9
  $region8: #{_lambda_.59} parent=0 // pred_region
    _
  $region9: #{_lambda_.59} parent=0 // pred_fallthru
    _
  // Predicated region
  $region10: #{_lambda_.59} parent=0 // pred_check
    _
  $region11: #{_lambda_.59} parent=0 // pred_check_branch
    %14 = sbr.rel (0) target = $region13
  $region12: #{_lambda_.59} parent=0 // pred_region
    _
  $region13: #{_lambda_.59} parent=0 // pred_fallthru
    _
  // Predicated region
  $region14: #{_lambda_.59} parent=0 // pred_check
    _
  $region15: #{_lambda_.59} parent=0 // pred_check_branch
    %16 = sbr.rel (0) target = $region17
  $region16: #{_lambda_.59} parent=0 // pred_region
    _
  $region17: #{_lambda_.59} parent=0 // pred_fallthru
    _
  %v17 = vld [vmem:[%s0] sm:$0xff]
  %v18 = vld [vmem:[%s0 + $0x8] sm:$0xff]
  %v19 = vld [vmem:[%s1] sm:$0xff]
  %v20 = vld [vmem:[%s1 + $0x8] sm:$0xff]
  %v21 = vadd.f32 %v17, %v19
  %v22 = vadd.f32 %v18, %v20
  %v23 = vld [vmem:[%s2] sm:$0x1]
  %v24 = vld [vmem:[%s3] sm:$0x1]
  %vm25 = vcmask 261120
  %v26 = vsel %vm25, %v21, 0.0
  %27 = vadd.xlane.f32.xlu0 %v26
  %v28 = vpop.xlane.xlu0 %27
  %v29 = vsel %vm25, %v22, 0.0
  %30 = vadd.xlane.f32.xlu0 %v29
  %v31 = vpop.xlane.xlu0 %30
  %v32 = vrcp.pop 32.0
  %v33 = vmul.f32 32.0, %v32
  %v34 = vsub.f32 1.0, %v33
  %v35 = vmul.f32 %v32, %v34
  %v36 = vadd.f32 %v32, %v35
  %vm37 = vweird.f32 %v32
  %v38 = vsel %vm37, %v32, %v36
  %v39 = vmul.f32 %v28, %v38
  %v40 = vmul.f32 %v31, %v38
  %v41 = vsub.f32 %v21, %v39
  %v42 = vsub.f32 %v22, %v40
  %v43 = vmul.f32 %v41, %v41
  %v44 = vmul.f32 %v42, %v42
  %v45 = vsel %vm25, %v43, 0.0
  %46 = vadd.xlane.f32.xlu0 %v45
  %v47 = vpop.xlane.xlu0 %46
  %v48 = vsel %vm25, %v44, 0.0
  %49 = vadd.xlane.f32.xlu0 %v48
  %v50 = vpop.xlane.xlu0 %49
  %v51 = vmul.f32 %v47, %v38
  %v52 = vmul.f32 %v50, %v38
  %v53 = vadd.f32 %v51, 1e-05
  %v54 = vadd.f32 %v52, 1e-05
  %v55 = vrsqrt.pop %v53
  %v56 = vmul.f32 %v55, %v53
  %v57 = vmul.f32 %v56, %v55
  %v58 = vmul.f32 0.5, %v57
  %v59 = vsub.f32 1.5, %v58
  %v60 = vmul.f32 %v55, %v59
  %vm61 = vweird.f32 %v53
  %vm62 = vweird.f32 %v55
  %vm63 = vmor %vm61, %vm62
  %v64 = vsel %vm63, %v55, %v60
  %v65 = vrsqrt.pop %v54
  %v66 = vmul.f32 %v65, %v54
  %v67 = vmul.f32 %v66, %v65
  %v68 = vmul.f32 0.5, %v67
  %v69 = vsub.f32 1.5, %v68
  %v70 = vmul.f32 %v65, %v69
  %vm71 = vweird.f32 %v54
  %vm72 = vweird.f32 %v65
  %vm73 = vmor %vm71, %vm72
  %v74 = vsel %vm73, %v65, %v70
  %v75 = vmul.f32 %v41, %v64
  %v76 = vmul.f32 %v42, %v74
  %v78 = vperm.slane %v23, 0
  %v80 = vmul.f32 %v75, %v78
  %v81 = vmul.f32 %v76, %v78
  %v83 = vperm.slane %v24, 0
  %v85 = vadd.f32 %v80, %v83
  %v86 = vadd.f32 %v81, %v83
  %87 = vst.msk [vmem:[%s4] sm:$0xff] %vm25, %v85
  %88 = vst.msk [vmem:[%s4 + $0x8] sm:$0xff] %vm25, %v86
  // Predicated region
  $region18: #{_lambda_.59} parent=0 // pred_check
    _
  $region19: #{_lambda_.59} parent=0 // pred_check_branch
    %90 = sbr.rel (0) target = $region21
  $region20: #{_lambda_.59} parent=0 // pred_region
    _
  $region21: #{_lambda_.59} parent=0 // pred_fallthru
    _
  // Predicated region
  $region22: #{_lambda_.59} parent=0 // pred_check
    _
  $region23: #{_lambda_.59} parent=0 // pred_check_branch
    %92 = sbr.rel (0) target = $region25
  $region24: #{_lambda_.59} parent=0 // pred_region
    _
  $region25: #{_lambda_.59} parent=0 // pred_fallthru
    _

// kernel: _lambda_.45
$region0: #{_lambda_.45}
  #allocation0 [shape = 'u32[]', space=smem, size = 0x4, offset = 0x4, fixed_abs, tag = 'smem constant byte address 0x4 - core index']
  #allocation1 [shape = 'u32[72,128]{1,0:T(1,128)}', space=vmem, size = 0x9000, scoped, tag = 'internal scratch']
  #allocation2 [shape = 'f32[16,64]{1,0:T(8,128)}', space=vmem, size = 0x2000, scoped, tag = 'scratch operand']
  %s0 = inlined_call_operand.vmem [shape: f32[16,32], index: 0, kind: input, shape index: {}]
  %s1 = inlined_call_operand.vmem [shape: f32[32,64], index: 1, kind: input, shape index: {}]
  %s2 = inlined_call_operand.vmem [shape: f32[1,64], index: 2, kind: input, shape index: {}]
  %s3 = inlined_call_operand.vmem [shape: f32[16,64], index: 3, kind: output, shape index: {}]
  %s4 = sld [smem:[#allocation0]]
  $region30: #{_lambda_.45} parent=0
    _
  %s6 = ssub.s32 1, %s4
  %s7 = scalar_select 0, %s6, %s4
  // Predicated region
  $region2: #{_lambda_.45} parent=0 // pred_check
    _
  $region3: #{_lambda_.45} parent=0 // pred_check_branch
    %9 = sbr.rel (0) target = $region5
  $region4: #{_lambda_.45} parent=0 // pred_region
    _
  $region5: #{_lambda_.45} parent=0 // pred_fallthru
    _
  // Predicated region
  $region6: #{_lambda_.45} parent=0 // pred_check
    _
  $region7: #{_lambda_.45} parent=0 // pred_check_branch
    %11 = sbr.rel (0) target = $region9
  $region8: #{_lambda_.45} parent=0 // pred_region
    _
  $region9: #{_lambda_.45} parent=0 // pred_fallthru
    _
  // Predicated region
  $region10: #{_lambda_.45} parent=0 // pred_check
    _
  $region11: #{_lambda_.45} parent=0 // pred_check_branch
    %13 = sbr.rel (0) target = $region13
  $region12: #{_lambda_.45} parent=0 // pred_region
    _
  $region13: #{_lambda_.45} parent=0 // pred_fallthru
    _
  %p14 = scmp.eq.s32.totalorder 0, 0
  // Predicated region
  $region14: #{_lambda_.45} parent=0 // pred_check
    %p15 = pneg %p14
  $region15: #{_lambda_.45} parent=0 // pred_check_branch
    %17 = sbr.rel (%p15) target = $region17
  $region16: #{_lambda_.45} parent=0 // pred_region
    %vm18 = vcmask 523264
    %19 = vst.msk [vmem:[#allocation2] sm:$0xff] %vm18, 0.0
    %20 = vst.msk [vmem:[#allocation2 + $0x8] sm:$0xff] %vm18, 0.0
  $region17: #{_lambda_.45} parent=0 // pred_fallthru
    _
  %v21 = vld [vmem:[#allocation2] sm:$0xff]
  %v22 = vld [vmem:[#allocation2 + $0x8] sm:$0xff]
  %v23 = vld [vmem:[%s0] sm:$0xff]
  %v24 = vld [vmem:[%s0 + $0x8] sm:$0xff]
  %v25 = vld [vmem:[%s1] sm:$0xff]
  %v26 = vld [vmem:[%s1 + $0x8] sm:$0xff]
  %v27 = vld [vmem:[%s1 + $0x10] sm:$0xff]
  %v28 = vld [vmem:[%s1 + $0x18] sm:$0xff]
  %vm29 = vcmask 261120
  %v31 = vsel %vm29, %v23, 0
  %v34 = vsel %vm29, %v24, 0
  %36 = vmatpush.msra.mxu0 0.0
  %37 = vmatpush.msra.mxu0 0.0
  %38 = vmatpush.msra.mxu0 0.0
  %39 = vmatpush.msra.mxu0 0.0
  %40 = vmatpush.msra.mxu0 0.0
  %41 = vmatpush.msra.mxu0 0.0
  %42 = vmatpush.msra.mxu0 0.0
  %43 = vmatpush.msra.mxu0 0.0
  %44 = vmatpush.msra.mxu0 0.0
  %45 = vmatpush.msra.mxu0 0.0
  %46 = vmatpush.msra.mxu0 0.0
  %47 = vmatpush.msra.mxu0 0.0
  %48 = vmatpush.msra.mxu0 %v28
  %49 = vmatpush.msra.mxu0 %v27
  %50 = vmatpush.msra.mxu0 %v26
  %51 = vmatpush.msra.mxu0 %v25
  %52 = vmatmul.f32.gmra.mxu0 %v31
  %v53 = vpop.f32.mrf.mxu0
  %v54 = vadd.f32 0.0, %v53
  %55 = vmatmul.f32.gmra.mxu0 %v34
  %v56 = vpop.f32.mrf.mxu0
  %v57 = vadd.f32 0.0, %v56
  %58 = vdwg.mxu0
  %v59 = vadd.f32 %v21, %v54
  %v60 = vadd.f32 %v22, %v57
  %vm61 = vcmask 523264
  %62 = vst.msk [vmem:[#allocation2] sm:$0xff] %vm61, %v59
  %63 = vst.msk [vmem:[#allocation2 + $0x8] sm:$0xff] %vm61, %v60
  // Predicated region
  $region18: #{_lambda_.45} parent=0 // pred_check
    %p64 = pneg %p14
  $region19: #{_lambda_.45} parent=0 // pred_check_branch
    %66 = sbr.rel (%p64) target = $region21
  $region20: #{_lambda_.45} parent=0 // pred_region
    %v67 = vld [vmem:[#allocation2] sm:$0xff]
    %v68 = vld [vmem:[#allocation2 + $0x8] sm:$0xff]
    %v69 = vld [vmem:[%s2] sm:$0x1]
    %v71 = vperm.slane %v69, 0
    %v73 = vadd.f32 %v67, %v71
    %v74 = vadd.f32 %v68, %v71
    %v75 = vmul.f32 %v73, 0.5
    %v76 = vmul.f32 %v74, 0.5
    %v77 = vmul.f32 %v73, 0.70710677
    %v78 = vmul.f32 %v74, 0.70710677
    %v79 = vand.u32 2147483647, %v77
    %v80 = vand.u32 2147483647, %v78
    %v81 = vmul.f32 %v79, 0.3275911
    %v82 = vmul.f32 %v80, 0.3275911
    %v83 = vadd.f32 %v81, 1.0
    %v84 = vadd.f32 %v82, 1.0
    %v85 = vrcp.pop %v83
    %v86 = vmul.f32 %v83, %v85
    %v87 = vsub.f32 1.0, %v86
    %v88 = vmul.f32 %v85, %v87
    %v89 = vadd.f32 %v85, %v88
    %vm90 = vweird.f32 %v83
    %vm91 = vweird.f32 %v85
    %vm92 = vmor %vm90, %vm91
    %v93 = vsel %vm92, %v85, %v89
    %v94 = vand.u32 2147483647, %v83
    %vm95 = vcmp.eq.f32.partialorder %v94, 8.507059e+37
    %v96 = vand.u32 %v83, 2147483648
    %v97 = vor.u32 1.1754944e-38, %v96
    %v98 = vsel %vm95, %v97, %v93
    %v99 = vmul.f32 1.0, %v98
    %v100 = vrcp.pop %v84
    %v101 = vmul.f32 %v84, %v100
    %v102 = vsub.f32 1.0, %v101
    %v103 = vmul.f32 %v100, %v102
    %v104 = vadd.f32 %v100, %v103
    %vm105 = vweird.f32 %v84
    %vm106 = vweird.f32 %v100
    %vm107 = vmor %vm105, %vm106
    %v108 = vsel %vm107, %v100, %v104
    %v109 = vand.u32 2147483647, %v84
    %vm110 = vcmp.eq.f32.partialorder %v109, 8.507059e+37
    %v111 = vand.u32 %v84, 2147483648
    %v112 = vor.u32 1.1754944e-38, %v111
    %v113 = vsel %vm110, %v112, %v108
    %v114 = vmul.f32 1.0, %v113
    %v115 = vmul.f32 %v99, 1.0614054
    %v116 = vmul.f32 %v114, 1.0614054
    %v117 = vadd.f32 %v115, -1.4531521
    %v118 = vadd.f32 %v116, -1.4531521
    %v119 = vmul.f32 %v117, %v99
    %v120 = vmul.f32 %v118, %v114
    %v121 = vadd.f32 %v119, 1.4214138
    %v122 = vadd.f32 %v120, 1.4214138
    %v123 = vmul.f32 %v121, %v99
    %v124 = vmul.f32 %v122, %v114
    %v125 = vadd.f32 %v123, -0.28449672
    %v126 = vadd.f32 %v124, -0.28449672
    %v127 = vmul.f32 %v125, %v99
    %v128 = vmul.f32 %v126, %v114
    %v129 = vadd.f32 %v127, 0.2548296
    %v130 = vadd.f32 %v128, 0.2548296
    %v131 = vmul.f32 %v129, %v99
    %v132 = vmul.f32 %v130, %v114
    %v133 = vsub.f32 0.0, %v79
    %v134 = vsub.f32 0.0, %v80
    %v135 = vmul.f32 %v133, %v79
    %v136 = vmul.f32 %v134, %v80
    %v137 = vmul.f32 %v135, 1.442695
    %v138 = vpow.pop %v137
    %v139 = vmul.f32 %v136, 1.442695
    %v140 = vpow.pop %v139
    %v141 = vmul.f32 %v131, %v138
    %v142 = vmul.f32 %v132, %v140
    %v143 = vsub.f32 1.0, %v141
    %v144 = vsub.f32 1.0, %v142
    %vm145 = vcmp.lt.f32.partialorder %v77, 0.0
    %vm146 = vcmp.lt.f32.partialorder %v78, 0.0
    %v147 = vsub.f32 0.0, %v143
    %v148 = vsub.f32 0.0, %v144
    %v149 = vsel %vm145, %v147, %v143
    %v150 = vsel %vm146, %v148, %v144
    %v151 = vadd.f32 %v149, 1.0
    %v152 = vadd.f32 %v150, 1.0
    %v153 = vmul.f32 %v75, %v151
    %v154 = vmul.f32 %v76, %v152
    %155 = vst.msk [vmem:[%s3] sm:$0xff] %vm61, %v153
    %156 = vst.msk [vmem:[%s3 + $0x8] sm:$0xff] %vm61, %v154
  $region21: #{_lambda_.45} parent=0 // pred_fallthru
    _
  // Predicated region
  $region22: #{_lambda_.45} parent=0 // pred_check
    _
  $region23: #{_lambda_.45} parent=0 // pred_check_branch
    %158 = sbr.rel (0) target = $region25
  $region24: #{_lambda_.45} parent=0 // pred_region
    _
  $region25: #{_lambda_.45} parent=0 // pred_fallthru
    _
  // Predicated region
  $region26: #{_lambda_.45} parent=0 // pred_check
    _
  $region27: #{_lambda_.45} parent=0 // pred_check_branch
    %160 = sbr.rel (0) target = $region29
  $region28: #{_lambda_.45} parent=0 // pred_region
    _
  $region29: #{_lambda_.45} parent=0 // pred_fallthru
    _

// kernel: _lambda_.42
$region0: #{_lambda_.42}
  #allocation0 [shape = 'u32[]', space=smem, size = 0x4, offset = 0x4, fixed_abs, tag = 'smem constant byte address 0x4 - core index']
  #allocation1 [shape = 'u32[72,128]{1,0:T(1,128)}', space=vmem, size = 0x9000, scoped, tag = 'internal scratch']
  %s0 = inlined_call_operand.vmem [shape: f32[2,1,8], index: 0, kind: input, shape index: {}]
  %s1 = inlined_call_operand.vmem [shape: f32[2,8,96], index: 1, kind: input, shape index: {}, may-alias: {1,2}]
  %s2 = inlined_call_operand.vmem [shape: f32[2,8,96], index: 2, kind: input, shape index: {}, may-alias: {1,2}]
  %s3 = inlined_call_operand.vmem [shape: f32[2,8,32], index: 3, kind: output, shape index: {}]
  %s4 = sld [smem:[#allocation0]]
  $region45: #{_lambda_.42} parent=0
    _
  %s6 = ssub.s32 1, %s4
  %s7 = scalar_select 0, %s6, %s4
  loop: start=0, step=1, limit=4
  $region2: #{_lambda_.42} parent=0 // loop_pre_header
    _
  $region3: #{_lambda_.42} parent=0 // loop_header
    %s9 = sphi 0, %s13
    %p10 = scmp.ge.s32.totalorder %s9, 4
    %s16 = sphi 0, %s35
    %s17 = sphi 0, %s31
    %s18 = sphi 0, %s27
    %s19 = sphi 0, %s16
    %s20 = sphi 0, %s17
    %s21 = sphi 0, %s18
    %s22 = sphi 0, %s19
    %s23 = sphi 0, %s20
    %s24 = sphi 0, %s21
    %s38 = sphi 0, %s40
    %s41 = sphi 0, %s38
    %s42 = sphi 0, %s41
    %s58 = sphi 0, %s42
    %s68 = sphi 0, %s70
    %s71 = sphi 0, %s68
    %s72 = sphi 0, %s71
    %s88 = sphi 0, %s72
    %s96 = sphi 0, %s98
    %s99 = sphi 0, %s96
    %s100 = sphi 0, %s99
    %s116 = sphi 0, %s100
    %s126 = sphi 0, %s128
    %s129 = sphi 0, %s126
    %s130 = sphi 0, %s129
    %s146 = sphi 0, %s130
  $region4: #{_lambda_.42} parent=0 // loop_header_branch
    %12 = sbr.rel (%p10) target = $region8
  $region5: #{_lambda_.42} parent=0 // loop_body
    %s14 = ssub.s32 %s9, 1
    %s15 = ssub.s32 %s9, 2
    %s25 = sadd.s32 1, %s18
    %p26 = scmp.ge.s32.totalorder %s25, 1
    %s27 = scalar_select %p26, 0, %s25
    %s28 = sadd.s32 1, %s17
    %s29 = scalar_select %p26, %s28, %s17
    %p30 = scmp.ge.s32.totalorder %s29, 1
    %s31 = scalar_select %p30, 0, %s29
    %s32 = sadd.s32 1, %s16
    %s33 = scalar_select %p30, %s32, %s16
    %p34 = scmp.ge.s32.totalorder %s33, 2
    %s35 = scalar_select %p34, 0, %s33
    %s36 = ssub.s32 %s16, %s35
    %p37 = scmp.eq.s32.totalorder %s36, 0
    %s39 = sadd.s32 %s38, 1
    %s40 = scalar_select %p37, %s38, %s39
    %p43 = pneg %p37
    %p44 = scmp.eq.s32.totalorder %s9, 1
    %p45 = por %p43, %p44
    %p46 = scmp.ne.s32.totalorder %s38, %s41
    %p47 = scmp.eq.s32.totalorder %s9, 0
    %p48 = por %p46, %p47
    %p49 = scmp.ne.s32.totalorder %s38, %s41
    %p50 = scmp.eq.s32.totalorder %s14, 1
    %p51 = por %p49, %p50
    %p52 = scmp.ne.s32.totalorder %s41, %s42
    %p53 = scmp.eq.s32.totalorder %s14, 0
    %p54 = por %p52, %p53
    %p55 = scmp.ne.s32.totalorder %s41, %s42
    %p56 = scmp.eq.s32.totalorder %s15, 1
    %p57 = por %p55, %p56
    %p59 = scmp.ne.s32.totalorder %s42, %s58
    %p60 = scmp.eq.s32.totalorder %s15, 0
    %p61 = por %p59, %p60
    %s62 = ssub.s32 %s16, %s35
    %s63 = ssub.s32 %s18, %s27
    %s64 = sor.u32 %s62, %s63
    %s65 = ssub.s32 %s17, %s31
    %s66 = sor.u32 %s64, %s65
    %p67 = scmp.eq.s32.totalorder %s66, 0
    %s69 = sadd.s32 %s68, 1
    %s70 = scalar_select %p67, %s68, %s69
    %p73 = pneg %p67
    %p74 = scmp.eq.s32.totalorder %s9, 1
    %p75 = por %p73, %p74
    %p76 = scmp.ne.s32.totalorder %s68, %s71
    %p77 = scmp.eq.s32.totalorder %s9, 0
    %p78 = por %p76, %p77
    %p79 = scmp.ne.s32.totalorder %s68, %s71
    %p80 = scmp.eq.s32.totalorder %s14, 1
    %p81 = por %p79, %p80
    %p82 = scmp.ne.s32.totalorder %s71, %s72
    %p83 = scmp.eq.s32.totalorder %s14, 0
    %p84 = por %p82, %p83
    %p85 = scmp.ne.s32.totalorder %s71, %s72
    %p86 = scmp.eq.s32.totalorder %s15, 1
    %p87 = por %p85, %p86
    %p89 = scmp.ne.s32.totalorder %s72, %s88
    %p90 = scmp.eq.s32.totalorder %s15, 0
    %p91 = por %p89, %p90
    %s92 = ssub.s32 %s16, %s35
    %s93 = ssub.s32 %s17, %s31
    %s94 = sor.u32 %s92, %s93
    %p95 = scmp.eq.s32.totalorder %s94, 0
    %s97 = sadd.s32 %s96, 1
    %s98 = scalar_select %p95, %s96, %s97
    %p101 = pneg %p95
    %p102 = scmp.eq.s32.totalorder %s9, 1
    %p103 = por %p101, %p102
    %p104 = scmp.ne.s32.totalorder %s96, %s99
    %p105 = scmp.eq.s32.totalorder %s9, 0
    %p106 = por %p104, %p105
    %p107 = scmp.ne.s32.totalorder %s96, %s99
    %p108 = scmp.eq.s32.totalorder %s14, 1
    %p109 = por %p107, %p108
    %p110 = scmp.ne.s32.totalorder %s99, %s100
    %p111 = scmp.eq.s32.totalorder %s14, 0
    %p112 = por %p110, %p111
    %p113 = scmp.ne.s32.totalorder %s99, %s100
    %p114 = scmp.eq.s32.totalorder %s15, 1
    %p115 = por %p113, %p114
    %p117 = scmp.ne.s32.totalorder %s100, %s116
    %p118 = scmp.eq.s32.totalorder %s15, 0
    %p119 = por %p117, %p118
    %s120 = ssub.s32 %s16, %s35
    %s121 = ssub.s32 %s18, %s27
    %s122 = sor.u32 %s120, %s121
    %s123 = ssub.s32 %s17, %s31
    %s124 = sor.u32 %s122, %s123
    %p125 = scmp.eq.s32.totalorder %s124, 0
    %s127 = sadd.s32 %s126, 1
    %s128 = scalar_select %p125, %s126, %s127
    %p131 = pneg %p125
    %p132 = scmp.eq.s32.totalorder %s9, 1
    %p133 = por %p131, %p132
    %p134 = scmp.ne.s32.totalorder %s126, %s129
    %p135 = scmp.eq.s32.totalorder %s9, 0
    %p136 = por %p134, %p135
    %p137 = scmp.ne.s32.totalorder %s126, %s129
    %p138 = scmp.eq.s32.totalorder %s14, 1
    %p139 = por %p137, %p138
    %p140 = scmp.ne.s32.totalorder %s129, %s130
    %p141 = scmp.eq.s32.totalorder %s14, 0
    %p142 = por %p140, %p141
    %p143 = scmp.ne.s32.totalorder %s129, %s130
    %p144 = scmp.eq.s32.totalorder %s15, 1
    %p145 = por %p143, %p144
    %p147 = scmp.ne.s32.totalorder %s130, %s146
    %p148 = scmp.eq.s32.totalorder %s15, 0
    %p149 = por %p147, %p148
    %p150 = scmp.le.s32.totalorder 1, %s9
    %p151 = scmp.lt.s32.totalorder %s9, 3
    %p152 = pnand %p150, %p151
    %p153 = pneg %p152
    // Predicated region
    $region9: #{_lambda_.42} parent=5 // pred_check
      _
    $region10: #{_lambda_.42} parent=5 // pred_check_branch
      %155 = sbr.rel (%p152) target = $region12
    $region11: #{_lambda_.42} parent=5 // pred_region
      %s156 = ssub.s32 %s9, 1
    $region12: #{_lambda_.42} parent=5 // pred_fallthru
      _
    %p157 = scmp.lt.s32.totalorder %s9, 2
    // Predicated region
    $region13: #{_lambda_.42} parent=5 // pred_check
      %p158 = pneg %p157
    $region14: #{_lambda_.42} parent=5 // pred_check_branch
      %160 = sbr.rel (%p158) target = $region16
    $region15: #{_lambda_.42} parent=5 // pred_region
      // Predicated region
      $region17: #{_lambda_.42} parent=15 // pred_check
        %p161 = pneg %p48
      $region18: #{_lambda_.42} parent=15 // pred_check_branch
        %163 = sbr.rel (%p161) target = $region20
      $region19: #{_lambda_.42} parent=15 // pred_region
        %p164 = scmp.lt.s32.totalorder %s16, 1
        %s165 = scalar_select %p164, %s16, 1
        %s166 = scalar_lea.vmem %s0, %s165
      $region20: #{_lambda_.42} parent=15 // pred_fallthru
        _
      // Predicated region
      $region21: #{_lambda_.42} parent=15 // pred_check
        %p167 = pneg %p78
      $region22: #{_lambda_.42} parent=15 // pred_check_branch
        %169 = sbr.rel (%p167) target = $region24
      $region23: #{_lambda_.42} parent=15 // pred_region
        %p170 = scmp.lt.s32.totalorder %s16, 1
        %s171 = scalar_select %p170, %s16, 1
        %p172 = scmp.lt.s32.totalorder %s18, 0
        %s173 = scalar_select %p172, %s18, 0
        %p174 = scmp.lt.s32.totalorder %s17, 0
        %s175 = scalar_select %p174, %s17, 0
        %s176 = sadd.s32 %s175, %s173
        %s177 = sadd.s32 %s176, %s171
        %s178 = smul.addr %s177, 8
        %s179 = scalar_lea.vmem %s1, %s178
      $region24: #{_lambda_.42} parent=15 // pred_fallthru
        _
      // Predicated region
      $region25: #{_lambda_.42} parent=15 // pred_check
        %p180 = pneg %p106
      $region26: #{_lambda_.42} parent=15 // pred_check_branch
        %182 = sbr.rel (%p180) target = $region28
      $region27: #{_lambda_.42} parent=15 // pred_region
        %p183 = scmp.lt.s32.totalorder %s16, 1
        %s184 = scalar_select %p183, %s16, 1
        %p185 = scmp.lt.s32.totalorder %s17, 0
        %s186 = scalar_select %p185, %s17, 0
        %s187 = sadd.s32 %s186, %s184
        %s188 = smul.addr %s187, 8
        %s189 = scalar_lea.vmem %s2, %s188
      $region28: #{_lambda_.42} parent=15 // pred_fallthru
        _
    $region16: #{_lambda_.42} parent=5 // pred_fallthru
      _
    %p190 = scmp.le.s32.totalorder 1, %s9
    %p191 = scmp.lt.s32.totalorder %s9, 3
    %p192 = pnand %p190, %p191
    %p193 = pneg %p192
    // Predicated region
    $region29: #{_lambda_.42} parent=5 // pred_check
      _
    $region30: #{_lambda_.42} parent=5 // pred_check_branch
      %195 = sbr.rel (%p192) target = $region32
    $region31: #{_lambda_.42} parent=5 // pred_region
      %s196 = ssub.s32 %s9, 1
      %p197 = scmp.lt.s32.totalorder %s19, 1
      %s198 = scalar_select %p197, %s19, 1
      %s199 = scalar_lea.vmem %s0, %s198
      %p200 = pneg %p54
      %p201 = pneg %p51
      %p202 = scmp.lt.s32.totalorder %s19, 1
      %s203 = scalar_select %p202, %s19, 1
      %p204 = scmp.lt.s32.totalorder %s21, 0
      %s205 = scalar_select %p204, %s21, 0
      %p206 = scmp.lt.s32.totalorder %s20, 0
      %s207 = scalar_select %p206, %s20, 0
      %s208 = sadd.s32 %s207, %s205
      %s209 = sadd.s32 %s208, %s203
      %s210 = smul.addr %s209, 8
      %s211 = scalar_lea.vmem %s1, %s210
      %p212 = pneg %p84
      %p213 = pneg %p81
      %p214 = scmp.lt.s32.totalorder %s19, 1
      %s215 = scalar_select %p214, %s19, 1
      %p216 = scmp.lt.s32.totalorder %s20, 0
      %s217 = scalar_select %p216, %s20, 0
      %s218 = sadd.s32 %s217, %s215
      %s219 = smul.addr %s218, 8
      %s220 = scalar_lea.vmem %s2, %s219
      %p221 = pneg %p112
      %p222 = pneg %p109
      %p223 = pneg %p142
      %p224 = pneg %p139
      %p225 = scmp.lt.s32.totalorder %s19, 1
      %s226 = scalar_select %p225, %s19, 1
      %p227 = scmp.lt.s32.totalorder %s21, 0
      %s228 = scalar_select %p227, %s21, 0
      %p229 = scmp.lt.s32.totalorder %s20, 0
      %s230 = scalar_select %p229, %s20, 0
      %s231 = sadd.s32 %s230, %s228
      %s232 = sadd.s32 %s231, %s226
      %s233 = smul.addr %s232, 8
      %s234 = scalar_lea.vmem %s3, %s233
      %p235 = scmp.lt.s32.totalorder %s19, 1
      %s236 = scalar_select %p235, %s19, 1
      %s237 = scalar_lea.vmem %s0, %s236
      %p238 = scmp.lt.s32.totalorder %s19, 1
      %s239 = scalar_select %p238, %s19, 1
      %p240 = scmp.lt.s32.totalorder %s21, 0
      %s241 = scalar_select %p240, %s21, 0
      %p242 = scmp.lt.s32.totalorder %s20, 0
      %s243 = scalar_select %p242, %s20, 0
      %s244 = sadd.s32 %s243, %s241
      %s245 = sadd.s32 %s244, %s239
      %s246 = smul.addr %s245, 8
      %s247 = scalar_lea.vmem %s1, %s246
      %p248 = scmp.lt.s32.totalorder %s19, 1
      %s249 = scalar_select %p248, %s19, 1
      %p250 = scmp.lt.s32.totalorder %s20, 0
      %s251 = scalar_select %p250, %s20, 0
      %s252 = sadd.s32 %s251, %s249
      %s253 = smul.addr %s252, 8
      %s254 = scalar_lea.vmem %s2, %s253
      %p255 = scmp.lt.s32.totalorder %s19, 1
      %s256 = scalar_select %p255, %s19, 1
      %p257 = scmp.lt.s32.totalorder %s21, 0
      %s258 = scalar_select %p257, %s21, 0
      %p259 = scmp.lt.s32.totalorder %s20, 0
      %s260 = scalar_select %p259, %s20, 0
      %s261 = sadd.s32 %s260, %s258
      %s262 = sadd.s32 %s261, %s256
      %s263 = smul.addr %s262, 8
      %s264 = scalar_lea.vmem %s3, %s263
      %v265 = vld [vmem:[%s237] sm:$0x1]
      %v266 = vld [vmem:[%s247] sm:$0xff]
      %v267 = vld [vmem:[%s254] sm:$0xff]
      %v269 = vperm.slane %v265, 0
      %272 = vrot.lane.b32.xlu0 %v267, 120
      %v273 = vpop.permute.xlu0 %272
      %vm274 = vcmask 64512
      %v276 = vsel %vm274, %v266, 0
      %v278 = vsel %vm274, %v273, 0
      %280 = vmatpush.xpose.msra.mxu0 0.0
      %281 = vmatpush.xpose.msra.mxu0 0.0
      %282 = vmatpush.xpose.msra.mxu0 0.0
      %283 = vmatpush.xpose.msra.mxu0 0.0
      %284 = vmatpush.xpose.msra.mxu0 0.0
      %285 = vmatpush.xpose.msra.mxu0 0.0
      %286 = vmatpush.xpose.msra.mxu0 0.0
      %287 = vmatpush.xpose.msra.mxu0 0.0
      %288 = vmatpush.xpose.msra.mxu0 0.0
      %289 = vmatpush.xpose.msra.mxu0 0.0
      %290 = vmatpush.xpose.msra.mxu0 0.0
      %291 = vmatpush.xpose.msra.mxu0 0.0
      %292 = vmatpush.xpose.msra.mxu0 0.0
      %293 = vmatpush.xpose.msra.mxu0 0.0
      %294 = vmatpush.xpose.msra.mxu0 0.0
      %295 = vmatpush.xpose.msra.mxu0 %v278
      %296 = vmatmul.f32.gmra.mxu0 %v276
      %v297 = vpop.f32.mrf.mxu0
      %v298 = vadd.f32 %v269, %v297
      %299 = vdwg.mxu0
      %v300 = vsel %vm274, %v298, -inf
      %301 = vmax.xlane.f32.xlu0 %v300
      %v302 = vpop.xlane.xlu0 %301
      %v303 = vsub.f32 %v298, %v302
      %v304 = vmul.f32 %v303, 1.442695
      %v305 = vpow.pop %v304
      %v306 = vsel %vm274, %v305, 0.0
      %307 = vadd.xlane.f32.xlu0 %v306
      %v308 = vpop.xlane.xlu0 %307
      %v309 = vrcp.pop %v308
      %v310 = vmul.f32 %v305, %v309
      %311 = vrot.lane.b32.xlu0 %v267, 112
      %v312 = vpop.permute.xlu0 %311
      %v315 = vsel %vm274, %v310, 0
      %317 = vmatpush.msra.mxu0 0.0
      %318 = vmatpush.msra.mxu0 0.0
      %319 = vmatpush.msra.mxu0 0.0
      %320 = vmatpush.msra.mxu0 0.0
      %321 = vmatpush.msra.mxu0 0.0
      %322 = vmatpush.msra.mxu0 0.0
      %323 = vmatpush.msra.mxu0 0.0
      %324 = vmatpush.msra.mxu0 0.0
      %325 = vmatpush.msra.mxu0 0.0
      %326 = vmatpush.msra.mxu0 0.0
      %327 = vmatpush.msra.mxu0 0.0
      %328 = vmatpush.msra.mxu0 0.0
      %329 = vmatpush.msra.mxu0 0.0
      %330 = vmatpush.msra.mxu0 0.0
      %331 = vmatpush.msra.mxu0 0.0
      %332 = vmatpush.msra.mxu0 %v312
      %333 = vmatmul.f32.gmra.mxu0 %v315
      %v334 = vpop.f32.mrf.mxu0
      %v335 = vadd.f32 0.0, %v334
      %336 = vdwg.mxu0
      %337 = vrot.lane.b32.xlu0 %v266, 104
      %v338 = vpop.permute.xlu0 %337
      %339 = vrot.lane.b32.xlu0 %v267, 96
      %v340 = vpop.permute.xlu0 %339
      %v341 = vsel %vm274, %v338, 0
      %v343 = vsel %vm274, %v340, 0
      %345 = vmatpush.xpose.msra.mxu0 0.0
      %346 = vmatpush.xpose.msra.mxu0 0.0
      %347 = vmatpush.xpose.msra.mxu0 0.0
      %348 = vmatpush.xpose.msra.mxu0 0.0
      %349 = vmatpush.xpose.msra.mxu0 0.0
      %350 = vmatpush.xpose.msra.mxu0 0.0
      %351 = vmatpush.xpose.msra.mxu0 0.0
      %352 = vmatpush.xpose.msra.mxu0 0.0
      %353 = vmatpush.xpose.msra.mxu0 0.0
      %354 = vmatpush.xpose.msra.mxu0 0.0
      %355 = vmatpush.xpose.msra.mxu0 0.0
      %356 = vmatpush.xpose.msra.mxu0 0.0
      %357 = vmatpush.xpose.msra.mxu0 0.0
      %358 = vmatpush.xpose.msra.mxu0 0.0
      %359 = vmatpush.xpose.msra.mxu0 0.0
      %360 = vmatpush.xpose.msra.mxu0 %v343
      %361 = vmatmul.f32.gmra.mxu0 %v341
      %v362 = vpop.f32.mrf.mxu0
      %v363 = vadd.f32 %v269, %v362
      %364 = vdwg.mxu0
      %v365 = vsel %vm274, %v363, -inf
      %366 = vmax.xlane.f32.xlu0 %v365
      %v367 = vpop.xlane.xlu0 %366
      %v368 = vsub.f32 %v363, %v367
      %v369 = vmul.f32 %v368, 1.442695
      %v370 = vpow.pop %v369
      %v371 = vsel %vm274, %v370, 0.0
      %372 = vadd.xlane.f32.xlu0 %v371
      %v373 = vpop.xlane.xlu0 %372
      %v374 = vrcp.pop %v373
      %v375 = vmul.f32 %v370, %v374
      %376 = vrot.lane.b32.xlu0 %v267, 88
      %v377 = vpop.permute.xlu0 %376
      %v380 = vsel %vm274, %v375, 0
      %382 = vmatpush.msra.mxu0 0.0
      %383 = vmatpush.msra.mxu0 0.0
      %384 = vmatpush.msra.mxu0 0.0
      %385 = vmatpush.msra.mxu0 0.0
      %386 = vmatpush.msra.mxu0 0.0
      %387 = vmatpush.msra.mxu0 0.0
      %388 = vmatpush.msra.mxu0 0.0
      %389 = vmatpush.msra.mxu0 0.0
      %390 = vmatpush.msra.mxu0 0.0
      %391 = vmatpush.msra.mxu0 0.0
      %392 = vmatpush.msra.mxu0 0.0
      %393 = vmatpush.msra.mxu0 0.0
      %394 = vmatpush.msra.mxu0 0.0
      %395 = vmatpush.msra.mxu0 0.0
      %396 = vmatpush.msra.mxu0 0.0
      %397 = vmatpush.msra.mxu0 %v377
      %398 = vmatmul.f32.gmra.mxu0 %v380
      %v399 = vpop.f32.mrf.mxu0
      %v400 = vadd.f32 0.0, %v399
      %401 = vdwg.mxu0
      %402 = vrot.lane.b32.xlu0 %v266, 80
      %v403 = vpop.permute.xlu0 %402
      %404 = vrot.lane.b32.xlu0 %v267, 72
      %v405 = vpop.permute.xlu0 %404
      %v406 = vsel %vm274, %v403, 0
      %v408 = vsel %vm274, %v405, 0
      %410 = vmatpush.xpose.msra.mxu0 0.0
      %411 = vmatpush.xpose.msra.mxu0 0.0
      %412 = vmatpush.xpose.msra.mxu0 0.0
      %413 = vmatpush.xpose.msra.mxu0 0.0
      %414 = vmatpush.xpose.msra.mxu0 0.0
      %415 = vmatpush.xpose.msra.mxu0 0.0
      %416 = vmatpush.xpose.msra.mxu0 0.0
      %417 = vmatpush.xpose.msra.mxu0 0.0
      %418 = vmatpush.xpose.msra.mxu0 0.0
      %419 = vmatpush.xpose.msra.mxu0 0.0
      %420 = vmatpush.xpose.msra.mxu0 0.0
      %421 = vmatpush.xpose.msra.mxu0 0.0
      %422 = vmatpush.xpose.msra.mxu0 0.0
      %423 = vmatpush.xpose.msra.mxu0 0.0
      %424 = vmatpush.xpose.msra.mxu0 0.0
      %425 = vmatpush.xpose.msra.mxu0 %v408
      %426 = vmatmul.f32.gmra.mxu0 %v406
      %v427 = vpop.f32.mrf.mxu0
      %v428 = vadd.f32 %v269, %v427
      %429 = vdwg.mxu0
      %v430 = vsel %vm274, %v428, -inf
      %431 = vmax.xlane.f32.xlu0 %v430
      %v432 = vpop.xlane.xlu0 %431
      %v433 = vsub.f32 %v428, %v432
      %v434 = vmul.f32 %v433, 1.442695
      %v435 = vpow.pop %v434
      %v436 = vsel %vm274, %v435, 0.0
      %437 = vadd.xlane.f32.xlu0 %v436
      %v438 = vpop.xlane.xlu0 %437
      %v439 = vrcp.pop %v438
      %v440 = vmul.f32 %v435, %v439
      %441 = vrot.lane.b32.xlu0 %v267, 64
      %v442 = vpop.permute.xlu0 %441
      %v445 = vsel %vm274, %v440, 0
      %447 = vmatpush.msra.mxu0 0.0
      %448 = vmatpush.msra.mxu0 0.0
      %449 = vmatpush.msra.mxu0 0.0
      %450 = vmatpush.msra.mxu0 0.0
      %451 = vmatpush.msra.mxu0 0.0
      %452 = vmatpush.msra.mxu0 0.0
      %453 = vmatpush.msra.mxu0 0.0
      %454 = vmatpush.msra.mxu0 0.0
      %455 = vmatpush.msra.mxu0 0.0
      %456 = vmatpush.msra.mxu0 0.0
      %457 = vmatpush.msra.mxu0 0.0
      %458 = vmatpush.msra.mxu0 0.0
      %459 = vmatpush.msra.mxu0 0.0
      %460 = vmatpush.msra.mxu0 0.0
      %461 = vmatpush.msra.mxu0 0.0
      %462 = vmatpush.msra.mxu0 %v442
      %463 = vmatmul.f32.gmra.mxu0 %v445
      %v464 = vpop.f32.mrf.mxu0
      %v465 = vadd.f32 0.0, %v464
      %466 = vdwg.mxu0
      %467 = vrot.lane.b32.xlu0 %v266, 56
      %v468 = vpop.permute.xlu0 %467
      %469 = vrot.lane.b32.xlu0 %v267, 48
      %v470 = vpop.permute.xlu0 %469
      %v471 = vsel %vm274, %v468, 0
      %v473 = vsel %vm274, %v470, 0
      %475 = vmatpush.xpose.msra.mxu0 0.0
      %476 = vmatpush.xpose.msra.mxu0 0.0
      %477 = vmatpush.xpose.msra.mxu0 0.0
      %478 = vmatpush.xpose.msra.mxu0 0.0
      %479 = vmatpush.xpose.msra.mxu0 0.0
      %480 = vmatpush.xpose.msra.mxu0 0.0
      %481 = vmatpush.xpose.msra.mxu0 0.0
      %482 = vmatpush.xpose.msra.mxu0 0.0
      %483 = vmatpush.xpose.msra.mxu0 0.0
      %484 = vmatpush.xpose.msra.mxu0 0.0
      %485 = vmatpush.xpose.msra.mxu0 0.0
      %486 = vmatpush.xpose.msra.mxu0 0.0
      %487 = vmatpush.xpose.msra.mxu0 0.0
      %488 = vmatpush.xpose.msra.mxu0 0.0
      %489 = vmatpush.xpose.msra.mxu0 0.0
      %490 = vmatpush.xpose.msra.mxu0 %v473
      %491 = vmatmul.f32.gmra.mxu0 %v471
      %v492 = vpop.f32.mrf.mxu0
      %v493 = vadd.f32 %v269, %v492
      %494 = vdwg.mxu0
      %v495 = vsel %vm274, %v493, -inf
      %496 = vmax.xlane.f32.xlu0 %v495
      %v497 = vpop.xlane.xlu0 %496
      %v498 = vsub.f32 %v493, %v497
      %v499 = vmul.f32 %v498, 1.442695
      %v500 = vpow.pop %v499
      %v501 = vsel %vm274, %v500, 0.0
      %502 = vadd.xlane.f32.xlu0 %v501
      %v503 = vpop.xlane.xlu0 %502
      %v504 = vrcp.pop %v503
      %v505 = vmul.f32 %v500, %v504
      %506 = vrot.lane.b32.xlu0 %v267, 40
      %v507 = vpop.permute.xlu0 %506
      %v510 = vsel %vm274, %v505, 0
      %512 = vmatpush.msra.mxu0 0.0
      %513 = vmatpush.msra.mxu0 0.0
      %514 = vmatpush.msra.mxu0 0.0
      %515 = vmatpush.msra.mxu0 0.0
      %516 = vmatpush.msra.mxu0 0.0
      %517 = vmatpush.msra.mxu0 0.0
      %518 = vmatpush.msra.mxu0 0.0
      %519 = vmatpush.msra.mxu0 0.0
      %520 = vmatpush.msra.mxu0 0.0
      %521 = vmatpush.msra.mxu0 0.0
      %522 = vmatpush.msra.mxu0 0.0
      %523 = vmatpush.msra.mxu0 0.0
      %524 = vmatpush.msra.mxu0 0.0
      %525 = vmatpush.msra.mxu0 0.0
      %526 = vmatpush.msra.mxu0 0.0
      %527 = vmatpush.msra.mxu0 %v507
      %528 = vmatmul.f32.gmra.mxu0 %v510
      %v529 = vpop.f32.mrf.mxu0
      %v530 = vadd.f32 0.0, %v529
      %531 = vdwg.mxu0
      %533 = vrot.lane.b32.xlu0 %v400, 8
      %v534 = vpop.permute.xlu0 %533
      %537 = vrot.lane.b32.xlu0 %v465, 16
      %v538 = vpop.permute.xlu0 %537
      %541 = vrot.lane.b32.xlu0 %v530, 24
      %v542 = vpop.permute.xlu0 %541
      %v544 = vsel %vm274, %v335, %v534
      %vm545 = vcmask 130048
      %v546 = vsel %vm545, %v544, %v538
      %vm547 = vcmask 195584
      %v548 = vsel %vm547, %v546, %v542
      %vm549 = vcmask 261120
      %550 = vst.msk [vmem:[%s264] sm:$0xff] %vm549, %v548
      %p551 = scmp.lt.s32.totalorder %s19, 1
      %s552 = scalar_select %p551, %s19, 1
      %p553 = scmp.lt.s32.totalorder %s21, 0
      %s554 = scalar_select %p553, %s21, 0
      %p555 = scmp.lt.s32.totalorder %s20, 0
      %s556 = scalar_select %p555, %s20, 0
      %s557 = sadd.s32 %s556, %s554
      %s558 = sadd.s32 %s557, %s552
      %s559 = smul.addr %s558, 8
      %s560 = scalar_lea.vmem %s3, %s559
      // Predicated region
      $region33: #{_lambda_.42} parent=31 // pred_check
        %p561 = pneg %p139
      $region34: #{_lambda_.42} parent=31 // pred_check_branch
        %563 = sbr.rel (%p561) target = $region36
      $region35: #{_lambda_.42} parent=31 // pred_region
        _
      $region36: #{_lambda_.42} parent=31 // pred_fallthru
        _
    $region32: #{_lambda_.42} parent=5 // pred_fallthru
      _
    %p564 = scmp.le.s32.totalorder 2, %s9
    // Predicated region
    $region37: #{_lambda_.42} parent=5 // pred_check
      %p565 = pneg %p564
    $region38: #{_lambda_.42} parent=5 // pred_check_branch
      %567 = sbr.rel (%p565) target = $region40
    $region39: #{_lambda_.42} parent=5 // pred_region
      %s568 = ssub.s32 %s9, 2
      // Predicated region
      $region41: #{_lambda_.42} parent=39 // pred_check
        %p569 = pneg %p145
      $region42: #{_lambda_.42} parent=39 // pred_check_branch
        %571 = sbr.rel (%p569) target = $region44
      $region43: #{_lambda_.42} parent=39 // pred_region
        %p572 = scmp.lt.s32.totalorder %s22, 1
        %s573 = scalar_select %p572, %s22, 1
        %p574 = scmp.lt.s32.totalorder %s24, 0
        %s575 = scalar_select %p574, %s24, 0
        %p576 = scmp.lt.s32.totalorder %s23, 0
        %s577 = scalar_select %p576, %s23, 0
        %s578 = sadd.s32 %s577, %s575
        %s579 = sadd.s32 %s578, %s573
        %s580 = smul.addr %s579, 8
        %s581 = scalar_lea.vmem %s3, %s580
      $region44: #{_lambda_.42} parent=39 // pred_fallthru
        _
    $region40: #{_lambda_.42} parent=5 // pred_fallthru
      _
  $region6: #{_lambda_.42} parent=0 // loop_footer
    %s13 = sadd.s32 1, %s9
  $region7: #{_lambda_.42} parent=0 // loop_footer_branch
    %8 = sbr.rel target = $region3
  $region8: #{_lambda_.42} parent=0 // loop_exit
    _

// kernel: _lambda_.46
$region0: #{_lambda_.46}
  #allocation0 [shape = 'u32[]', space=smem, size = 0x4, offset = 0x4, fixed_abs, tag = 'smem constant byte address 0x4 - core index']
  #allocation1 [shape = 'u32[72,128]{1,0:T(1,128)}', space=vmem, size = 0x9000, scoped, tag = 'internal scratch']
  #allocation2 [shape = 'f32[16,32]{1,0:T(8,128)}', space=vmem, size = 0x2000, scoped, tag = 'scratch operand']
  %s0 = inlined_call_operand.vmem [shape: f32[16,64], index: 0, kind: input, shape index: {}]
  %s1 = inlined_call_operand.vmem [shape: f32[64,32], index: 1, kind: input, shape index: {}]
  %s2 = inlined_call_operand.vmem [shape: f32[1,32], index: 2, kind: input, shape index: {}]
  %s3 = inlined_call_operand.vmem [shape: f32[16,32], index: 3, kind: output, shape index: {}]
  %s4 = sld [smem:[#allocation0]]
  $region30: #{_lambda_.46} parent=0
    _
  %s6 = ssub.s32 1, %s4
  %s7 = scalar_select 0, %s6, %s4
  // Predicated region
  $region2: #{_lambda_.46} parent=0 // pred_check
    _
  $region3: #{_lambda_.46} parent=0 // pred_check_branch
    %9 = sbr.rel (0) target = $region5
  $region4: #{_lambda_.46} parent=0 // pred_region
    _
  $region5: #{_lambda_.46} parent=0 // pred_fallthru
    _
  // Predicated region
  $region6: #{_lambda_.46} parent=0 // pred_check
    _
  $region7: #{_lambda_.46} parent=0 // pred_check_branch
    %11 = sbr.rel (0) target = $region9
  $region8: #{_lambda_.46} parent=0 // pred_region
    _
  $region9: #{_lambda_.46} parent=0 // pred_fallthru
    _
  // Predicated region
  $region10: #{_lambda_.46} parent=0 // pred_check
    _
  $region11: #{_lambda_.46} parent=0 // pred_check_branch
    %13 = sbr.rel (0) target = $region13
  $region12: #{_lambda_.46} parent=0 // pred_region
    _
  $region13: #{_lambda_.46} parent=0 // pred_fallthru
    _
  %p14 = scmp.eq.s32.totalorder 0, 0
  // Predicated region
  $region14: #{_lambda_.46} parent=0 // pred_check
    %p15 = pneg %p14
  $region15: #{_lambda_.46} parent=0 // pred_check_branch
    %17 = sbr.rel (%p15) target = $region17
  $region16: #{_lambda_.46} parent=0 // pred_region
    %vm18 = vcmask 261120
    %19 = vst.msk [vmem:[#allocation2] sm:$0xff] %vm18, 0.0
    %20 = vst.msk [vmem:[#allocation2 + $0x8] sm:$0xff] %vm18, 0.0
  $region17: #{_lambda_.46} parent=0 // pred_fallthru
    _
  %v21 = vld [vmem:[#allocation2] sm:$0xff]
  %v22 = vld [vmem:[#allocation2 + $0x8] sm:$0xff]
  %v23 = vld [vmem:[%s0] sm:$0xff]
  %v24 = vld [vmem:[%s0 + $0x8] sm:$0xff]
  %v25 = vld [vmem:[%s1] sm:$0xff]
  %v26 = vld [vmem:[%s1 + $0x8] sm:$0xff]
  %v27 = vld [vmem:[%s1 + $0x10] sm:$0xff]
  %v28 = vld [vmem:[%s1 + $0x18] sm:$0xff]
  %v29 = vld [vmem:[%s1 + $0x20] sm:$0xff]
  %v30 = vld [vmem:[%s1 + $0x28] sm:$0xff]
  %v31 = vld [vmem:[%s1 + $0x30] sm:$0xff]
  %v32 = vld [vmem:[%s1 + $0x38] sm:$0xff]
  %vm33 = vcmask 523264
  %v35 = vsel %vm33, %v23, 0
  %v38 = vsel %vm33, %v24, 0
  %40 = vmatpush.msra.mxu0 0.0
  %41 = vmatpush.msra.mxu0 0.0
  %42 = vmatpush.msra.mxu0 0.0
  %43 = vmatpush.msra.mxu0 0.0
  %44 = vmatpush.msra.mxu0 0.0
  %45 = vmatpush.msra.mxu0 0.0
  %46 = vmatpush.msra.mxu0 0.0
  %47 = vmatpush.msra.mxu0 0.0
  %48 = vmatpush.msra.mxu0 %v32
  %49 = vmatpush.msra.mxu0 %v31
  %50 = vmatpush.msra.mxu0 %v30
  %51 = vmatpush.msra.mxu0 %v29
  %52 = vmatpush.msra.mxu0 %v28
  %53 = vmatpush.msra.mxu0 %v27
  %54 = vmatpush.msra.mxu0 %v26
  %55 = vmatpush.msra.mxu0 %v25
  %56 = vmatmul.f32.gmra.mxu0 %v35
  %v57 = vpop.f32.mrf.mxu0
  %v58 = vadd.f32 0.0, %v57
  %59 = vmatmul.f32.gmra.mxu0 %v38
  %v60 = vpop.f32.mrf.mxu0
  %v61 = vadd.f32 0.0, %v60
  %62 = vdwg.mxu0
  %v63 = vadd.f32 %v21, %v58
  %v64 = vadd.f32 %v22, %v61
  %vm65 = vcmask 261120
  %66 = vst.msk [vmem:[#allocation2] sm:$0xff] %vm65, %v63
  %67 = vst.msk [vmem:[#allocation2 + $0x8] sm:$0xff] %vm65, %v64
  // Predicated region
  $region18: #{_lambda_.46} parent=0 // pred_check
    %p68 = pneg %p14
  $region19: #{_lambda_.46} parent=0 // pred_check_branch
    %70 = sbr.rel (%p68) target = $region21
  $region20: #{_lambda_.46} parent=0 // pred_region
    %v71 = vld [vmem:[#allocation2] sm:$0xff]
    %v72 = vld [vmem:[#allocation2 + $0x8] sm:$0xff]
    %v73 = vld [vmem:[%s2] sm:$0x1]
    %v75 = vperm.slane %v73, 0
    %v77 = vadd.f32 %v71, %v75
    %v78 = vadd.f32 %v72, %v75
    %79 = vst.msk [vmem:[%s3] sm:$0xff] %vm65, %v77
    %80 = vst.msk [vmem:[%s3 + $0x8] sm:$0xff] %vm65, %v78
  $region21: #{_lambda_.46} parent=0 // pred_fallthru
    _
  // Predicated region
  $region22: #{_lambda_.46} parent=0 // pred_check
    _
  $region23: #{_lambda_.46} parent=0 // pred_check_branch
    %82 = sbr.rel (0) target = $region25
  $region24: #{_lambda_.46} parent=0 // pred_region
    _
  $region25: #{_lambda_.46} parent=0 // pred_fallthru
    _
  // Predicated region
  $region26: #{_lambda_.46} parent=0 // pred_check
    _
  $region27: #{_lambda_.46} parent=0 // pred_check_branch
    %84 = sbr.rel (0) target = $region29
  $region28: #{_lambda_.46} parent=0 // pred_region
    _
  $region29: #{_lambda_.46} parent=0 // pred_fallthru
    _

// kernel: _lambda_.79
$region0: #{_lambda_.79}
  #allocation0 [shape = 'u32[]', space=smem, size = 0x4, offset = 0x4, fixed_abs, tag = 'smem constant byte address 0x4 - core index']
  #allocation1 [shape = 'u32[72,128]{1,0:T(1,128)}', space=vmem, size = 0x9000, scoped, tag = 'internal scratch']
  %s0 = inlined_call_operand.vmem [shape: f32[16,32], index: 0, kind: input, shape index: {}]
  %s1 = inlined_call_operand.vmem [shape: f32[16,32], index: 1, kind: input, shape index: {}]
  %s2 = inlined_call_operand.vmem [shape: f32[1,32], index: 2, kind: input, shape index: {}]
  %s3 = inlined_call_operand.vmem [shape: f32[1,32], index: 3, kind: input, shape index: {}]
  %s4 = inlined_call_operand.hbm [shape: f32[16,32], index: 4, kind: output, shape index: {}]
  %s5 = sld [smem:[#allocation0]]
  $region26: #{_lambda_.79} parent=0
    _
  %s7 = ssub.s32 1, %s5
  %s8 = scalar_select 0, %s7, %s5
  $region1: #{_lambda_.79} parent=0
    #allocation2 [shape = 'u8[8192]{0}', space=vmem, size = 0x2000, scoped, tag = 'output window, operand 0, single buffered']
    #allocation3 [shape = 's32[1]{0}', space=sflag, size = 0x4, scoped, tag = 'scoped memory for _lambda_.79']
    %9 = vsyncpa [#allocation3], 0
    // Predicated region
    $region2: #{_lambda_.79} parent=1 // pred_check
      _
    $region3: #{_lambda_.79} parent=1 // pred_check_branch
      %11 = sbr.rel (0) target = $region5
    $region4: #{_lambda_.79} parent=1 // pred_region
      _
    $region5: #{_lambda_.79} parent=1 // pred_fallthru
      _
    // Predicated region
    $region6: #{_lambda_.79} parent=1 // pred_check
      _
    $region7: #{_lambda_.79} parent=1 // pred_check_branch
      %13 = sbr.rel (0) target = $region9
    $region8: #{_lambda_.79} parent=1 // pred_region
      _
    $region9: #{_lambda_.79} parent=1 // pred_fallthru
      _
    // Predicated region
    $region10: #{_lambda_.79} parent=1 // pred_check
      _
    $region11: #{_lambda_.79} parent=1 // pred_check_branch
      %15 = sbr.rel (0) target = $region13
    $region12: #{_lambda_.79} parent=1 // pred_region
      _
    $region13: #{_lambda_.79} parent=1 // pred_fallthru
      _
    // Predicated region
    $region14: #{_lambda_.79} parent=1 // pred_check
      _
    $region15: #{_lambda_.79} parent=1 // pred_check_branch
      %17 = sbr.rel (0) target = $region17
    $region16: #{_lambda_.79} parent=1 // pred_region
      _
    $region17: #{_lambda_.79} parent=1 // pred_fallthru
      _
    %v18 = vld [vmem:[%s0] sm:$0xff]
    %v19 = vld [vmem:[%s0 + $0x8] sm:$0xff]
    %v20 = vld [vmem:[%s1] sm:$0xff]
    %v21 = vld [vmem:[%s1 + $0x8] sm:$0xff]
    %v22 = vadd.f32 %v18, %v20
    %v23 = vadd.f32 %v19, %v21
    %v24 = vld [vmem:[%s2] sm:$0x1]
    %v25 = vld [vmem:[%s3] sm:$0x1]
    %vm26 = vcmask 261120
    %v27 = vsel %vm26, %v22, 0.0
    %28 = vadd.xlane.f32.xlu0 %v27
    %v29 = vpop.xlane.xlu0 %28
    %v30 = vsel %vm26, %v23, 0.0
    %31 = vadd.xlane.f32.xlu0 %v30
    %v32 = vpop.xlane.xlu0 %31
    %v33 = vrcp.pop 32.0
    %v34 = vmul.f32 32.0, %v33
    %v35 = vsub.f32 1.0, %v34
    %v36 = vmul.f32 %v33, %v35
    %v37 = vadd.f32 %v33, %v36
    %vm38 = vweird.f32 %v33
    %v39 = vsel %vm38, %v33, %v37
    %v40 = vmul.f32 %v29, %v39
    %v41 = vmul.f32 %v32, %v39
    %v42 = vsub.f32 %v22, %v40
    %v43 = vsub.f32 %v23, %v41
    %v44 = vmul.f32 %v42, %v42
    %v45 = vmul.f32 %v43, %v43
    %v46 = vsel %vm26, %v44, 0.0
    %47 = vadd.xlane.f32.xlu0 %v46
    %v48 = vpop.xlane.xlu0 %47
    %v49 = vsel %vm26, %v45, 0.0
    %50 = vadd.xlane.f32.xlu0 %v49
    %v51 = vpop.xlane.xlu0 %50
    %v52 = vmul.f32 %v48, %v39
    %v53 = vmul.f32 %v51, %v39
    %v54 = vadd.f32 %v52, 1e-05
    %v55 = vadd.f32 %v53, 1e-05
    %v56 = vrsqrt.pop %v54
    %v57 = vmul.f32 %v56, %v54
    %v58 = vmul.f32 %v57, %v56
    %v59 = vmul.f32 0.5, %v58
    %v60 = vsub.f32 1.5, %v59
    %v61 = vmul.f32 %v56, %v60
    %vm62 = vweird.f32 %v54
    %vm63 = vweird.f32 %v56
    %vm64 = vmor %vm62, %vm63
    %v65 = vsel %vm64, %v56, %v61
    %v66 = vrsqrt.pop %v55
    %v67 = vmul.f32 %v66, %v55
    %v68 = vmul.f32 %v67, %v66
    %v69 = vmul.f32 0.5, %v68
    %v70 = vsub.f32 1.5, %v69
    %v71 = vmul.f32 %v66, %v70
    %vm72 = vweird.f32 %v55
    %vm73 = vweird.f32 %v66
    %vm74 = vmor %vm72, %vm73
    %v75 = vsel %vm74, %v66, %v71
    %v76 = vmul.f32 %v42, %v65
    %v77 = vmul.f32 %v43, %v75
    %v79 = vperm.slane %v24, 0
    %v81 = vmul.f32 %v76, %v79
    %v82 = vmul.f32 %v77, %v79
    %v84 = vperm.slane %v25, 0
    %v86 = vadd.f32 %v81, %v84
    %v87 = vadd.f32 %v82, %v84
    %88 = vst.msk [vmem:[#allocation2] sm:$0xff] %vm26, %v86
    %89 = vst.msk [vmem:[#allocation2 + $0x8] sm:$0xff] %vm26, %v87
    // Predicated region
    $region18: #{_lambda_.79} parent=1 // pred_check
      _
    $region19: #{_lambda_.79} parent=1 // pred_check_branch
      %91 = sbr.rel (0) target = $region21
    $region20: #{_lambda_.79} parent=1 // pred_region
      %93 = vsyncadd [#allocation3], 0
      %s94 = sshll.u32 [#allocation2], 4
      %s95 = int_to_ptr.vmem [resolvable:$true] %s94
      %s96 = sshll.u32 %s4, 4
      %s97 = int_to_ptr.hbm [resolvable:$true] %s96
      %102 = dma.vmem_to_hbm [thread:$0]  %s95, 256, %s97, [#allocation3], 128, 128, 8
    $region21: #{_lambda_.79} parent=1 // pred_fallthru
      _
    // Predicated region
    $region22: #{_lambda_.79} parent=1 // pred_check
      _
    $region23: #{_lambda_.79} parent=1 // pred_check_branch
      %104 = sbr.rel (0) target = $region25
    $region24: #{_lambda_.79} parent=1 // pred_region
      %106 = dma.done [#allocation3], 256
    $region25: #{_lambda_.79} parent=1 // pred_fallthru
      _
    %107 = vsyncpa [#allocation3], 1

// kernel: _lambda_.61
$region0: #{_lambda_.61}
  #allocation0 [shape = 'u32[]', space=smem, size = 0x4, offset = 0x4, fixed_abs, tag = 'smem constant byte address 0x4 - core index']
  #allocation1 [shape = 'u32[72,128]{1,0:T(1,128)}', space=vmem, size = 0x9000, scoped, tag = 'internal scratch']
  #allocation2 [shape = 'f32[16,64]{1,0:T(8,128)}', space=vmem, size = 0x2000, scoped, tag = 'scratch operand']
  %s0 = inlined_call_operand.vmem [shape: f32[16,32], index: 0, kind: input, shape index: {}]
  %s1 = inlined_call_operand.vmem [shape: f32[32,64], index: 1, kind: input, shape index: {}]
  %s2 = inlined_call_operand.vmem [shape: f32[1,64], index: 2, kind: input, shape index: {}]
  %s3 = inlined_call_operand.vmem [shape: f32[16,64], index: 3, kind: output, shape index: {}]
  %s4 = sld [smem:[#allocation0]]
  $region30: #{_lambda_.61} parent=0
    _
  %s6 = ssub.s32 1, %s4
  %s7 = scalar_select 0, %s6, %s4
  // Predicated region
  $region2: #{_lambda_.61} parent=0 // pred_check
    _
  $region3: #{_lambda_.61} parent=0 // pred_check_branch
    %9 = sbr.rel (0) target = $region5
  $region4: #{_lambda_.61} parent=0 // pred_region
    _
  $region5: #{_lambda_.61} parent=0 // pred_fallthru
    _
  // Predicated region
  $region6: #{_lambda_.61} parent=0 // pred_check
    _
  $region7: #{_lambda_.61} parent=0 // pred_check_branch
    %11 = sbr.rel (0) target = $region9
  $region8: #{_lambda_.61} parent=0 // pred_region
    _
  $region9: #{_lambda_.61} parent=0 // pred_fallthru
    _
  // Predicated region
  $region10: #{_lambda_.61} parent=0 // pred_check
    _
  $region11: #{_lambda_.61} parent=0 // pred_check_branch
    %13 = sbr.rel (0) target = $region13
  $region12: #{_lambda_.61} parent=0 // pred_region
    _
  $region13: #{_lambda_.61} parent=0 // pred_fallthru
    _
  %p14 = scmp.eq.s32.totalorder 0, 0
  // Predicated region
  $region14: #{_lambda_.61} parent=0 // pred_check
    %p15 = pneg %p14
  $region15: #{_lambda_.61} parent=0 // pred_check_branch
    %17 = sbr.rel (%p15) target = $region17
  $region16: #{_lambda_.61} parent=0 // pred_region
    %vm18 = vcmask 523264
    %19 = vst.msk [vmem:[#allocation2] sm:$0xff] %vm18, 0.0
    %20 = vst.msk [vmem:[#allocation2 + $0x8] sm:$0xff] %vm18, 0.0
  $region17: #{_lambda_.61} parent=0 // pred_fallthru
    _
  %v21 = vld [vmem:[#allocation2] sm:$0xff]
  %v22 = vld [vmem:[#allocation2 + $0x8] sm:$0xff]
  %v23 = vld [vmem:[%s0] sm:$0xff]
  %v24 = vld [vmem:[%s0 + $0x8] sm:$0xff]
  %v25 = vld [vmem:[%s1] sm:$0xff]
  %v26 = vld [vmem:[%s1 + $0x8] sm:$0xff]
  %v27 = vld [vmem:[%s1 + $0x10] sm:$0xff]
  %v28 = vld [vmem:[%s1 + $0x18] sm:$0xff]
  %vm29 = vcmask 261120
  %v31 = vsel %vm29, %v23, 0
  %v34 = vsel %vm29, %v24, 0
  %36 = vmatpush.msra.mxu0 0.0
  %37 = vmatpush.msra.mxu0 0.0
  %38 = vmatpush.msra.mxu0 0.0
  %39 = vmatpush.msra.mxu0 0.0
  %40 = vmatpush.msra.mxu0 0.0
  %41 = vmatpush.msra.mxu0 0.0
  %42 = vmatpush.msra.mxu0 0.0
  %43 = vmatpush.msra.mxu0 0.0
  %44 = vmatpush.msra.mxu0 0.0
  %45 = vmatpush.msra.mxu0 0.0
  %46 = vmatpush.msra.mxu0 0.0
  %47 = vmatpush.msra.mxu0 0.0
  %48 = vmatpush.msra.mxu0 %v28
  %49 = vmatpush.msra.mxu0 %v27
  %50 = vmatpush.msra.mxu0 %v26
  %51 = vmatpush.msra.mxu0 %v25
  %52 = vmatmul.f32.gmra.mxu0 %v31
  %v53 = vpop.f32.mrf.mxu0
  %v54 = vadd.f32 0.0, %v53
  %55 = vmatmul.f32.gmra.mxu0 %v34
  %v56 = vpop.f32.mrf.mxu0
  %v57 = vadd.f32 0.0, %v56
  %58 = vdwg.mxu0
  %v59 = vadd.f32 %v21, %v54
  %v60 = vadd.f32 %v22, %v57
  %vm61 = vcmask 523264
  %62 = vst.msk [vmem:[#allocation2] sm:$0xff] %vm61, %v59
  %63 = vst.msk [vmem:[#allocation2 + $0x8] sm:$0xff] %vm61, %v60
  // Predicated region
  $region18: #{_lambda_.61} parent=0 // pred_check
    %p64 = pneg %p14
  $region19: #{_lambda_.61} parent=0 // pred_check_branch
    %66 = sbr.rel (%p64) target = $region21
  $region20: #{_lambda_.61} parent=0 // pred_region
    %v67 = vld [vmem:[#allocation2] sm:$0xff]
    %v68 = vld [vmem:[#allocation2 + $0x8] sm:$0xff]
    %v69 = vld [vmem:[%s2] sm:$0x1]
    %v71 = vperm.slane %v69, 0
    %v73 = vadd.f32 %v67, %v71
    %v74 = vadd.f32 %v68, %v71
    %75 = vst.msk [vmem:[%s3] sm:$0xff] %vm61, %v73
    %76 = vst.msk [vmem:[%s3 + $0x8] sm:$0xff] %vm61, %v74
  $region21: #{_lambda_.61} parent=0 // pred_fallthru
    _
  // Predicated region
  $region22: #{_lambda_.61} parent=0 // pred_check
    _
  $region23: #{_lambda_.61} parent=0 // pred_check_branch
    %78 = sbr.rel (0) target = $region25
  $region24: #{_lambda_.61} parent=0 // pred_region
    _
  $region25: #{_lambda_.61} parent=0 // pred_fallthru
    _
  // Predicated region
  $region26: #{_lambda_.61} parent=0 // pred_check
    _
  $region27: #{_lambda_.61} parent=0 // pred_check_branch
    %80 = sbr.rel (0) target = $region29
  $region28: #{_lambda_.61} parent=0 // pred_region
    _
  $region29: #{_lambda_.61} parent=0 // pred_fallthru
    _

// kernel: _lambda_.62
$region0: #{_lambda_.62}
  #allocation0 [shape = 'u32[]', space=smem, size = 0x4, offset = 0x4, fixed_abs, tag = 'smem constant byte address 0x4 - core index']
  #allocation1 [shape = 'u32[72,128]{1,0:T(1,128)}', space=vmem, size = 0x9000, scoped, tag = 'internal scratch']
  %s0 = inlined_call_operand.vmem [shape: f32[2,1,8], index: 0, kind: input, shape index: {}]
  %s1 = inlined_call_operand.vmem [shape: f32[2,8,32], index: 1, kind: input, shape index: {}]
  %s2 = inlined_call_operand.vmem [shape: f32[2,8,64], index: 2, kind: input, shape index: {}]
  %s3 = inlined_call_operand.vmem [shape: f32[2,8,32], index: 3, kind: output, shape index: {}]
  %s4 = sld [smem:[#allocation0]]
  $region45: #{_lambda_.62} parent=0
    _
  %s6 = ssub.s32 1, %s4
  %s7 = scalar_select 0, %s6, %s4
  loop: start=0, step=1, limit=4
  $region2: #{_lambda_.62} parent=0 // loop_pre_header
    _
  $region3: #{_lambda_.62} parent=0 // loop_header
    %s9 = sphi 0, %s13
    %p10 = scmp.ge.s32.totalorder %s9, 4
    %s16 = sphi 0, %s35
    %s17 = sphi 0, %s31
    %s18 = sphi 0, %s27
    %s19 = sphi 0, %s16
    %s20 = sphi 0, %s17
    %s21 = sphi 0, %s18
    %s22 = sphi 0, %s19
    %s23 = sphi 0, %s20
    %s24 = sphi 0, %s21
    %s38 = sphi 0, %s40
    %s41 = sphi 0, %s38
    %s42 = sphi 0, %s41
    %s58 = sphi 0, %s42
    %s68 = sphi 0, %s70
    %s71 = sphi 0, %s68
    %s72 = sphi 0, %s71
    %s88 = sphi 0, %s72
    %s96 = sphi 0, %s98
    %s99 = sphi 0, %s96
    %s100 = sphi 0, %s99
    %s116 = sphi 0, %s100
    %s126 = sphi 0, %s128
    %s129 = sphi 0, %s126
    %s130 = sphi 0, %s129
    %s146 = sphi 0, %s130
  $region4: #{_lambda_.62} parent=0 // loop_header_branch
    %12 = sbr.rel (%p10) target = $region8
  $region5: #{_lambda_.62} parent=0 // loop_body
    %s14 = ssub.s32 %s9, 1
    %s15 = ssub.s32 %s9, 2
    %s25 = sadd.s32 1, %s18
    %p26 = scmp.ge.s32.totalorder %s25, 1
    %s27 = scalar_select %p26, 0, %s25
    %s28 = sadd.s32 1, %s17
    %s29 = scalar_select %p26, %s28, %s17
    %p30 = scmp.ge.s32.totalorder %s29, 1
    %s31 = scalar_select %p30, 0, %s29
    %s32 = sadd.s32 1, %s16
    %s33 = scalar_select %p30, %s32, %s16
    %p34 = scmp.ge.s32.totalorder %s33, 2
    %s35 = scalar_select %p34, 0, %s33
    %s36 = ssub.s32 %s16, %s35
    %p37 = scmp.eq.s32.totalorder %s36, 0
    %s39 = sadd.s32 %s38, 1
    %s40 = scalar_select %p37, %s38, %s39
    %p43 = pneg %p37
    %p44 = scmp.eq.s32.totalorder %s9, 1
    %p45 = por %p43, %p44
    %p46 = scmp.ne.s32.totalorder %s38, %s41
    %p47 = scmp.eq.s32.totalorder %s9, 0
    %p48 = por %p46, %p47
    %p49 = scmp.ne.s32.totalorder %s38, %s41
    %p50 = scmp.eq.s32.totalorder %s14, 1
    %p51 = por %p49, %p50
    %p52 = scmp.ne.s32.totalorder %s41, %s42
    %p53 = scmp.eq.s32.totalorder %s14, 0
    %p54 = por %p52, %p53
    %p55 = scmp.ne.s32.totalorder %s41, %s42
    %p56 = scmp.eq.s32.totalorder %s15, 1
    %p57 = por %p55, %p56
    %p59 = scmp.ne.s32.totalorder %s42, %s58
    %p60 = scmp.eq.s32.totalorder %s15, 0
    %p61 = por %p59, %p60
    %s62 = ssub.s32 %s16, %s35
    %s63 = ssub.s32 %s18, %s27
    %s64 = sor.u32 %s62, %s63
    %s65 = ssub.s32 %s17, %s31
    %s66 = sor.u32 %s64, %s65
    %p67 = scmp.eq.s32.totalorder %s66, 0
    %s69 = sadd.s32 %s68, 1
    %s70 = scalar_select %p67, %s68, %s69
    %p73 = pneg %p67
    %p74 = scmp.eq.s32.totalorder %s9, 1
    %p75 = por %p73, %p74
    %p76 = scmp.ne.s32.totalorder %s68, %s71
    %p77 = scmp.eq.s32.totalorder %s9, 0
    %p78 = por %p76, %p77
    %p79 = scmp.ne.s32.totalorder %s68, %s71
    %p80 = scmp.eq.s32.totalorder %s14, 1
    %p81 = por %p79, %p80
    %p82 = scmp.ne.s32.totalorder %s71, %s72
    %p83 = scmp.eq.s32.totalorder %s14, 0
    %p84 = por %p82, %p83
    %p85 = scmp.ne.s32.totalorder %s71, %s72
    %p86 = scmp.eq.s32.totalorder %s15, 1
    %p87 = por %p85, %p86
    %p89 = scmp.ne.s32.totalorder %s72, %s88
    %p90 = scmp.eq.s32.totalorder %s15, 0
    %p91 = por %p89, %p90
    %s92 = ssub.s32 %s16, %s35
    %s93 = ssub.s32 %s17, %s31
    %s94 = sor.u32 %s92, %s93
    %p95 = scmp.eq.s32.totalorder %s94, 0
    %s97 = sadd.s32 %s96, 1
    %s98 = scalar_select %p95, %s96, %s97
    %p101 = pneg %p95
    %p102 = scmp.eq.s32.totalorder %s9, 1
    %p103 = por %p101, %p102
    %p104 = scmp.ne.s32.totalorder %s96, %s99
    %p105 = scmp.eq.s32.totalorder %s9, 0
    %p106 = por %p104, %p105
    %p107 = scmp.ne.s32.totalorder %s96, %s99
    %p108 = scmp.eq.s32.totalorder %s14, 1
    %p109 = por %p107, %p108
    %p110 = scmp.ne.s32.totalorder %s99, %s100
    %p111 = scmp.eq.s32.totalorder %s14, 0
    %p112 = por %p110, %p111
    %p113 = scmp.ne.s32.totalorder %s99, %s100
    %p114 = scmp.eq.s32.totalorder %s15, 1
    %p115 = por %p113, %p114
    %p117 = scmp.ne.s32.totalorder %s100, %s116
    %p118 = scmp.eq.s32.totalorder %s15, 0
    %p119 = por %p117, %p118
    %s120 = ssub.s32 %s16, %s35
    %s121 = ssub.s32 %s18, %s27
    %s122 = sor.u32 %s120, %s121
    %s123 = ssub.s32 %s17, %s31
    %s124 = sor.u32 %s122, %s123
    %p125 = scmp.eq.s32.totalorder %s124, 0
    %s127 = sadd.s32 %s126, 1
    %s128 = scalar_select %p125, %s126, %s127
    %p131 = pneg %p125
    %p132 = scmp.eq.s32.totalorder %s9, 1
    %p133 = por %p131, %p132
    %p134 = scmp.ne.s32.totalorder %s126, %s129
    %p135 = scmp.eq.s32.totalorder %s9, 0
    %p136 = por %p134, %p135
    %p137 = scmp.ne.s32.totalorder %s126, %s129
    %p138 = scmp.eq.s32.totalorder %s14, 1
    %p139 = por %p137, %p138
    %p140 = scmp.ne.s32.totalorder %s129, %s130
    %p141 = scmp.eq.s32.totalorder %s14, 0
    %p142 = por %p140, %p141
    %p143 = scmp.ne.s32.totalorder %s129, %s130
    %p144 = scmp.eq.s32.totalorder %s15, 1
    %p145 = por %p143, %p144
    %p147 = scmp.ne.s32.totalorder %s130, %s146
    %p148 = scmp.eq.s32.totalorder %s15, 0
    %p149 = por %p147, %p148
    %p150 = scmp.le.s32.totalorder 1, %s9
    %p151 = scmp.lt.s32.totalorder %s9, 3
    %p152 = pnand %p150, %p151
    %p153 = pneg %p152
    // Predicated region
    $region9: #{_lambda_.62} parent=5 // pred_check
      _
    $region10: #{_lambda_.62} parent=5 // pred_check_branch
      %155 = sbr.rel (%p152) target = $region12
    $region11: #{_lambda_.62} parent=5 // pred_region
      %s156 = ssub.s32 %s9, 1
    $region12: #{_lambda_.62} parent=5 // pred_fallthru
      _
    %p157 = scmp.lt.s32.totalorder %s9, 2
    // Predicated region
    $region13: #{_lambda_.62} parent=5 // pred_check
      %p158 = pneg %p157
    $region14: #{_lambda_.62} parent=5 // pred_check_branch
      %160 = sbr.rel (%p158) target = $region16
    $region15: #{_lambda_.62} parent=5 // pred_region
      // Predicated region
      $region17: #{_lambda_.62} parent=15 // pred_check
        %p161 = pneg %p48
      $region18: #{_lambda_.62} parent=15 // pred_check_branch
        %163 = sbr.rel (%p161) target = $region20
      $region19: #{_lambda_.62} parent=15 // pred_region
        %p164 = scmp.lt.s32.totalorder %s16, 1
        %s165 = scalar_select %p164, %s16, 1
        %s166 = scalar_lea.vmem %s0, %s165
      $region20: #{_lambda_.62} parent=15 // pred_fallthru
        _
      // Predicated region
      $region21: #{_lambda_.62} parent=15 // pred_check
        %p167 = pneg %p78
      $region22: #{_lambda_.62} parent=15 // pred_check_branch
        %169 = sbr.rel (%p167) target = $region24
      $region23: #{_lambda_.62} parent=15 // pred_region
        %p170 = scmp.lt.s32.totalorder %s16, 1
        %s171 = scalar_select %p170, %s16, 1
        %p172 = scmp.lt.s32.totalorder %s18, 0
        %s173 = scalar_select %p172, %s18, 0
        %p174 = scmp.lt.s32.totalorder %s17, 0
        %s175 = scalar_select %p174, %s17, 0
        %s176 = sadd.s32 %s175, %s173
        %s177 = sadd.s32 %s176, %s171
        %s178 = smul.addr %s177, 8
        %s179 = scalar_lea.vmem %s1, %s178
      $region24: #{_lambda_.62} parent=15 // pred_fallthru
        _
      // Predicated region
      $region25: #{_lambda_.62} parent=15 // pred_check
        %p180 = pneg %p106
      $region26: #{_lambda_.62} parent=15 // pred_check_branch
        %182 = sbr.rel (%p180) target = $region28
      $region27: #{_lambda_.62} parent=15 // pred_region
        %p183 = scmp.lt.s32.totalorder %s16, 1
        %s184 = scalar_select %p183, %s16, 1
        %p185 = scmp.lt.s32.totalorder %s17, 0
        %s186 = scalar_select %p185, %s17, 0
        %s187 = sadd.s32 %s186, %s184
        %s188 = smul.addr %s187, 8
        %s189 = scalar_lea.vmem %s2, %s188
      $region28: #{_lambda_.62} parent=15 // pred_fallthru
        _
    $region16: #{_lambda_.62} parent=5 // pred_fallthru
      _
    %p190 = scmp.le.s32.totalorder 1, %s9
    %p191 = scmp.lt.s32.totalorder %s9, 3
    %p192 = pnand %p190, %p191
    %p193 = pneg %p192
    // Predicated region
    $region29: #{_lambda_.62} parent=5 // pred_check
      _
    $region30: #{_lambda_.62} parent=5 // pred_check_branch
      %195 = sbr.rel (%p192) target = $region32
    $region31: #{_lambda_.62} parent=5 // pred_region
      %s196 = ssub.s32 %s9, 1
      %p197 = scmp.lt.s32.totalorder %s19, 1
      %s198 = scalar_select %p197, %s19, 1
      %s199 = scalar_lea.vmem %s0, %s198
      %p200 = pneg %p54
      %p201 = pneg %p51
      %p202 = scmp.lt.s32.totalorder %s19, 1
      %s203 = scalar_select %p202, %s19, 1
      %p204 = scmp.lt.s32.totalorder %s21, 0
      %s205 = scalar_select %p204, %s21, 0
      %p206 = scmp.lt.s32.totalorder %s20, 0
      %s207 = scalar_select %p206, %s20, 0
      %s208 = sadd.s32 %s207, %s205
      %s209 = sadd.s32 %s208, %s203
      %s210 = smul.addr %s209, 8
      %s211 = scalar_lea.vmem %s1, %s210
      %p212 = pneg %p84
      %p213 = pneg %p81
      %p214 = scmp.lt.s32.totalorder %s19, 1
      %s215 = scalar_select %p214, %s19, 1
      %p216 = scmp.lt.s32.totalorder %s20, 0
      %s217 = scalar_select %p216, %s20, 0
      %s218 = sadd.s32 %s217, %s215
      %s219 = smul.addr %s218, 8
      %s220 = scalar_lea.vmem %s2, %s219
      %p221 = pneg %p112
      %p222 = pneg %p109
      %p223 = pneg %p142
      %p224 = pneg %p139
      %p225 = scmp.lt.s32.totalorder %s19, 1
      %s226 = scalar_select %p225, %s19, 1
      %p227 = scmp.lt.s32.totalorder %s21, 0
      %s228 = scalar_select %p227, %s21, 0
      %p229 = scmp.lt.s32.totalorder %s20, 0
      %s230 = scalar_select %p229, %s20, 0
      %s231 = sadd.s32 %s230, %s228
      %s232 = sadd.s32 %s231, %s226
      %s233 = smul.addr %s232, 8
      %s234 = scalar_lea.vmem %s3, %s233
      %p235 = scmp.lt.s32.totalorder %s19, 1
      %s236 = scalar_select %p235, %s19, 1
      %s237 = scalar_lea.vmem %s0, %s236
      %p238 = scmp.lt.s32.totalorder %s19, 1
      %s239 = scalar_select %p238, %s19, 1
      %p240 = scmp.lt.s32.totalorder %s21, 0
      %s241 = scalar_select %p240, %s21, 0
      %p242 = scmp.lt.s32.totalorder %s20, 0
      %s243 = scalar_select %p242, %s20, 0
      %s244 = sadd.s32 %s243, %s241
      %s245 = sadd.s32 %s244, %s239
      %s246 = smul.addr %s245, 8
      %s247 = scalar_lea.vmem %s1, %s246
      %p248 = scmp.lt.s32.totalorder %s19, 1
      %s249 = scalar_select %p248, %s19, 1
      %p250 = scmp.lt.s32.totalorder %s20, 0
      %s251 = scalar_select %p250, %s20, 0
      %s252 = sadd.s32 %s251, %s249
      %s253 = smul.addr %s252, 8
      %s254 = scalar_lea.vmem %s2, %s253
      %p255 = scmp.lt.s32.totalorder %s19, 1
      %s256 = scalar_select %p255, %s19, 1
      %p257 = scmp.lt.s32.totalorder %s21, 0
      %s258 = scalar_select %p257, %s21, 0
      %p259 = scmp.lt.s32.totalorder %s20, 0
      %s260 = scalar_select %p259, %s20, 0
      %s261 = sadd.s32 %s260, %s258
      %s262 = sadd.s32 %s261, %s256
      %s263 = smul.addr %s262, 8
      %s264 = scalar_lea.vmem %s3, %s263
      %v265 = vld [vmem:[%s237] sm:$0x1]
      %v266 = vld [vmem:[%s247] sm:$0xff]
      %v267 = vld [vmem:[%s254] sm:$0xff]
      %v269 = vperm.slane %v265, 0
      %vm271 = vcmask 64512
      %v273 = vsel %vm271, %v266, 0
      %v276 = vsel %vm271, %v267, 0
      %278 = vmatpush.xpose.msra.mxu0 0.0
      %279 = vmatpush.xpose.msra.mxu0 0.0
      %280 = vmatpush.xpose.msra.mxu0 0.0
      %281 = vmatpush.xpose.msra.mxu0 0.0
      %282 = vmatpush.xpose.msra.mxu0 0.0
      %283 = vmatpush.xpose.msra.mxu0 0.0
      %284 = vmatpush.xpose.msra.mxu0 0.0
      %285 = vmatpush.xpose.msra.mxu0 0.0
      %286 = vmatpush.xpose.msra.mxu0 0.0
      %287 = vmatpush.xpose.msra.mxu0 0.0
      %288 = vmatpush.xpose.msra.mxu0 0.0
      %289 = vmatpush.xpose.msra.mxu0 0.0
      %290 = vmatpush.xpose.msra.mxu0 0.0
      %291 = vmatpush.xpose.msra.mxu0 0.0
      %292 = vmatpush.xpose.msra.mxu0 0.0
      %293 = vmatpush.xpose.msra.mxu0 %v276
      %294 = vmatmul.f32.gmra.mxu0 %v273
      %v295 = vpop.f32.mrf.mxu0
      %v296 = vadd.f32 %v269, %v295
      %297 = vdwg.mxu0
      %v298 = vsel %vm271, %v296, -inf
      %299 = vmax.xlane.f32.xlu0 %v298
      %v300 = vpop.xlane.xlu0 %299
      %v301 = vsub.f32 %v296, %v300
      %v302 = vmul.f32 %v301, 1.442695
      %v303 = vpow.pop %v302
      %v304 = vsel %vm271, %v303, 0.0
      %305 = vadd.xlane.f32.xlu0 %v304
      %v306 = vpop.xlane.xlu0 %305
      %v307 = vrcp.pop %v306
      %v308 = vmul.f32 %v303, %v307
      %309 = vrot.lane.b32.xlu0 %v267, 120
      %v310 = vpop.permute.xlu0 %309
      %v313 = vsel %vm271, %v308, 0
      %315 = vmatpush.msra.mxu0 0.0
      %316 = vmatpush.msra.mxu0 0.0
      %317 = vmatpush.msra.mxu0 0.0
      %318 = vmatpush.msra.mxu0 0.0
      %319 = vmatpush.msra.mxu0 0.0
      %320 = vmatpush.msra.mxu0 0.0
      %321 = vmatpush.msra.mxu0 0.0
      %322 = vmatpush.msra.mxu0 0.0
      %323 = vmatpush.msra.mxu0 0.0
      %324 = vmatpush.msra.mxu0 0.0
      %325 = vmatpush.msra.mxu0 0.0
      %326 = vmatpush.msra.mxu0 0.0
      %327 = vmatpush.msra.mxu0 0.0
      %328 = vmatpush.msra.mxu0 0.0
      %329 = vmatpush.msra.mxu0 0.0
      %330 = vmatpush.msra.mxu0 %v310
      %331 = vmatmul.f32.gmra.mxu0 %v313
      %v332 = vpop.f32.mrf.mxu0
      %v333 = vadd.f32 0.0, %v332
      %334 = vdwg.mxu0
      %335 = vrot.lane.b32.xlu0 %v266, 120
      %v336 = vpop.permute.xlu0 %335
      %337 = vrot.lane.b32.xlu0 %v267, 112
      %v338 = vpop.permute.xlu0 %337
      %v339 = vsel %vm271, %v336, 0
      %v341 = vsel %vm271, %v338, 0
      %343 = vmatpush.xpose.msra.mxu0 0.0
      %344 = vmatpush.xpose.msra.mxu0 0.0
      %345 = vmatpush.xpose.msra.mxu0 0.0
      %346 = vmatpush.xpose.msra.mxu0 0.0
      %347 = vmatpush.xpose.msra.mxu0 0.0
      %348 = vmatpush.xpose.msra.mxu0 0.0
      %349 = vmatpush.xpose.msra.mxu0 0.0
      %350 = vmatpush.xpose.msra.mxu0 0.0
      %351 = vmatpush.xpose.msra.mxu0 0.0
      %352 = vmatpush.xpose.msra.mxu0 0.0
      %353 = vmatpush.xpose.msra.mxu0 0.0
      %354 = vmatpush.xpose.msra.mxu0 0.0
      %355 = vmatpush.xpose.msra.mxu0 0.0
      %356 = vmatpush.xpose.msra.mxu0 0.0
      %357 = vmatpush.xpose.msra.mxu0 0.0
      %358 = vmatpush.xpose.msra.mxu0 %v341
      %359 = vmatmul.f32.gmra.mxu0 %v339
      %v360 = vpop.f32.mrf.mxu0
      %v361 = vadd.f32 %v269, %v360
      %362 = vdwg.mxu0
      %v363 = vsel %vm271, %v361, -inf
      %364 = vmax.xlane.f32.xlu0 %v363
      %v365 = vpop.xlane.xlu0 %364
      %v366 = vsub.f32 %v361, %v365
      %v367 = vmul.f32 %v366, 1.442695
      %v368 = vpow.pop %v367
      %v369 = vsel %vm271, %v368, 0.0
      %370 = vadd.xlane.f32.xlu0 %v369
      %v371 = vpop.xlane.xlu0 %370
      %v372 = vrcp.pop %v371
      %v373 = vmul.f32 %v368, %v372
      %374 = vrot.lane.b32.xlu0 %v267, 104
      %v375 = vpop.permute.xlu0 %374
      %v378 = vsel %vm271, %v373, 0
      %380 = vmatpush.msra.mxu0 0.0
      %381 = vmatpush.msra.mxu0 0.0
      %382 = vmatpush.msra.mxu0 0.0
      %383 = vmatpush.msra.mxu0 0.0
      %384 = vmatpush.msra.mxu0 0.0
      %385 = vmatpush.msra.mxu0 0.0
      %386 = vmatpush.msra.mxu0 0.0
      %387 = vmatpush.msra.mxu0 0.0
      %388 = vmatpush.msra.mxu0 0.0
      %389 = vmatpush.msra.mxu0 0.0
      %390 = vmatpush.msra.mxu0 0.0
      %391 = vmatpush.msra.mxu0 0.0
      %392 = vmatpush.msra.mxu0 0.0
      %393 = vmatpush.msra.mxu0 0.0
      %394 = vmatpush.msra.mxu0 0.0
      %395 = vmatpush.msra.mxu0 %v375
      %396 = vmatmul.f32.gmra.mxu0 %v378
      %v397 = vpop.f32.mrf.mxu0
      %v398 = vadd.f32 0.0, %v397
      %399 = vdwg.mxu0
      %400 = vrot.lane.b32.xlu0 %v266, 112
      %v401 = vpop.permute.xlu0 %400
      %402 = vrot.lane.b32.xlu0 %v267, 96
      %v403 = vpop.permute.xlu0 %402
      %v404 = vsel %vm271, %v401, 0
      %v406 = vsel %vm271, %v403, 0
      %408 = vmatpush.xpose.msra.mxu0 0.0
      %409 = vmatpush.xpose.msra.mxu0 0.0
      %410 = vmatpush.xpose.msra.mxu0 0.0
      %411 = vmatpush.xpose.msra.mxu0 0.0
      %412 = vmatpush.xpose.msra.mxu0 0.0
      %413 = vmatpush.xpose.msra.mxu0 0.0
      %414 = vmatpush.xpose.msra.mxu0 0.0
      %415 = vmatpush.xpose.msra.mxu0 0.0
      %416 = vmatpush.xpose.msra.mxu0 0.0
      %417 = vmatpush.xpose.msra.mxu0 0.0
      %418 = vmatpush.xpose.msra.mxu0 0.0
      %419 = vmatpush.xpose.msra.mxu0 0.0
      %420 = vmatpush.xpose.msra.mxu0 0.0
      %421 = vmatpush.xpose.msra.mxu0 0.0
      %422 = vmatpush.xpose.msra.mxu0 0.0
      %423 = vmatpush.xpose.msra.mxu0 %v406
      %424 = vmatmul.f32.gmra.mxu0 %v404
      %v425 = vpop.f32.mrf.mxu0
      %v426 = vadd.f32 %v269, %v425
      %427 = vdwg.mxu0
      %v428 = vsel %vm271, %v426, -inf
      %429 = vmax.xlane.f32.xlu0 %v428
      %v430 = vpop.xlane.xlu0 %429
      %v431 = vsub.f32 %v426, %v430
      %v432 = vmul.f32 %v431, 1.442695
      %v433 = vpow.pop %v432
      %v434 = vsel %vm271, %v433, 0.0
      %435 = vadd.xlane.f32.xlu0 %v434
      %v436 = vpop.xlane.xlu0 %435
      %v437 = vrcp.pop %v436
      %v438 = vmul.f32 %v433, %v437
      %439 = vrot.lane.b32.xlu0 %v267, 88
      %v440 = vpop.permute.xlu0 %439
      %v443 = vsel %vm271, %v438, 0
      %445 = vmatpush.msra.mxu0 0.0
      %446 = vmatpush.msra.mxu0 0.0
      %447 = vmatpush.msra.mxu0 0.0
      %448 = vmatpush.msra.mxu0 0.0
      %449 = vmatpush.msra.mxu0 0.0
      %450 = vmatpush.msra.mxu0 0.0
      %451 = vmatpush.msra.mxu0 0.0
      %452 = vmatpush.msra.mxu0 0.0
      %453 = vmatpush.msra.mxu0 0.0
      %454 = vmatpush.msra.mxu0 0.0
      %455 = vmatpush.msra.mxu0 0.0
      %456 = vmatpush.msra.mxu0 0.0
      %457 = vmatpush.msra.mxu0 0.0
      %458 = vmatpush.msra.mxu0 0.0
      %459 = vmatpush.msra.mxu0 0.0
      %460 = vmatpush.msra.mxu0 %v440
      %461 = vmatmul.f32.gmra.mxu0 %v443
      %v462 = vpop.f32.mrf.mxu0
      %v463 = vadd.f32 0.0, %v462
      %464 = vdwg.mxu0
      %465 = vrot.lane.b32.xlu0 %v266, 104
      %v466 = vpop.permute.xlu0 %465
      %467 = vrot.lane.b32.xlu0 %v267, 80
      %v468 = vpop.permute.xlu0 %467
      %v469 = vsel %vm271, %v466, 0
      %v471 = vsel %vm271, %v468, 0
      %473 = vmatpush.xpose.msra.mxu0 0.0
      %474 = vmatpush.xpose.msra.mxu0 0.0
      %475 = vmatpush.xpose.msra.mxu0 0.0
      %476 = vmatpush.xpose.msra.mxu0 0.0
      %477 = vmatpush.xpose.msra.mxu0 0.0
      %478 = vmatpush.xpose.msra.mxu0 0.0
      %479 = vmatpush.xpose.msra.mxu0 0.0
      %480 = vmatpush.xpose.msra.mxu0 0.0
      %481 = vmatpush.xpose.msra.mxu0 0.0
      %482 = vmatpush.xpose.msra.mxu0 0.0
      %483 = vmatpush.xpose.msra.mxu0 0.0
      %484 = vmatpush.xpose.msra.mxu0 0.0
      %485 = vmatpush.xpose.msra.mxu0 0.0
      %486 = vmatpush.xpose.msra.mxu0 0.0
      %487 = vmatpush.xpose.msra.mxu0 0.0
      %488 = vmatpush.xpose.msra.mxu0 %v471
      %489 = vmatmul.f32.gmra.mxu0 %v469
      %v490 = vpop.f32.mrf.mxu0
      %v491 = vadd.f32 %v269, %v490
      %492 = vdwg.mxu0
      %v493 = vsel %vm271, %v491, -inf
      %494 = vmax.xlane.f32.xlu0 %v493
      %v495 = vpop.xlane.xlu0 %494
      %v496 = vsub.f32 %v491, %v495
      %v497 = vmul.f32 %v496, 1.442695
      %v498 = vpow.pop %v497
      %v499 = vsel %vm271, %v498, 0.0
      %500 = vadd.xlane.f32.xlu0 %v499
      %v501 = vpop.xlane.xlu0 %500
      %v502 = vrcp.pop %v501
      %v503 = vmul.f32 %v498, %v502
      %504 = vrot.lane.b32.xlu0 %v267, 72
      %v505 = vpop.permute.xlu0 %504
      %v508 = vsel %vm271, %v503, 0
      %510 = vmatpush.msra.mxu0 0.0
      %511 = vmatpush.msra.mxu0 0.0
      %512 = vmatpush.msra.mxu0 0.0
      %513 = vmatpush.msra.mxu0 0.0
      %514 = vmatpush.msra.mxu0 0.0
      %515 = vmatpush.msra.mxu0 0.0
      %516 = vmatpush.msra.mxu0 0.0
      %517 = vmatpush.msra.mxu0 0.0
      %518 = vmatpush.msra.mxu0 0.0
      %519 = vmatpush.msra.mxu0 0.0
      %520 = vmatpush.msra.mxu0 0.0
      %521 = vmatpush.msra.mxu0 0.0
      %522 = vmatpush.msra.mxu0 0.0
      %523 = vmatpush.msra.mxu0 0.0
      %524 = vmatpush.msra.mxu0 0.0
      %525 = vmatpush.msra.mxu0 %v505
      %526 = vmatmul.f32.gmra.mxu0 %v508
      %v527 = vpop.f32.mrf.mxu0
      %v528 = vadd.f32 0.0, %v527
      %529 = vdwg.mxu0
      %531 = vrot.lane.b32.xlu0 %v398, 8
      %v532 = vpop.permute.xlu0 %531
      %535 = vrot.lane.b32.xlu0 %v463, 16
      %v536 = vpop.permute.xlu0 %535
      %539 = vrot.lane.b32.xlu0 %v528, 24
      %v540 = vpop.permute.xlu0 %539
      %v542 = vsel %vm271, %v333, %v532
      %vm543 = vcmask 130048
      %v544 = vsel %vm543, %v542, %v536
      %vm545 = vcmask 195584
      %v546 = vsel %vm545, %v544, %v540
      %vm547 = vcmask 261120
      %548 = vst.msk [vmem:[%s264] sm:$0xff] %vm547, %v546
      %p549 = scmp.lt.s32.totalorder %s19, 1
      %s550 = scalar_select %p549, %s19, 1
      %p551 = scmp.lt.s32.totalorder %s21, 0
      %s552 = scalar_select %p551, %s21, 0
      %p553 = scmp.lt.s32.totalorder %s20, 0
      %s554 = scalar_select %p553, %s20, 0
      %s555 = sadd.s32 %s554, %s552
      %s556 = sadd.s32 %s555, %s550
      %s557 = smul.addr %s556, 8
      %s558 = scalar_lea.vmem %s3, %s557
      // Predicated region
      $region33: #{_lambda_.62} parent=31 // pred_check
        %p559 = pneg %p139
      $region34: #{_lambda_.62} parent=31 // pred_check_branch
        %561 = sbr.rel (%p559) target = $region36
      $region35: #{_lambda_.62} parent=31 // pred_region
        _
      $region36: #{_lambda_.62} parent=31 // pred_fallthru
        _
    $region32: #{_lambda_.62} parent=5 // pred_fallthru
      _
    %p562 = scmp.le.s32.totalorder 2, %s9
    // Predicated region
    $region37: #{_lambda_.62} parent=5 // pred_check
      %p563 = pneg %p562
    $region38: #{_lambda_.62} parent=5 // pred_check_branch
      %565 = sbr.rel (%p563) target = $region40
    $region39: #{_lambda_.62} parent=5 // pred_region
      %s566 = ssub.s32 %s9, 2
      // Predicated region
      $region41: #{_lambda_.62} parent=39 // pred_check
        %p567 = pneg %p145
      $region42: #{_lambda_.62} parent=39 // pred_check_branch
        %569 = sbr.rel (%p567) target = $region44
      $region43: #{_lambda_.62} parent=39 // pred_region
        %p570 = scmp.lt.s32.totalorder %s22, 1
        %s571 = scalar_select %p570, %s22, 1
        %p572 = scmp.lt.s32.totalorder %s24, 0
        %s573 = scalar_select %p572, %s24, 0
        %p574 = scmp.lt.s32.totalorder %s23, 0
        %s575 = scalar_select %p574, %s23, 0
        %s576 = sadd.s32 %s575, %s573
        %s577 = sadd.s32 %s576, %s571
        %s578 = smul.addr %s577, 8
        %s579 = scalar_lea.vmem %s3, %s578
      $region44: #{_lambda_.62} parent=39 // pred_fallthru
        _
    $region40: #{_lambda_.62} parent=5 // pred_fallthru
      _
  $region6: #{_lambda_.62} parent=0 // loop_footer
    %s13 = sadd.s32 1, %s9
  $region7: #{_lambda_.62} parent=0 // loop_footer_branch
    %8 = sbr.rel target = $region3
  $region8: #{_lambda_.62} parent=0 // loop_exit
    _

</llo_original>
